<compile_context>
chip_gen: v6e
topology: v6e:2x2x1
jax: 0.10.0
libtpu: 0.0.40
codegen_flags: <defaults>
</compile_context>

<pallas_src>
import functools

import jax
import jax.numpy as jnp
from jax import lax
from jax.experimental import pallas as pl
from jax.experimental.pallas import tpu as pltpu

_VMEM_LIMIT = 48 * 1024 * 1024          # < 64 MiB physical on v7x, plenty of headroom elsewhere
_COMPUTE_DTYPE = jnp.bfloat16


# ----------------------------- Pallas kernels ------------------------------

def _matmul_act_kernel(a_ref, b_ref, o_ref, *, act):
    """Single-K-block GEMM (B resident), optional fused activation."""
    y = jnp.dot(a_ref[...], b_ref[...], preferred_element_type=jnp.float32)
    if act == "tanh":
        y = jnp.tanh(y)
    elif act == "relu":
        y = jnp.maximum(y, 0.0)
    o_ref[...] = y.astype(o_ref.dtype)


def _matmul_stats_kernel(a_ref, b_ref, o_ref, sum_ref, sq_ref):
    """GEMM with fused per-column sum / sum-of-squares (BatchNorm statistics)."""
    @pl.when(pl.program_id(0) == 0)
    def _():
        sum_ref[...] = jnp.zeros_like(sum_ref)
        sq_ref[...] = jnp.zeros_like(sq_ref)

    y = jnp.dot(a_ref[...], b_ref[...], preferred_element_type=jnp.float32)
    o_ref[...] = y
    sum_ref[...] += jnp.sum(y, axis=0, keepdims=True)
    sq_ref[...] += jnp.sum(y * y, axis=0, keepdims=True)


def _bn_act_kernel(x_ref, scale_ref, shift_ref, o_ref, *, act):
    y = x_ref[...] * scale_ref[...] + shift_ref[...]
    if act == "relu":
        y = jnp.maximum(y, 0.0)
    elif act == "tanh":
        y = jnp.tanh(y)
    o_ref[...] = y.astype(o_ref.dtype)


# ----------------------------- Pallas wrappers ------------------------------

def _pick_tile(n, candidates):
    for c in candidates:
        if c <= n and n % c == 0:
            return c
    return n


_MM_TILES = (1024, 512, 256, 128, 64, 32, 16, 8)
_EW_TILES = (2048, 1024, 512, 256, 128, 64, 32, 16, 8)


def pallas_matmul(a, b, act="none", out_dtype=jnp.float32):
    """A (M, K) @ B (K, N) -> (M, N). K and N resident; grid only over M."""
    M, K = a.shape
    _, N = b.shape
    tm = _pick_tile(M, _MM_TILES)
    kern = functools.partial(_matmul_act_kernel, act=act)
    return pl.pallas_call(
        kern,
        out_shape=jax.ShapeDtypeStruct((M, N), out_dtype),
        grid_spec=pltpu.PrefetchScalarGridSpec(
            num_scalar_prefetch=0,
            grid=(M // tm,),
            in_specs=[pl.BlockSpec((tm, K), lambda i: (i, 0)),
                      pl.BlockSpec((K, N), lambda i: (0, 0))],
            out_specs=pl.BlockSpec((tm, N), lambda i: (i, 0))),
        compiler_params=pltpu.CompilerParams(
            dimension_semantics=("parallel",),
            vmem_limit_bytes=_VMEM_LIMIT),
    )(a, b)


def pallas_matmul_stats(a, b):
    """GEMM plus per-column sum / sum-sq accumulated across the M grid axis."""
    M, K = a.shape
    _, N = b.shape
    tm = _pick_tile(M, _MM_TILES)
    return pl.pallas_call(
        _matmul_stats_kernel,
        out_shape=(jax.ShapeDtypeStruct((M, N), jnp.float32),
                   jax.ShapeDtypeStruct((1, N), jnp.float32),
                   jax.ShapeDtypeStruct((1, N), jnp.float32)),
        grid_spec=pltpu.PrefetchScalarGridSpec(
            num_scalar_prefetch=0,
            grid=(M // tm,),
            in_specs=[pl.BlockSpec((tm, K), lambda i: (i, 0)),
                      pl.BlockSpec((K, N), lambda i: (0, 0))],
            out_specs=(pl.BlockSpec((tm, N), lambda i: (i, 0)),
                       pl.BlockSpec((1, N), lambda i: (0, 0)),
                       pl.BlockSpec((1, N), lambda i: (0, 0)))),
        compiler_params=pltpu.CompilerParams(
            dimension_semantics=("arbitrary",),   # stats outputs are resident accumulators
            vmem_limit_bytes=_VMEM_LIMIT),
    )(a, b)


def pallas_bn_act(x, scale, shift, act, out_dtype):
    """y = act(x * scale + shift); scale/shift are (1, C) resident rows."""
    M, C = x.shape
    tm = _pick_tile(M, _EW_TILES)
    kern = functools.partial(_bn_act_kernel, act=act)
    return pl.pallas_call(
        kern,
        out_shape=jax.ShapeDtypeStruct((M, C), out_dtype),
        grid_spec=pltpu.PrefetchScalarGridSpec(
            num_scalar_prefetch=0,
            grid=(M // tm,),
            in_specs=[pl.BlockSpec((tm, C), lambda i: (i, 0)),
                      pl.BlockSpec((1, C), lambda i: (0, 0)),
                      pl.BlockSpec((1, C), lambda i: (0, 0))],
            out_specs=pl.BlockSpec((tm, C), lambda i: (i, 0))),
        compiler_params=pltpu.CompilerParams(
            dimension_semantics=("parallel",),
            vmem_limit_bytes=_VMEM_LIMIT),
    )(x, scale, shift)


# --------------------- ConvTranspose2d (stride 2) lowering -------------------
# y[n, 2j+r, 2i+s, co] for phases (r, s) in {0,1}^2 is a stride-1 conv of the
# zero-padded input with a 2x2 sub-kernel of the 4x4 ConvTranspose weight.
# All four phases are computed by one GEMM over 3x3 patches of the padded input.

# kernel-tap index used by (phase r, patch-offset t); None -> zero coefficient
_KTAP = {(0, 0): 3, (0, 1): 1, (1, 1): 2, (1, 2): 0}


def _s2_im2col(x_nhwc):
    """(N, H, W, Cin) -> (N*H*W, 9*Cin) of 3x3 patches on the 1-padded input."""
    n, h, w, cin = x_nhwc.shape
    xp = jnp.pad(x_nhwc, ((0, 0), (1, 1), (1, 1), (0, 0)))
    patches = jnp.stack(
        [xp[:, th:th + h, tw:tw + w, :] for th in range(3) for tw in range(3)],
        axis=3)                                   # (N, H, W, 9, Cin), K order (th, tw, ci)
    return patches.reshape(n * h * w, 9 * cin)


def _s2_weight(w):
    """PyTorch ConvTranspose2d weight (Cin, Cout, 4, 4) -> GEMM B (9*Cin, 4*Cout).

    Row order (th, tw, ci); column order (rh, rw, co) = sub-pixel phase major.
    """
    cin, cout, _, _ = w.shape
    zero = jnp.zeros((cin, cout), w.dtype)
    rows = []
    for th in range(3):
        for tw in range(3):
            cols = []
            for rh in range(2):
                for rw in range(2):
                    kh = _KTAP.get((rh, th))
                    kw = _KTAP.get((rw, tw))
                    cols.append(zero if (kh is None or kw is None) else w[:, :, kh, kw])
            rows.append(jnp.concatenate(cols, axis=1))      # (cin, 4*cout)
    return jnp.concatenate(rows, axis=0)                    # (9*cin, 4*cout)


def _pixel_shuffle(y, n, h, w, cout):
    """(N*H*W, 4*Cout) with (rh, rw, co) columns -> NHWC (N, 2H, 2W, Cout)."""
    y = y.reshape(n, h, w, 2, 2, cout).transpose(0, 1, 3, 2, 4, 5)
    return y.reshape(n, 2 * h, 2 * w, cout)


def _bn_scale_shift(col_sum, col_sq, gamma, beta, n_phase, count, eps):
    """Fold phase-expanded per-column sums into per-channel BN scale/shift (f32)."""
    c = gamma.shape[0]
    s = col_sum.reshape(n_phase, c).sum(axis=0)
    sq = col_sq.reshape(n_phase, c).sum(axis=0)
    mean = s / count
    var = jnp.maximum(sq / count - mean * mean, 0.0)
    scale = gamma / jnp.sqrt(var + eps)
    shift = beta - mean * scale
    return scale.reshape(1, c).astype(jnp.float32), shift.reshape(1, c).astype(jnp.float32)


# ------------------------------ Generator ----------------------------------

def generator_forward(z, params):
    """z: (N, nz, 1, 1) NCHW  ->  (N, nc, 64, 64) NCHW, values in [-1, 1]."""
    eps = 1e-5
    n = z.shape[0]

    # --- layer 1: 1x1 spatial ConvTranspose (stride 1, pad 0) == dense GEMM ---
    w1 = params["w1"]                              # (nz, c1, 4, 4)
    nz_, c1 = w1.shape[0], w1.shape[1]
    a = z.reshape(n, nz_).astype(_COMPUTE_DTYPE)
    b = jnp.transpose(w1, (0, 2, 3, 1)).reshape(nz_, 16 * c1).astype(_COMPUTE_DTYPE)
    y, s, sq = pallas_matmul_stats(a, b)           # (n, 16*c1), cols = (kh, kw, co)
    scale, shift = _bn_scale_shift(s, sq, params["g1"], params["b1"],
                                   n_phase=16, count=n * 16, eps=eps)
    y = pallas_bn_act(y, jnp.tile(scale, (1, 16)), jnp.tile(shift, (1, 16)),
                      "relu", _COMPUTE_DTYPE)
    x = y.reshape(n, 4, 4, c1)                     # NHWC, bf16

    # --- layers 2..5: stride-2 ConvTranspose as 4-phase (pixel-shuffle) GEMM ---
    layer_specs = [("w2", "g2", "b2", "relu"),
                   ("w3", "g3", "b3", "relu"),
                   ("w4", "g4", "b4", "relu"),
                   ("w5", None, None, "tanh")]
    for wname, gname, bname, act in layer_specs:
        wgt = params[wname]
        cout = wgt.shape[1]
        _, h, wd, _ = x.shape
        m_rows = n * h * wd
        a = _s2_im2col(x).astype(_COMPUTE_DTYPE)           # (N*H*W, 9*Cin)
        b = _s2_weight(wgt).astype(_COMPUTE_DTYPE)         # (9*Cin, 4*Cout)

        if gname is not None:
            y, s, sq = pallas_matmul_stats(a, b)           # (N*H*W, 4*Cout)
            scale, shift = _bn_scale_shift(s, sq, params[gname], params[bname],
                                           n_phase=4, count=4 * m_rows, eps=eps)
            y = pallas_bn_act(y, jnp.tile(scale, (1, 4)), jnp.tile(shift, (1, 4)),
                              act, _COMPUTE_DTYPE)
        else:
            # final layer: no BatchNorm, tanh fused directly into the GEMM
            y = pallas_matmul(a, b, act=act, out_dtype=jnp.float32)

        x = _pixel_shuffle(y, n, h, wd, cout)              # NHWC, 2x spatial

    return jnp.transpose(x, (0, 3, 1, 2)).astype(jnp.float32)   # back to NCHW once


# ------------------------- pure-JAX f32 reference ----------------------------

def _ref_generator_forward(z, params):
    eps = 1e-5

    def convt(x, w, stride, pad):
        k = w.shape[2]
        rhs = jnp.transpose(w, (1, 0, 2, 3))[:, :, ::-1, ::-1]   # (Cout, Cin, k, k), flipped
        return lax.conv_general_dilated(
            x, rhs, window_strides=(1, 1),
            padding=[(k - 1 - pad, k - 1 - pad)] * 2,
            lhs_dilation=(stride, stride),
            dimension_numbers=("NCHW", "OIHW", "NCHW"))

    def bn(x, g, b):
        mean = jnp.mean(x, axis=(0, 2, 3), keepdims=True)
        var = jnp.mean((x - mean) ** 2, axis=(0, 2, 3), keepdims=True)
        return (x - mean) / jnp.sqrt(var + eps) * g.reshape(1, -1, 1, 1) + b.reshape(1, -1, 1, 1)

    x = z
    x = jnp.maximum(bn(convt(x, params["w1"], 1, 0), params["g1"], params["b1"]), 0.0)
    x = jnp.maximum(bn(convt(x, params["w2"], 2, 1), params["g2"], params["b2"]), 0.0)
    x = jnp.maximum(bn(convt(x, params["w3"], 2, 1), params["g3"], params["b3"]), 0.0)
    x = jnp.maximum(bn(convt(x, params["w4"], 2, 1), params["g4"], params["b4"]), 0.0)
    return jnp.tanh(convt(x, params["w5"], 2, 1))


# ------------------------------- params -------------------------------------

def init_params(key, nz, ngf, nc):
    ks = jax.random.split(key, 5)
    shapes = [(nz, ngf * 8, 4, 4),
              (ngf * 8, ngf * 4, 4, 4),
              (ngf * 4, ngf * 2, 4, 4),
              (ngf * 2, ngf, 4, 4),
              (ngf, nc, 4, 4)]
    params = {}
    for i, (k, shp) in enumerate(zip(ks, shapes), start=1):
        params[f"w{i}"] = (0.02 * jax.random.normal(k, shp)).astype(jnp.float32)
    for i, ch in enumerate((ngf * 8, ngf * 4, ngf * 2, ngf), start=1):
        params[f"g{i}"] = jnp.ones((ch,), jnp.float32)   # BN weight init
        params[f"b{i}"] = jnp.zeros((ch,), jnp.float32)  # BN bias init
    return params


if __name__ == "__main__":
    # Small but structure-preserving sizes: nz=16, ngf=8, nc=3, batch=2.
    # (Spatial path is fixed by the architecture: 1 -> 4 -> 8 -> 16 -> 32 -> 64.)
    nz, ngf, nc, batch = 16, 8, 3, 2

    key = jax.random.PRNGKey(0)
    pkey, zkey = jax.random.split(key)
    params = init_params(pkey, nz, ngf, nc)
    z = jax.random.normal(zkey, (batch, nz, 1, 1), dtype=jnp.float32)

    out = jax.jit(generator_forward)(z, params)
    out = jax.block_until_ready(out)

    assert out.shape == (batch, nc, 64, 64), out.shape
    assert out.dtype == jnp.float32
    assert bool(jnp.all(jnp.isfinite(out)))
    assert bool(jnp.all(jnp.abs(out) <= 1.0 + 1e-6))   # tanh range

    # Loose numerical check against an f32 XLA reference (bf16 GEMM inputs /
    # bf16 intermediate activations cause small drift; structural bugs would be >> 0.12).
    ref = jax.block_until_ready(jax.jit(_ref_generator_forward)(z, params))
    max_diff = float(jnp.max(jnp.abs(out - ref)))
    assert max_diff < 0.12, f"max |pallas - ref| = {max_diff}"

    print("KERNEL_OK")
</pallas_src>

<mosaic_0001>
module attributes {stable_mosaic.version = 11 : i64} {
  func.func @_matmul_stats_kernel(%arg0: i32, %arg1: memref<2x16xbf16, #tpu.memory_space<vmem>>, %arg2: memref<16x1024xbf16, #tpu.memory_space<vmem>>, %arg3: memref<2x1024xf32, #tpu.memory_space<vmem>>, %arg4: memref<1x1024xf32, #tpu.memory_space<vmem>>, %arg5: memref<1x1024xf32, #tpu.memory_space<vmem>>) attributes {dimension_semantics = [#tpu.dimension_semantics<arbitrary>], iteration_bounds = array<i64: 1>, scalar_prefetch = 0 : i64, scratch_operands = 0 : i64, tpu.core_type = #tpu.core_type<tc>, window_params = [{transform_indices = @transform_0, window_bounds = array<i64: 2, 16>}, {pipeline_mode = #tpu.pipeline_mode<synchronous>, transform_indices = @transform_1, window_bounds = array<i64: 16, 1024>}, {transform_indices = @transform_2, window_bounds = array<i64: 2, 1024>}, {pipeline_mode = #tpu.pipeline_mode<synchronous>, transform_indices = @transform_3, window_bounds = array<i64: 1, 1024>}, {pipeline_mode = #tpu.pipeline_mode<synchronous>, transform_indices = @transform_4, window_bounds = array<i64: 1, 1024>}]} {
    %c0_i32 = arith.constant 0 : i32
    %0 = arith.cmpi eq, %arg0, %c0_i32 : i32
    %1 = arith.extui %0 : i1 to i32
    %c0_i32_0 = arith.constant 0 : i32
    %2 = arith.cmpi ne, %1, %c0_i32_0 : i32
    scf.if %2 {
      %cst_16 = arith.constant 0.000000e+00 : f32
      %18 = vector.broadcast %cst_16 : f32 to vector<1x1024xf32>
      %c0_17 = arith.constant 0 : index
      %c0_18 = arith.constant 0 : index
      %19 = vector.load %arg4[%c0_17, %c0_18] : memref<1x1024xf32, #tpu.memory_space<vmem>>, vector<1x1024xf32>
      tpu.vector_store %arg4[%c0_17, %c0_18], %18 {strides = array<i32>} : memref<1x1024xf32, #tpu.memory_space<vmem>>, vector<1x1024xf32>,
      %cst_19 = arith.constant 0.000000e+00 : f32
      %20 = vector.broadcast %cst_19 : f32 to vector<1x1024xf32>
      %c0_20 = arith.constant 0 : index
      %c0_21 = arith.constant 0 : index
      %21 = vector.load %arg5[%c0_20, %c0_21] : memref<1x1024xf32, #tpu.memory_space<vmem>>, vector<1x1024xf32>
      tpu.vector_store %arg5[%c0_20, %c0_21], %20 {strides = array<i32>} : memref<1x1024xf32, #tpu.memory_space<vmem>>, vector<1x1024xf32>,
    } else {
    }
    %c0 = arith.constant 0 : index
    %c0_1 = arith.constant 0 : index
    %3 = vector.load %arg1[%c0, %c0_1] : memref<2x16xbf16, #tpu.memory_space<vmem>>, vector<2x16xbf16>
    %c0_2 = arith.constant 0 : index
    %c0_3 = arith.constant 0 : index
    %4 = vector.load %arg2[%c0_2, %c0_3] : memref<16x1024xbf16, #tpu.memory_space<vmem>>, vector<16x1024xbf16>
    %cst = arith.constant dense<0.000000e+00> : vector<2x1024xf32>
    %5 = tpu.matmul %3, %4, %cst {dimension_numbers = #tpu.dot_dimension_numbers<[1], [0], [0], [1], [0, 0, 1, 1], [], []>} : vector<2x16xbf16>, vector<16x1024xbf16>, vector<2x1024xf32> -> vector<2x1024xf32>
    %c0_4 = arith.constant 0 : index
    %c0_5 = arith.constant 0 : index
    %6 = vector.load %arg3[%c0_4, %c0_5] : memref<2x1024xf32, #tpu.memory_space<vmem>>, vector<2x1024xf32>
    tpu.vector_store %arg3[%c0_4, %c0_5], %5 {strides = array<i32>} : memref<2x1024xf32, #tpu.memory_space<vmem>>, vector<2x1024xf32>,
    %c0_6 = arith.constant 0 : index
    %c0_7 = arith.constant 0 : index
    %7 = vector.load %arg4[%c0_6, %c0_7] : memref<1x1024xf32, #tpu.memory_space<vmem>>, vector<1x1024xf32>
    %cst_8 = arith.constant dense<0.000000e+00> : vector<1024xf32>
    %8 = vector.multi_reduction <add>, %5, %cst_8 [0] : vector<2x1024xf32> to vector<1024xf32>
    %9 = vector.shape_cast %8 : vector<1024xf32> to vector<1x1024xf32>
    %10 = arith.addf %7, %9 : vector<1x1024xf32>
    %c0_9 = arith.constant 0 : index
    %c0_10 = arith.constant 0 : index
    %11 = vector.load %arg4[%c0_9, %c0_10] : memref<1x1024xf32, #tpu.memory_space<vmem>>, vector<1x1024xf32>
    tpu.vector_store %arg4[%c0_9, %c0_10], %10 {strides = array<i32>} : memref<1x1024xf32, #tpu.memory_space<vmem>>, vector<1x1024xf32>,
    %c0_11 = arith.constant 0 : index
    %c0_12 = arith.constant 0 : index
    %12 = vector.load %arg5[%c0_11, %c0_12] : memref<1x1024xf32, #tpu.memory_space<vmem>>, vector<1x1024xf32>
    %13 = arith.mulf %5, %5 : vector<2x1024xf32>
    %cst_13 = arith.constant dense<0.000000e+00> : vector<1024xf32>
    %14 = vector.multi_reduction <add>, %13, %cst_13 [0] : vector<2x1024xf32> to vector<1024xf32>
    %15 = vector.shape_cast %14 : vector<1024xf32> to vector<1x1024xf32>
    %16 = arith.addf %12, %15 : vector<1x1024xf32>
    %c0_14 = arith.constant 0 : index
    %c0_15 = arith.constant 0 : index
    %17 = vector.load %arg5[%c0_14, %c0_15] : memref<1x1024xf32, #tpu.memory_space<vmem>>, vector<1x1024xf32>
    tpu.vector_store %arg5[%c0_14, %c0_15], %16 {strides = array<i32>} : memref<1x1024xf32, #tpu.memory_space<vmem>>, vector<1x1024xf32>,
    return
  }
  func.func @transform_0(%arg0: i32) -> (i32, i32) {
    %c0_i32 = arith.constant 0 : i32
    %c0_i32_0 = arith.constant 0 : i32
    return %arg0, %c0_i32 : i32, i32
  }
  func.func @transform_1(%arg0: i32) -> (i32, i32) {
    %c0_i32 = arith.constant 0 : i32
    %c0_i32_0 = arith.constant 0 : i32
    %c0_i32_1 = arith.constant 0 : i32
    return %c0_i32, %c0_i32_0 : i32, i32
  }
  func.func @transform_2(%arg0: i32) -> (i32, i32) {
    %c0_i32 = arith.constant 0 : i32
    %c0_i32_0 = arith.constant 0 : i32
    return %arg0, %c0_i32 : i32, i32
  }
  func.func @transform_3(%arg0: i32) -> (i32, i32) {
    %c0_i32 = arith.constant 0 : i32
    %c0_i32_0 = arith.constant 0 : i32
    %c0_i32_1 = arith.constant 0 : i32
    return %c0_i32, %c0_i32_0 : i32, i32
  }
  func.func @transform_4(%arg0: i32) -> (i32, i32) {
    %c0_i32 = arith.constant 0 : i32
    %c0_i32_0 = arith.constant 0 : i32
    %c0_i32_1 = arith.constant 0 : i32
    return %c0_i32, %c0_i32_0 : i32, i32
  }
}

module attributes {stable_mosaic.version = 11 : i64} {
  func.func @_bn_act_kernel(%arg0: i32, %arg1: memref<2x1024xf32, #tpu.memory_space<vmem>>, %arg2: memref<1x1024xf32, #tpu.memory_space<vmem>>, %arg3: memref<1x1024xf32, #tpu.memory_space<vmem>>, %arg4: memref<2x1024xbf16, #tpu.memory_space<vmem>>) attributes {dimension_semantics = [#tpu.dimension_semantics<parallel>], iteration_bounds = array<i64: 1>, scalar_prefetch = 0 : i64, scratch_operands = 0 : i64, tpu.core_type = #tpu.core_type<tc>, window_params = [{transform_indices = @transform_0, window_bounds = array<i64: 2, 1024>}, {pipeline_mode = #tpu.pipeline_mode<synchronous>, transform_indices = @transform_1, window_bounds = array<i64: 1, 1024>}, {pipeline_mode = #tpu.pipeline_mode<synchronous>, transform_indices = @transform_2, window_bounds = array<i64: 1, 1024>}, {transform_indices = @transform_3, window_bounds = array<i64: 2, 1024>}]} {
    %c0 = arith.constant 0 : index
    %c0_0 = arith.constant 0 : index
    %0 = vector.load %arg1[%c0, %c0_0] : memref<2x1024xf32, #tpu.memory_space<vmem>>, vector<2x1024xf32>
    %c0_1 = arith.constant 0 : index
    %c0_2 = arith.constant 0 : index
    %1 = vector.load %arg2[%c0_1, %c0_2] : memref<1x1024xf32, #tpu.memory_space<vmem>>, vector<1x1024xf32>
    %2 = vector.broadcast %1 : vector<1x1024xf32> to vector<2x1024xf32>
    %3 = arith.mulf %0, %2 : vector<2x1024xf32>
    %c0_3 = arith.constant 0 : index
    %c0_4 = arith.constant 0 : index
    %4 = vector.load %arg3[%c0_3, %c0_4] : memref<1x1024xf32, #tpu.memory_space<vmem>>, vector<1x1024xf32>
    %5 = vector.broadcast %4 : vector<1x1024xf32> to vector<2x1024xf32>
    %6 = arith.addf %3, %5 : vector<2x1024xf32>
    %cst = arith.constant 0.000000e+00 : f32
    %7 = vector.broadcast %cst : f32 to vector<2x1024xf32>
    %8 = arith.maximumf %6, %7 : vector<2x1024xf32>
    %9 = arith.truncf %8 : vector<2x1024xf32> to vector<2x1024xbf16>
    %c0_5 = arith.constant 0 : index
    %c0_6 = arith.constant 0 : index
    %10 = vector.load %arg4[%c0_5, %c0_6] : memref<2x1024xbf16, #tpu.memory_space<vmem>>, vector<2x1024xbf16>
    tpu.vector_store %arg4[%c0_5, %c0_6], %9 {strides = array<i32>} : memref<2x1024xbf16, #tpu.memory_space<vmem>>, vector<2x1024xbf16>,
    return
  }
  func.func @transform_0(%arg0: i32) -> (i32, i32) {
    %c0_i32 = arith.constant 0 : i32
    %c0_i32_0 = arith.constant 0 : i32
    return %arg0, %c0_i32 : i32, i32
  }
  func.func @transform_1(%arg0: i32) -> (i32, i32) {
    %c0_i32 = arith.constant 0 : i32
    %c0_i32_0 = arith.constant 0 : i32
    %c0_i32_1 = arith.constant 0 : i32
    return %c0_i32, %c0_i32_0 : i32, i32
  }
  func.func @transform_2(%arg0: i32) -> (i32, i32) {
    %c0_i32 = arith.constant 0 : i32
    %c0_i32_0 = arith.constant 0 : i32
    %c0_i32_1 = arith.constant 0 : i32
    return %c0_i32, %c0_i32_0 : i32, i32
  }
  func.func @transform_3(%arg0: i32) -> (i32, i32) {
    %c0_i32 = arith.constant 0 : i32
    %c0_i32_0 = arith.constant 0 : i32
    return %arg0, %c0_i32 : i32, i32
  }
}

module attributes {stable_mosaic.version = 11 : i64} {
  func.func @_matmul_stats_kernel(%arg0: i32, %arg1: memref<32x576xbf16, #tpu.memory_space<vmem>>, %arg2: memref<576x128xbf16, #tpu.memory_space<vmem>>, %arg3: memref<32x128xf32, #tpu.memory_space<vmem>>, %arg4: memref<1x128xf32, #tpu.memory_space<vmem>>, %arg5: memref<1x128xf32, #tpu.memory_space<vmem>>) attributes {dimension_semantics = [#tpu.dimension_semantics<arbitrary>], iteration_bounds = array<i64: 1>, scalar_prefetch = 0 : i64, scratch_operands = 0 : i64, tpu.core_type = #tpu.core_type<tc>, window_params = [{transform_indices = @transform_0, window_bounds = array<i64: 32, 576>}, {pipeline_mode = #tpu.pipeline_mode<synchronous>, transform_indices = @transform_1, window_bounds = array<i64: 576, 128>}, {transform_indices = @transform_2, window_bounds = array<i64: 32, 128>}, {pipeline_mode = #tpu.pipeline_mode<synchronous>, transform_indices = @transform_3, window_bounds = array<i64: 1, 128>}, {pipeline_mode = #tpu.pipeline_mode<synchronous>, transform_indices = @transform_4, window_bounds = array<i64: 1, 128>}]} {
    %c0_i32 = arith.constant 0 : i32
    %0 = arith.cmpi eq, %arg0, %c0_i32 : i32
    %1 = arith.extui %0 : i1 to i32
    %c0_i32_0 = arith.constant 0 : i32
    %2 = arith.cmpi ne, %1, %c0_i32_0 : i32
    scf.if %2 {
      %cst_16 = arith.constant 0.000000e+00 : f32
      %18 = vector.broadcast %cst_16 : f32 to vector<1x128xf32>
      %c0_17 = arith.constant 0 : index
      %c0_18 = arith.constant 0 : index
      %19 = vector.load %arg4[%c0_17, %c0_18] : memref<1x128xf32, #tpu.memory_space<vmem>>, vector<1x128xf32>
      tpu.vector_store %arg4[%c0_17, %c0_18], %18 {strides = array<i32>} : memref<1x128xf32, #tpu.memory_space<vmem>>, vector<1x128xf32>,
      %cst_19 = arith.constant 0.000000e+00 : f32
      %20 = vector.broadcast %cst_19 : f32 to vector<1x128xf32>
      %c0_20 = arith.constant 0 : index
      %c0_21 = arith.constant 0 : index
      %21 = vector.load %arg5[%c0_20, %c0_21] : memref<1x128xf32, #tpu.memory_space<vmem>>, vector<1x128xf32>
      tpu.vector_store %arg5[%c0_20, %c0_21], %20 {strides = array<i32>} : memref<1x128xf32, #tpu.memory_space<vmem>>, vector<1x128xf32>,
    } else {
    }
    %c0 = arith.constant 0 : index
    %c0_1 = arith.constant 0 : index
    %3 = vector.load %arg1[%c0, %c0_1] : memref<32x576xbf16, #tpu.memory_space<vmem>>, vector<32x576xbf16>
    %c0_2 = arith.constant 0 : index
    %c0_3 = arith.constant 0 : index
    %4 = vector.load %arg2[%c0_2, %c0_3] : memref<576x128xbf16, #tpu.memory_space<vmem>>, vector<576x128xbf16>
    %cst = arith.constant dense<0.000000e+00> : vector<32x128xf32>
    %5 = tpu.matmul %3, %4, %cst {dimension_numbers = #tpu.dot_dimension_numbers<[1], [0], [0], [1], [0, 0, 1, 1], [], []>} : vector<32x576xbf16>, vector<576x128xbf16>, vector<32x128xf32> -> vector<32x128xf32>
    %c0_4 = arith.constant 0 : index
    %c0_5 = arith.constant 0 : index
    %6 = vector.load %arg3[%c0_4, %c0_5] : memref<32x128xf32, #tpu.memory_space<vmem>>, vector<32x128xf32>
    tpu.vector_store %arg3[%c0_4, %c0_5], %5 {strides = array<i32>} : memref<32x128xf32, #tpu.memory_space<vmem>>, vector<32x128xf32>,
    %c0_6 = arith.constant 0 : index
    %c0_7 = arith.constant 0 : index
    %7 = vector.load %arg4[%c0_6, %c0_7] : memref<1x128xf32, #tpu.memory_space<vmem>>, vector<1x128xf32>
    %cst_8 = arith.constant dense<0.000000e+00> : vector<128xf32>
    %8 = vector.multi_reduction <add>, %5, %cst_8 [0] : vector<32x128xf32> to vector<128xf32>
    %9 = vector.shape_cast %8 : vector<128xf32> to vector<1x128xf32>
    %10 = arith.addf %7, %9 : vector<1x128xf32>
    %c0_9 = arith.constant 0 : index
    %c0_10 = arith.constant 0 : index
    %11 = vector.load %arg4[%c0_9, %c0_10] : memref<1x128xf32, #tpu.memory_space<vmem>>, vector<1x128xf32>
    tpu.vector_store %arg4[%c0_9, %c0_10], %10 {strides = array<i32>} : memref<1x128xf32, #tpu.memory_space<vmem>>, vector<1x128xf32>,
    %c0_11 = arith.constant 0 : index
    %c0_12 = arith.constant 0 : index
    %12 = vector.load %arg5[%c0_11, %c0_12] : memref<1x128xf32, #tpu.memory_space<vmem>>, vector<1x128xf32>
    %13 = arith.mulf %5, %5 : vector<32x128xf32>
    %cst_13 = arith.constant dense<0.000000e+00> : vector<128xf32>
    %14 = vector.multi_reduction <add>, %13, %cst_13 [0] : vector<32x128xf32> to vector<128xf32>
    %15 = vector.shape_cast %14 : vector<128xf32> to vector<1x128xf32>
    %16 = arith.addf %12, %15 : vector<1x128xf32>
    %c0_14 = arith.constant 0 : index
    %c0_15 = arith.constant 0 : index
    %17 = vector.load %arg5[%c0_14, %c0_15] : memref<1x128xf32, #tpu.memory_space<vmem>>, vector<1x128xf32>
    tpu.vector_store %arg5[%c0_14, %c0_15], %16 {strides = array<i32>} : memref<1x128xf32, #tpu.memory_space<vmem>>, vector<1x128xf32>,
    return
  }
  func.func @transform_0(%arg0: i32) -> (i32, i32) {
    %c0_i32 = arith.constant 0 : i32
    %c0_i32_0 = arith.constant 0 : i32
    return %arg0, %c0_i32 : i32, i32
  }
  func.func @transform_1(%arg0: i32) -> (i32, i32) {
    %c0_i32 = arith.constant 0 : i32
    %c0_i32_0 = arith.constant 0 : i32
    %c0_i32_1 = arith.constant 0 : i32
    return %c0_i32, %c0_i32_0 : i32, i32
  }
  func.func @transform_2(%arg0: i32) -> (i32, i32) {
    %c0_i32 = arith.constant 0 : i32
    %c0_i32_0 = arith.constant 0 : i32
    return %arg0, %c0_i32 : i32, i32
  }
  func.func @transform_3(%arg0: i32) -> (i32, i32) {
    %c0_i32 = arith.constant 0 : i32
    %c0_i32_0 = arith.constant 0 : i32
    %c0_i32_1 = arith.constant 0 : i32
    return %c0_i32, %c0_i32_0 : i32, i32
  }
  func.func @transform_4(%arg0: i32) -> (i32, i32) {
    %c0_i32 = arith.constant 0 : i32
    %c0_i32_0 = arith.constant 0 : i32
    %c0_i32_1 = arith.constant 0 : i32
    return %c0_i32, %c0_i32_0 : i32, i32
  }
}

module attributes {stable_mosaic.version = 11 : i64} {
  func.func @_bn_act_kernel(%arg0: i32, %arg1: memref<32x128xf32, #tpu.memory_space<vmem>>, %arg2: memref<1x128xf32, #tpu.memory_space<vmem>>, %arg3: memref<1x128xf32, #tpu.memory_space<vmem>>, %arg4: memref<32x128xbf16, #tpu.memory_space<vmem>>) attributes {dimension_semantics = [#tpu.dimension_semantics<parallel>], iteration_bounds = array<i64: 1>, scalar_prefetch = 0 : i64, scratch_operands = 0 : i64, tpu.core_type = #tpu.core_type<tc>, window_params = [{transform_indices = @transform_0, window_bounds = array<i64: 32, 128>}, {pipeline_mode = #tpu.pipeline_mode<synchronous>, transform_indices = @transform_1, window_bounds = array<i64: 1, 128>}, {pipeline_mode = #tpu.pipeline_mode<synchronous>, transform_indices = @transform_2, window_bounds = array<i64: 1, 128>}, {transform_indices = @transform_3, window_bounds = array<i64: 32, 128>}]} {
    %c0 = arith.constant 0 : index
    %c0_0 = arith.constant 0 : index
    %0 = vector.load %arg1[%c0, %c0_0] : memref<32x128xf32, #tpu.memory_space<vmem>>, vector<32x128xf32>
    %c0_1 = arith.constant 0 : index
    %c0_2 = arith.constant 0 : index
    %1 = vector.load %arg2[%c0_1, %c0_2] : memref<1x128xf32, #tpu.memory_space<vmem>>, vector<1x128xf32>
    %2 = vector.broadcast %1 : vector<1x128xf32> to vector<32x128xf32>
    %3 = arith.mulf %0, %2 : vector<32x128xf32>
    %c0_3 = arith.constant 0 : index
    %c0_4 = arith.constant 0 : index
    %4 = vector.load %arg3[%c0_3, %c0_4] : memref<1x128xf32, #tpu.memory_space<vmem>>, vector<1x128xf32>
    %5 = vector.broadcast %4 : vector<1x128xf32> to vector<32x128xf32>
    %6 = arith.addf %3, %5 : vector<32x128xf32>
    %cst = arith.constant 0.000000e+00 : f32
    %7 = vector.broadcast %cst : f32 to vector<32x128xf32>
    %8 = arith.maximumf %6, %7 : vector<32x128xf32>
    %9 = arith.truncf %8 : vector<32x128xf32> to vector<32x128xbf16>
    %c0_5 = arith.constant 0 : index
    %c0_6 = arith.constant 0 : index
    %10 = vector.load %arg4[%c0_5, %c0_6] : memref<32x128xbf16, #tpu.memory_space<vmem>>, vector<32x128xbf16>
    tpu.vector_store %arg4[%c0_5, %c0_6], %9 {strides = array<i32>} : memref<32x128xbf16, #tpu.memory_space<vmem>>, vector<32x128xbf16>,
    return
  }
  func.func @transform_0(%arg0: i32) -> (i32, i32) {
    %c0_i32 = arith.constant 0 : i32
    %c0_i32_0 = arith.constant 0 : i32
    return %arg0, %c0_i32 : i32, i32
  }
  func.func @transform_1(%arg0: i32) -> (i32, i32) {
    %c0_i32 = arith.constant 0 : i32
    %c0_i32_0 = arith.constant 0 : i32
    %c0_i32_1 = arith.constant 0 : i32
    return %c0_i32, %c0_i32_0 : i32, i32
  }
  func.func @transform_2(%arg0: i32) -> (i32, i32) {
    %c0_i32 = arith.constant 0 : i32
    %c0_i32_0 = arith.constant 0 : i32
    %c0_i32_1 = arith.constant 0 : i32
    return %c0_i32, %c0_i32_0 : i32, i32
  }
  func.func @transform_3(%arg0: i32) -> (i32, i32) {
    %c0_i32 = arith.constant 0 : i32
    %c0_i32_0 = arith.constant 0 : i32
    return %arg0, %c0_i32 : i32, i32
  }
}

module attributes {stable_mosaic.version = 11 : i64} {
  func.func @_matmul_stats_kernel(%arg0: i32, %arg1: memref<128x288xbf16, #tpu.memory_space<vmem>>, %arg2: memref<288x64xbf16, #tpu.memory_space<vmem>>, %arg3: memref<128x64xf32, #tpu.memory_space<vmem>>, %arg4: memref<1x64xf32, #tpu.memory_space<vmem>>, %arg5: memref<1x64xf32, #tpu.memory_space<vmem>>) attributes {dimension_semantics = [#tpu.dimension_semantics<arbitrary>], iteration_bounds = array<i64: 1>, scalar_prefetch = 0 : i64, scratch_operands = 0 : i64, tpu.core_type = #tpu.core_type<tc>, window_params = [{transform_indices = @transform_0, window_bounds = array<i64: 128, 288>}, {pipeline_mode = #tpu.pipeline_mode<synchronous>, transform_indices = @transform_1, window_bounds = array<i64: 288, 64>}, {transform_indices = @transform_2, window_bounds = array<i64: 128, 64>}, {pipeline_mode = #tpu.pipeline_mode<synchronous>, transform_indices = @transform_3, window_bounds = array<i64: 1, 64>}, {pipeline_mode = #tpu.pipeline_mode<synchronous>, transform_indices = @transform_4, window_bounds = array<i64: 1, 64>}]} {
    %c0_i32 = arith.constant 0 : i32
    %0 = arith.cmpi eq, %arg0, %c0_i32 : i32
    %1 = arith.extui %0 : i1 to i32
    %c0_i32_0 = arith.constant 0 : i32
    %2 = arith.cmpi ne, %1, %c0_i32_0 : i32
    scf.if %2 {
      %cst_16 = arith.constant 0.000000e+00 : f32
      %18 = vector.broadcast %cst_16 : f32 to vector<1x64xf32>
      %c0_17 = arith.constant 0 : index
      %c0_18 = arith.constant 0 : index
      %19 = vector.load %arg4[%c0_17, %c0_18] : memref<1x64xf32, #tpu.memory_space<vmem>>, vector<1x64xf32>
      tpu.vector_store %arg4[%c0_17, %c0_18], %18 {strides = array<i32>} : memref<1x64xf32, #tpu.memory_space<vmem>>, vector<1x64xf32>,
      %cst_19 = arith.constant 0.000000e+00 : f32
      %20 = vector.broadcast %cst_19 : f32 to vector<1x64xf32>
      %c0_20 = arith.constant 0 : index
      %c0_21 = arith.constant 0 : index
      %21 = vector.load %arg5[%c0_20, %c0_21] : memref<1x64xf32, #tpu.memory_space<vmem>>, vector<1x64xf32>
      tpu.vector_store %arg5[%c0_20, %c0_21], %20 {strides = array<i32>} : memref<1x64xf32, #tpu.memory_space<vmem>>, vector<1x64xf32>,
    } else {
    }
    %c0 = arith.constant 0 : index
    %c0_1 = arith.constant 0 : index
    %3 = vector.load %arg1[%c0, %c0_1] : memref<128x288xbf16, #tpu.memory_space<vmem>>, vector<128x288xbf16>
    %c0_2 = arith.constant 0 : index
    %c0_3 = arith.constant 0 : index
    %4 = vector.load %arg2[%c0_2, %c0_3] : memref<288x64xbf16, #tpu.memory_space<vmem>>, vector<288x64xbf16>
    %cst = arith.constant dense<0.000000e+00> : vector<128x64xf32>
    %5 = tpu.matmul %3, %4, %cst {dimension_numbers = #tpu.dot_dimension_numbers<[1], [0], [0], [1], [0, 0, 1, 1], [], []>} : vector<128x288xbf16>, vector<288x64xbf16>, vector<128x64xf32> -> vector<128x64xf32>
    %c0_4 = arith.constant 0 : index
    %c0_5 = arith.constant 0 : index
    %6 = vector.load %arg3[%c0_4, %c0_5] : memref<128x64xf32, #tpu.memory_space<vmem>>, vector<128x64xf32>
    tpu.vector_store %arg3[%c0_4, %c0_5], %5 {strides = array<i32>} : memref<128x64xf32, #tpu.memory_space<vmem>>, vector<128x64xf32>,
    %c0_6 = arith.constant 0 : index
    %c0_7 = arith.constant 0 : index
    %7 = vector.load %arg4[%c0_6, %c0_7] : memref<1x64xf32, #tpu.memory_space<vmem>>, vector<1x64xf32>
    %cst_8 = arith.constant dense<0.000000e+00> : vector<64xf32>
    %8 = vector.multi_reduction <add>, %5, %cst_8 [0] : vector<128x64xf32> to vector<64xf32>
    %9 = vector.shape_cast %8 : vector<64xf32> to vector<1x64xf32>
    %10 = arith.addf %7, %9 : vector<1x64xf32>
    %c0_9 = arith.constant 0 : index
    %c0_10 = arith.constant 0 : index
    %11 = vector.load %arg4[%c0_9, %c0_10] : memref<1x64xf32, #tpu.memory_space<vmem>>, vector<1x64xf32>
    tpu.vector_store %arg4[%c0_9, %c0_10], %10 {strides = array<i32>} : memref<1x64xf32, #tpu.memory_space<vmem>>, vector<1x64xf32>,
    %c0_11 = arith.constant 0 : index
    %c0_12 = arith.constant 0 : index
    %12 = vector.load %arg5[%c0_11, %c0_12] : memref<1x64xf32, #tpu.memory_space<vmem>>, vector<1x64xf32>
    %13 = arith.mulf %5, %5 : vector<128x64xf32>
    %cst_13 = arith.constant dense<0.000000e+00> : vector<64xf32>
    %14 = vector.multi_reduction <add>, %13, %cst_13 [0] : vector<128x64xf32> to vector<64xf32>
    %15 = vector.shape_cast %14 : vector<64xf32> to vector<1x64xf32>
    %16 = arith.addf %12, %15 : vector<1x64xf32>
    %c0_14 = arith.constant 0 : index
    %c0_15 = arith.constant 0 : index
    %17 = vector.load %arg5[%c0_14, %c0_15] : memref<1x64xf32, #tpu.memory_space<vmem>>, vector<1x64xf32>
    tpu.vector_store %arg5[%c0_14, %c0_15], %16 {strides = array<i32>} : memref<1x64xf32, #tpu.memory_space<vmem>>, vector<1x64xf32>,
    return
  }
  func.func @transform_0(%arg0: i32) -> (i32, i32) {
    %c0_i32 = arith.constant 0 : i32
    %c0_i32_0 = arith.constant 0 : i32
    return %arg0, %c0_i32 : i32, i32
  }
  func.func @transform_1(%arg0: i32) -> (i32, i32) {
    %c0_i32 = arith.constant 0 : i32
    %c0_i32_0 = arith.constant 0 : i32
    %c0_i32_1 = arith.constant 0 : i32
    return %c0_i32, %c0_i32_0 : i32, i32
  }
  func.func @transform_2(%arg0: i32) -> (i32, i32) {
    %c0_i32 = arith.constant 0 : i32
    %c0_i32_0 = arith.constant 0 : i32
    return %arg0, %c0_i32 : i32, i32
  }
  func.func @transform_3(%arg0: i32) -> (i32, i32) {
    %c0_i32 = arith.constant 0 : i32
    %c0_i32_0 = arith.constant 0 : i32
    %c0_i32_1 = arith.constant 0 : i32
    return %c0_i32, %c0_i32_0 : i32, i32
  }
  func.func @transform_4(%arg0: i32) -> (i32, i32) {
    %c0_i32 = arith.constant 0 : i32
    %c0_i32_0 = arith.constant 0 : i32
    %c0_i32_1 = arith.constant 0 : i32
    return %c0_i32, %c0_i32_0 : i32, i32
  }
}

module attributes {stable_mosaic.version = 11 : i64} {
  func.func @_bn_act_kernel(%arg0: i32, %arg1: memref<128x64xf32, #tpu.memory_space<vmem>>, %arg2: memref<1x64xf32, #tpu.memory_space<vmem>>, %arg3: memref<1x64xf32, #tpu.memory_space<vmem>>, %arg4: memref<128x64xbf16, #tpu.memory_space<vmem>>) attributes {dimension_semantics = [#tpu.dimension_semantics<parallel>], iteration_bounds = array<i64: 1>, scalar_prefetch = 0 : i64, scratch_operands = 0 : i64, tpu.core_type = #tpu.core_type<tc>, window_params = [{transform_indices = @transform_0, window_bounds = array<i64: 128, 64>}, {pipeline_mode = #tpu.pipeline_mode<synchronous>, transform_indices = @transform_1, window_bounds = array<i64: 1, 64>}, {pipeline_mode = #tpu.pipeline_mode<synchronous>, transform_indices = @transform_2, window_bounds = array<i64: 1, 64>}, {transform_indices = @transform_3, window_bounds = array<i64: 128, 64>}]} {
    %c0 = arith.constant 0 : index
    %c0_0 = arith.constant 0 : index
    %0 = vector.load %arg1[%c0, %c0_0] : memref<128x64xf32, #tpu.memory_space<vmem>>, vector<128x64xf32>
    %c0_1 = arith.constant 0 : index
    %c0_2 = arith.constant 0 : index
    %1 = vector.load %arg2[%c0_1, %c0_2] : memref<1x64xf32, #tpu.memory_space<vmem>>, vector<1x64xf32>
    %2 = vector.broadcast %1 : vector<1x64xf32> to vector<128x64xf32>
    %3 = arith.mulf %0, %2 : vector<128x64xf32>
    %c0_3 = arith.constant 0 : index
    %c0_4 = arith.constant 0 : index
    %4 = vector.load %arg3[%c0_3, %c0_4] : memref<1x64xf32, #tpu.memory_space<vmem>>, vector<1x64xf32>
    %5 = vector.broadcast %4 : vector<1x64xf32> to vector<128x64xf32>
    %6 = arith.addf %3, %5 : vector<128x64xf32>
    %cst = arith.constant 0.000000e+00 : f32
    %7 = vector.broadcast %cst : f32 to vector<128x64xf32>
    %8 = arith.maximumf %6, %7 : vector<128x64xf32>
    %9 = arith.truncf %8 : vector<128x64xf32> to vector<128x64xbf16>
    %c0_5 = arith.constant 0 : index
    %c0_6 = arith.constant 0 : index
    %10 = vector.load %arg4[%c0_5, %c0_6] : memref<128x64xbf16, #tpu.memory_space<vmem>>, vector<128x64xbf16>
    tpu.vector_store %arg4[%c0_5, %c0_6], %9 {strides = array<i32>} : memref<128x64xbf16, #tpu.memory_space<vmem>>, vector<128x64xbf16>,
    return
  }
  func.func @transform_0(%arg0: i32) -> (i32, i32) {
    %c0_i32 = arith.constant 0 : i32
    %c0_i32_0 = arith.constant 0 : i32
    return %arg0, %c0_i32 : i32, i32
  }
  func.func @transform_1(%arg0: i32) -> (i32, i32) {
    %c0_i32 = arith.constant 0 : i32
    %c0_i32_0 = arith.constant 0 : i32
    %c0_i32_1 = arith.constant 0 : i32
    return %c0_i32, %c0_i32_0 : i32, i32
  }
  func.func @transform_2(%arg0: i32) -> (i32, i32) {
    %c0_i32 = arith.constant 0 : i32
    %c0_i32_0 = arith.constant 0 : i32
    %c0_i32_1 = arith.constant 0 : i32
    return %c0_i32, %c0_i32_0 : i32, i32
  }
  func.func @transform_3(%arg0: i32) -> (i32, i32) {
    %c0_i32 = arith.constant 0 : i32
    %c0_i32_0 = arith.constant 0 : i32
    return %arg0, %c0_i32 : i32, i32
  }
}

module attributes {stable_mosaic.version = 11 : i64} {
  func.func @_matmul_stats_kernel(%arg0: i32, %arg1: memref<512x144xbf16, #tpu.memory_space<vmem>>, %arg2: memref<144x32xbf16, #tpu.memory_space<vmem>>, %arg3: memref<512x32xf32, #tpu.memory_space<vmem>>, %arg4: memref<1x32xf32, #tpu.memory_space<vmem>>, %arg5: memref<1x32xf32, #tpu.memory_space<vmem>>) attributes {dimension_semantics = [#tpu.dimension_semantics<arbitrary>], iteration_bounds = array<i64: 1>, scalar_prefetch = 0 : i64, scratch_operands = 0 : i64, tpu.core_type = #tpu.core_type<tc>, window_params = [{transform_indices = @transform_0, window_bounds = array<i64: 512, 144>}, {pipeline_mode = #tpu.pipeline_mode<synchronous>, transform_indices = @transform_1, window_bounds = array<i64: 144, 32>}, {transform_indices = @transform_2, window_bounds = array<i64: 512, 32>}, {pipeline_mode = #tpu.pipeline_mode<synchronous>, transform_indices = @transform_3, window_bounds = array<i64: 1, 32>}, {pipeline_mode = #tpu.pipeline_mode<synchronous>, transform_indices = @transform_4, window_bounds = array<i64: 1, 32>}]} {
    %c0_i32 = arith.constant 0 : i32
    %0 = arith.cmpi eq, %arg0, %c0_i32 : i32
    %1 = arith.extui %0 : i1 to i32
    %c0_i32_0 = arith.constant 0 : i32
    %2 = arith.cmpi ne, %1, %c0_i32_0 : i32
    scf.if %2 {
      %cst_16 = arith.constant 0.000000e+00 : f32
      %18 = vector.broadcast %cst_16 : f32 to vector<1x32xf32>
      %c0_17 = arith.constant 0 : index
      %c0_18 = arith.constant 0 : index
      %19 = vector.load %arg4[%c0_17, %c0_18] : memref<1x32xf32, #tpu.memory_space<vmem>>, vector<1x32xf32>
      tpu.vector_store %arg4[%c0_17, %c0_18], %18 {strides = array<i32>} : memref<1x32xf32, #tpu.memory_space<vmem>>, vector<1x32xf32>,
      %cst_19 = arith.constant 0.000000e+00 : f32
      %20 = vector.broadcast %cst_19 : f32 to vector<1x32xf32>
      %c0_20 = arith.constant 0 : index
      %c0_21 = arith.constant 0 : index
      %21 = vector.load %arg5[%c0_20, %c0_21] : memref<1x32xf32, #tpu.memory_space<vmem>>, vector<1x32xf32>
      tpu.vector_store %arg5[%c0_20, %c0_21], %20 {strides = array<i32>} : memref<1x32xf32, #tpu.memory_space<vmem>>, vector<1x32xf32>,
    } else {
    }
    %c0 = arith.constant 0 : index
    %c0_1 = arith.constant 0 : index
    %3 = vector.load %arg1[%c0, %c0_1] : memref<512x144xbf16, #tpu.memory_space<vmem>>, vector<512x144xbf16>
    %c0_2 = arith.constant 0 : index
    %c0_3 = arith.constant 0 : index
    %4 = vector.load %arg2[%c0_2, %c0_3] : memref<144x32xbf16, #tpu.memory_space<vmem>>, vector<144x32xbf16>
    %cst = arith.constant dense<0.000000e+00> : vector<512x32xf32>
    %5 = tpu.matmul %3, %4, %cst {dimension_numbers = #tpu.dot_dimension_numbers<[1], [0], [0], [1], [0, 0, 1, 1], [], []>} : vector<512x144xbf16>, vector<144x32xbf16>, vector<512x32xf32> -> vector<512x32xf32>
    %c0_4 = arith.constant 0 : index
    %c0_5 = arith.constant 0 : index
    %6 = vector.load %arg3[%c0_4, %c0_5] : memref<512x32xf32, #tpu.memory_space<vmem>>, vector<512x32xf32>
    tpu.vector_store %arg3[%c0_4, %c0_5], %5 {strides = array<i32>} : memref<512x32xf32, #tpu.memory_space<vmem>>, vector<512x32xf32>,
    %c0_6 = arith.constant 0 : index
    %c0_7 = arith.constant 0 : index
    %7 = vector.load %arg4[%c0_6, %c0_7] : memref<1x32xf32, #tpu.memory_space<vmem>>, vector<1x32xf32>
    %cst_8 = arith.constant dense<0.000000e+00> : vector<32xf32>
    %8 = vector.multi_reduction <add>, %5, %cst_8 [0] : vector<512x32xf32> to vector<32xf32>
    %9 = vector.shape_cast %8 : vector<32xf32> to vector<1x32xf32>
    %10 = arith.addf %7, %9 : vector<1x32xf32>
    %c0_9 = arith.constant 0 : index
    %c0_10 = arith.constant 0 : index
    %11 = vector.load %arg4[%c0_9, %c0_10] : memref<1x32xf32, #tpu.memory_space<vmem>>, vector<1x32xf32>
    tpu.vector_store %arg4[%c0_9, %c0_10], %10 {strides = array<i32>} : memref<1x32xf32, #tpu.memory_space<vmem>>, vector<1x32xf32>,
    %c0_11 = arith.constant 0 : index
    %c0_12 = arith.constant 0 : index
    %12 = vector.load %arg5[%c0_11, %c0_12] : memref<1x32xf32, #tpu.memory_space<vmem>>, vector<1x32xf32>
    %13 = arith.mulf %5, %5 : vector<512x32xf32>
    %cst_13 = arith.constant dense<0.000000e+00> : vector<32xf32>
    %14 = vector.multi_reduction <add>, %13, %cst_13 [0] : vector<512x32xf32> to vector<32xf32>
    %15 = vector.shape_cast %14 : vector<32xf32> to vector<1x32xf32>
    %16 = arith.addf %12, %15 : vector<1x32xf32>
    %c0_14 = arith.constant 0 : index
    %c0_15 = arith.constant 0 : index
    %17 = vector.load %arg5[%c0_14, %c0_15] : memref<1x32xf32, #tpu.memory_space<vmem>>, vector<1x32xf32>
    tpu.vector_store %arg5[%c0_14, %c0_15], %16 {strides = array<i32>} : memref<1x32xf32, #tpu.memory_space<vmem>>, vector<1x32xf32>,
    return
  }
  func.func @transform_0(%arg0: i32) -> (i32, i32) {
    %c0_i32 = arith.constant 0 : i32
    %c0_i32_0 = arith.constant 0 : i32
    return %arg0, %c0_i32 : i32, i32
  }
  func.func @transform_1(%arg0: i32) -> (i32, i32) {
    %c0_i32 = arith.constant 0 : i32
    %c0_i32_0 = arith.constant 0 : i32
    %c0_i32_1 = arith.constant 0 : i32
    return %c0_i32, %c0_i32_0 : i32, i32
  }
  func.func @transform_2(%arg0: i32) -> (i32, i32) {
    %c0_i32 = arith.constant 0 : i32
    %c0_i32_0 = arith.constant 0 : i32
    return %arg0, %c0_i32 : i32, i32
  }
  func.func @transform_3(%arg0: i32) -> (i32, i32) {
    %c0_i32 = arith.constant 0 : i32
    %c0_i32_0 = arith.constant 0 : i32
    %c0_i32_1 = arith.constant 0 : i32
    return %c0_i32, %c0_i32_0 : i32, i32
  }
  func.func @transform_4(%arg0: i32) -> (i32, i32) {
    %c0_i32 = arith.constant 0 : i32
    %c0_i32_0 = arith.constant 0 : i32
    %c0_i32_1 = arith.constant 0 : i32
    return %c0_i32, %c0_i32_0 : i32, i32
  }
}

module attributes {stable_mosaic.version = 11 : i64} {
  func.func @_bn_act_kernel(%arg0: i32, %arg1: memref<512x32xf32, #tpu.memory_space<vmem>>, %arg2: memref<1x32xf32, #tpu.memory_space<vmem>>, %arg3: memref<1x32xf32, #tpu.memory_space<vmem>>, %arg4: memref<512x32xbf16, #tpu.memory_space<vmem>>) attributes {dimension_semantics = [#tpu.dimension_semantics<parallel>], iteration_bounds = array<i64: 1>, scalar_prefetch = 0 : i64, scratch_operands = 0 : i64, tpu.core_type = #tpu.core_type<tc>, window_params = [{transform_indices = @transform_0, window_bounds = array<i64: 512, 32>}, {pipeline_mode = #tpu.pipeline_mode<synchronous>, transform_indices = @transform_1, window_bounds = array<i64: 1, 32>}, {pipeline_mode = #tpu.pipeline_mode<synchronous>, transform_indices = @transform_2, window_bounds = array<i64: 1, 32>}, {transform_indices = @transform_3, window_bounds = array<i64: 512, 32>}]} {
    %c0 = arith.constant 0 : index
    %c0_0 = arith.constant 0 : index
    %0 = vector.load %arg1[%c0, %c0_0] : memref<512x32xf32, #tpu.memory_space<vmem>>, vector<512x32xf32>
    %c0_1 = arith.constant 0 : index
    %c0_2 = arith.constant 0 : index
    %1 = vector.load %arg2[%c0_1, %c0_2] : memref<1x32xf32, #tpu.memory_space<vmem>>, vector<1x32xf32>
    %2 = vector.broadcast %1 : vector<1x32xf32> to vector<512x32xf32>
    %3 = arith.mulf %0, %2 : vector<512x32xf32>
    %c0_3 = arith.constant 0 : index
    %c0_4 = arith.constant 0 : index
    %4 = vector.load %arg3[%c0_3, %c0_4] : memref<1x32xf32, #tpu.memory_space<vmem>>, vector<1x32xf32>
    %5 = vector.broadcast %4 : vector<1x32xf32> to vector<512x32xf32>
    %6 = arith.addf %3, %5 : vector<512x32xf32>
    %cst = arith.constant 0.000000e+00 : f32
    %7 = vector.broadcast %cst : f32 to vector<512x32xf32>
    %8 = arith.maximumf %6, %7 : vector<512x32xf32>
    %9 = arith.truncf %8 : vector<512x32xf32> to vector<512x32xbf16>
    %c0_5 = arith.constant 0 : index
    %c0_6 = arith.constant 0 : index
    %10 = vector.load %arg4[%c0_5, %c0_6] : memref<512x32xbf16, #tpu.memory_space<vmem>>, vector<512x32xbf16>
    tpu.vector_store %arg4[%c0_5, %c0_6], %9 {strides = array<i32>} : memref<512x32xbf16, #tpu.memory_space<vmem>>, vector<512x32xbf16>,
    return
  }
  func.func @transform_0(%arg0: i32) -> (i32, i32) {
    %c0_i32 = arith.constant 0 : i32
    %c0_i32_0 = arith.constant 0 : i32
    return %arg0, %c0_i32 : i32, i32
  }
  func.func @transform_1(%arg0: i32) -> (i32, i32) {
    %c0_i32 = arith.constant 0 : i32
    %c0_i32_0 = arith.constant 0 : i32
    %c0_i32_1 = arith.constant 0 : i32
    return %c0_i32, %c0_i32_0 : i32, i32
  }
  func.func @transform_2(%arg0: i32) -> (i32, i32) {
    %c0_i32 = arith.constant 0 : i32
    %c0_i32_0 = arith.constant 0 : i32
    %c0_i32_1 = arith.constant 0 : i32
    return %c0_i32, %c0_i32_0 : i32, i32
  }
  func.func @transform_3(%arg0: i32) -> (i32, i32) {
    %c0_i32 = arith.constant 0 : i32
    %c0_i32_0 = arith.constant 0 : i32
    return %arg0, %c0_i32 : i32, i32
  }
}

module attributes {stable_mosaic.version = 11 : i64} {
  func.func @_matmul_act_kernel(%arg0: i32, %arg1: memref<1024x72xbf16, #tpu.memory_space<vmem>>, %arg2: memref<72x12xbf16, #tpu.memory_space<vmem>>, %arg3: memref<1024x12xf32, #tpu.memory_space<vmem>>) attributes {dimension_semantics = [#tpu.dimension_semantics<parallel>], iteration_bounds = array<i64: 2>, scalar_prefetch = 0 : i64, scratch_operands = 0 : i64, tpu.core_type = #tpu.core_type<tc>, window_params = [{transform_indices = @transform_0, window_bounds = array<i64: 1024, 72>}, {pipeline_mode = #tpu.pipeline_mode<synchronous>, transform_indices = @transform_1, window_bounds = array<i64: 72, 12>}, {transform_indices = @transform_2, window_bounds = array<i64: 1024, 12>}]} {
    %c0 = arith.constant 0 : index
    %c0_0 = arith.constant 0 : index
    %0 = vector.load %arg1[%c0, %c0_0] : memref<1024x72xbf16, #tpu.memory_space<vmem>>, vector<1024x72xbf16>
    %c0_1 = arith.constant 0 : index
    %c0_2 = arith.constant 0 : index
    %1 = vector.load %arg2[%c0_1, %c0_2] : memref<72x12xbf16, #tpu.memory_space<vmem>>, vector<72x12xbf16>
    %cst = arith.constant dense<0.000000e+00> : vector<1024x12xf32>
    %2 = tpu.matmul %0, %1, %cst {dimension_numbers = #tpu.dot_dimension_numbers<[1], [0], [0], [1], [0, 0, 1, 1], [], []>} : vector<1024x72xbf16>, vector<72x12xbf16>, vector<1024x12xf32> -> vector<1024x12xf32>
    %3 = math.tanh %2 : vector<1024x12xf32>
    %c0_3 = arith.constant 0 : index
    %c0_4 = arith.constant 0 : index
    %4 = vector.load %arg3[%c0_3, %c0_4] : memref<1024x12xf32, #tpu.memory_space<vmem>>, vector<1024x12xf32>
    tpu.vector_store %arg3[%c0_3, %c0_4], %3 {strides = array<i32>} : memref<1024x12xf32, #tpu.memory_space<vmem>>, vector<1024x12xf32>,
    return
  }
  func.func @transform_0(%arg0: i32) -> (i32, i32) {
    %c0_i32 = arith.constant 0 : i32
    %c0_i32_0 = arith.constant 0 : i32
    return %arg0, %c0_i32 : i32, i32
  }
  func.func @transform_1(%arg0: i32) -> (i32, i32) {
    %c0_i32 = arith.constant 0 : i32
    %c0_i32_0 = arith.constant 0 : i32
    %c0_i32_1 = arith.constant 0 : i32
    return %c0_i32, %c0_i32_0 : i32, i32
  }
  func.func @transform_2(%arg0: i32) -> (i32, i32) {
    %c0_i32 = arith.constant 0 : i32
    %c0_i32_0 = arith.constant 0 : i32
    return %arg0, %c0_i32 : i32, i32
  }
}

</mosaic_0001>

<llo_original>
// kernel: generator_forward.9
$region0: #{generator_forward.9}
  #allocation0 [shape = 'u32[]', space=smem, size = 0x4, offset = 0x4, fixed_abs, tag = 'smem constant byte address 0x4 - core index']
  #allocation1 [shape = 'u32[144,128]{1,0:T(1,128)}', space=vmem, size = 0x12000, scoped, tag = 'internal scratch']
  %s0 = inlined_call_operand.vmem [shape: bf16[2,16], index: 0, kind: input, shape index: {}]
  %s1 = inlined_call_operand.vmem [shape: bf16[16,1024], index: 1, kind: input, shape index: {}]
  %s2 = inlined_call_operand.vmem [shape: f32[2,1024], index: 2, kind: output, shape index: {0}]
  %s3 = inlined_call_operand.vmem [shape: f32[1,1024], index: 3, kind: output, shape index: {1}]
  %s4 = inlined_call_operand.vmem [shape: f32[1,1024], index: 4, kind: output, shape index: {2}]
  %5 = xla_tuple %s2, %s3, %s4
  %s6 = sld [smem:[#allocation0]]
  $region38: #{generator_forward.9} parent=0
    _
  %s8 = ssub.s32 1, %s6
  %s9 = scalar_select 0, %s8, %s6
  // Predicated region
  $region2: #{generator_forward.9} parent=0 // pred_check
    _
  $region3: #{generator_forward.9} parent=0 // pred_check_branch
    %11 = sbr.rel (0) target = $region5
  $region4: #{generator_forward.9} parent=0 // pred_region
    _
  $region5: #{generator_forward.9} parent=0 // pred_fallthru
    _
  // Predicated region
  $region6: #{generator_forward.9} parent=0 // pred_check
    _
  $region7: #{generator_forward.9} parent=0 // pred_check_branch
    %13 = sbr.rel (0) target = $region9
  $region8: #{generator_forward.9} parent=0 // pred_region
    _
  $region9: #{generator_forward.9} parent=0 // pred_fallthru
    _
  %p15 = scmp.eq.s32.totalorder 0, 0
  // Predicated region
  $region10: #{generator_forward.9} parent=0 // pred_check
    %p16 = pneg %p15
  $region11: #{generator_forward.9} parent=0 // pred_check_branch
    %18 = sbr.rel (%p16) target = $region13
  $region12: #{generator_forward.9} parent=0 // pred_region
    %19 = vst [vmem:[%s3] sm:$0xff] 0.0
    %20 = vst [vmem:[%s4] sm:$0xff] 0.0
  $region13: #{generator_forward.9} parent=0 // pred_fallthru
    _
  %v21 = vld [vmem:[%s0] sm:$0x1]
  %v22 = vld [vmem:[%s1] sm:$0xff]
  %v23 = vld [vmem:[%s1 + $0x8] sm:$0xff]
  %v24 = vld [vmem:[%s1 + $0x10] sm:$0xff]
  %v25 = vld [vmem:[%s1 + $0x18] sm:$0xff]
  %v26 = vld [vmem:[%s1 + $0x20] sm:$0xff]
  %v27 = vld [vmem:[%s1 + $0x28] sm:$0xff]
  %v28 = vld [vmem:[%s1 + $0x30] sm:$0xff]
  %v29 = vld [vmem:[%s1 + $0x38] sm:$0xff]
  %v38 = vunpack.c.l.b16 %v22
  %v39 = vunpack.c.h.b16 %v22
  %v40 = vunpack.c.l.b16 %v23
  %v41 = vunpack.c.h.b16 %v23
  %v42 = vunpack.c.l.b16 %v24
  %v43 = vunpack.c.h.b16 %v24
  %v44 = vunpack.c.l.b16 %v25
  %v45 = vunpack.c.h.b16 %v25
  %v46 = vunpack.c.l.b16 %v26
  %v47 = vunpack.c.h.b16 %v26
  %v48 = vunpack.c.l.b16 %v27
  %v49 = vunpack.c.h.b16 %v27
  %v50 = vunpack.c.l.b16 %v28
  %v51 = vunpack.c.h.b16 %v28
  %v52 = vunpack.c.l.b16 %v29
  %v53 = vunpack.c.h.b16 %v29
  %v54 = vpack.c.b16 %v46, %v38
  %v55 = vpack.c.b16 %v47, %v39
  %v56 = vpack.c.b16 %v48, %v40
  %v57 = vpack.c.b16 %v49, %v41
  %v58 = vpack.c.b16 %v50, %v42
  %v59 = vpack.c.b16 %v51, %v43
  %v60 = vpack.c.b16 %v52, %v44
  %v61 = vpack.c.b16 %v53, %v45
  %vm70 = vcmask 130048
  %v72 = vsel %vm70, %v21, 0
  %74 = vmatprep.subr.bf16.mxu0 0
  %75 = vmatpush1.bf16.msra.mxu0 0
  %76 = vmatprep.subr.bf16.mxu0 0
  %77 = vmatpush1.bf16.msra.mxu0 0
  %78 = vmatprep.subr.bf16.mxu0 0
  %79 = vmatpush1.bf16.msra.mxu0 0
  %80 = vmatprep.subr.bf16.mxu0 0
  %81 = vmatpush1.bf16.msra.mxu0 0
  %82 = vmatprep.subr.bf16.mxu0 0
  %83 = vmatpush1.bf16.msra.mxu0 0
  %84 = vmatprep.subr.bf16.mxu0 0
  %85 = vmatpush1.bf16.msra.mxu0 0
  %86 = vmatprep.subr.bf16.mxu0 0
  %87 = vmatpush1.bf16.msra.mxu0 0
  %88 = vmatprep.subr.bf16.mxu0 %v55
  %89 = vmatpush1.bf16.msra.mxu0 %v54
  %90 = vmatprep.subr.bf16.mxu0 0
  %91 = vmatpush2.bf16.msra.mxu0 0
  %92 = vmatprep.subr.bf16.mxu0 0
  %93 = vmatpush2.bf16.msra.mxu0 0
  %94 = vmatprep.subr.bf16.mxu0 0
  %95 = vmatpush2.bf16.msra.mxu0 0
  %96 = vmatprep.subr.bf16.mxu0 0
  %97 = vmatpush2.bf16.msra.mxu0 0
  %98 = vmatprep.subr.bf16.mxu0 0
  %99 = vmatpush2.bf16.msra.mxu0 0
  %100 = vmatprep.subr.bf16.mxu0 0
  %101 = vmatpush2.bf16.msra.mxu0 0
  %102 = vmatprep.subr.bf16.mxu0 0
  %103 = vmatpush2.bf16.msra.mxu0 0
  %104 = vmatprep.subr.bf16.mxu0 0
  %105 = vmatpush2.bf16.msra.mxu0 0
  %106 = vmatprep.mubr.bf16.mxu0 0
  %107 = vmatmul.mubr.bf16.gmra.mxu0 %v72
  %v108 = vpop.f32.mrf.mxu0
  %v109 = vadd.f32 0.0, %v108
  %v110 = vpop.f32.mrf.mxu0
  %v111 = vadd.f32 0.0, %v110
  %v112 = vpop.f32.mrf.mxu0
  %v113 = vpop.f32.mrf.mxu0
  %114 = vdwg.mxu0
  %115 = vmatprep.subr.bf16.mxu0 0
  %116 = vmatpush1.bf16.msra.mxu0 0
  %117 = vmatprep.subr.bf16.mxu0 0
  %118 = vmatpush1.bf16.msra.mxu0 0
  %119 = vmatprep.subr.bf16.mxu0 0
  %120 = vmatpush1.bf16.msra.mxu0 0
  %121 = vmatprep.subr.bf16.mxu0 0
  %122 = vmatpush1.bf16.msra.mxu0 0
  %123 = vmatprep.subr.bf16.mxu0 0
  %124 = vmatpush1.bf16.msra.mxu0 0
  %125 = vmatprep.subr.bf16.mxu0 0
  %126 = vmatpush1.bf16.msra.mxu0 0
  %127 = vmatprep.subr.bf16.mxu0 0
  %128 = vmatpush1.bf16.msra.mxu0 0
  %129 = vmatprep.subr.bf16.mxu0 %v57
  %130 = vmatpush1.bf16.msra.mxu0 %v56
  %131 = vmatprep.subr.bf16.mxu0 0
  %132 = vmatpush2.bf16.msra.mxu0 0
  %133 = vmatprep.subr.bf16.mxu0 0
  %134 = vmatpush2.bf16.msra.mxu0 0
  %135 = vmatprep.subr.bf16.mxu0 0
  %136 = vmatpush2.bf16.msra.mxu0 0
  %137 = vmatprep.subr.bf16.mxu0 0
  %138 = vmatpush2.bf16.msra.mxu0 0
  %139 = vmatprep.subr.bf16.mxu0 0
  %140 = vmatpush2.bf16.msra.mxu0 0
  %141 = vmatprep.subr.bf16.mxu0 0
  %142 = vmatpush2.bf16.msra.mxu0 0
  %143 = vmatprep.subr.bf16.mxu0 0
  %144 = vmatpush2.bf16.msra.mxu0 0
  %145 = vmatprep.subr.bf16.mxu0 0
  %146 = vmatpush2.bf16.msra.mxu0 0
  %147 = vmatprep.mubr.bf16.mxu0 0
  %148 = vmatmul.mubr.bf16.gmra.mxu0 %v72
  %v149 = vpop.f32.mrf.mxu0
  %v150 = vadd.f32 0.0, %v149
  %v151 = vpop.f32.mrf.mxu0
  %v152 = vadd.f32 0.0, %v151
  %v153 = vpop.f32.mrf.mxu0
  %v154 = vpop.f32.mrf.mxu0
  %155 = vdwg.mxu0
  %156 = vmatprep.subr.bf16.mxu0 0
  %157 = vmatpush1.bf16.msra.mxu0 0
  %158 = vmatprep.subr.bf16.mxu0 0
  %159 = vmatpush1.bf16.msra.mxu0 0
  %160 = vmatprep.subr.bf16.mxu0 0
  %161 = vmatpush1.bf16.msra.mxu0 0
  %162 = vmatprep.subr.bf16.mxu0 0
  %163 = vmatpush1.bf16.msra.mxu0 0
  %164 = vmatprep.subr.bf16.mxu0 0
  %165 = vmatpush1.bf16.msra.mxu0 0
  %166 = vmatprep.subr.bf16.mxu0 0
  %167 = vmatpush1.bf16.msra.mxu0 0
  %168 = vmatprep.subr.bf16.mxu0 0
  %169 = vmatpush1.bf16.msra.mxu0 0
  %170 = vmatprep.subr.bf16.mxu0 %v59
  %171 = vmatpush1.bf16.msra.mxu0 %v58
  %172 = vmatprep.subr.bf16.mxu0 0
  %173 = vmatpush2.bf16.msra.mxu0 0
  %174 = vmatprep.subr.bf16.mxu0 0
  %175 = vmatpush2.bf16.msra.mxu0 0
  %176 = vmatprep.subr.bf16.mxu0 0
  %177 = vmatpush2.bf16.msra.mxu0 0
  %178 = vmatprep.subr.bf16.mxu0 0
  %179 = vmatpush2.bf16.msra.mxu0 0
  %180 = vmatprep.subr.bf16.mxu0 0
  %181 = vmatpush2.bf16.msra.mxu0 0
  %182 = vmatprep.subr.bf16.mxu0 0
  %183 = vmatpush2.bf16.msra.mxu0 0
  %184 = vmatprep.subr.bf16.mxu0 0
  %185 = vmatpush2.bf16.msra.mxu0 0
  %186 = vmatprep.subr.bf16.mxu0 0
  %187 = vmatpush2.bf16.msra.mxu0 0
  %188 = vmatprep.mubr.bf16.mxu0 0
  %189 = vmatmul.mubr.bf16.gmra.mxu0 %v72
  %v190 = vpop.f32.mrf.mxu0
  %v191 = vadd.f32 0.0, %v190
  %v192 = vpop.f32.mrf.mxu0
  %v193 = vadd.f32 0.0, %v192
  %v194 = vpop.f32.mrf.mxu0
  %v195 = vpop.f32.mrf.mxu0
  %196 = vdwg.mxu0
  %197 = vmatprep.subr.bf16.mxu0 0
  %198 = vmatpush1.bf16.msra.mxu0 0
  %199 = vmatprep.subr.bf16.mxu0 0
  %200 = vmatpush1.bf16.msra.mxu0 0
  %201 = vmatprep.subr.bf16.mxu0 0
  %202 = vmatpush1.bf16.msra.mxu0 0
  %203 = vmatprep.subr.bf16.mxu0 0
  %204 = vmatpush1.bf16.msra.mxu0 0
  %205 = vmatprep.subr.bf16.mxu0 0
  %206 = vmatpush1.bf16.msra.mxu0 0
  %207 = vmatprep.subr.bf16.mxu0 0
  %208 = vmatpush1.bf16.msra.mxu0 0
  %209 = vmatprep.subr.bf16.mxu0 0
  %210 = vmatpush1.bf16.msra.mxu0 0
  %211 = vmatprep.subr.bf16.mxu0 %v61
  %212 = vmatpush1.bf16.msra.mxu0 %v60
  %213 = vmatprep.subr.bf16.mxu0 0
  %214 = vmatpush2.bf16.msra.mxu0 0
  %215 = vmatprep.subr.bf16.mxu0 0
  %216 = vmatpush2.bf16.msra.mxu0 0
  %217 = vmatprep.subr.bf16.mxu0 0
  %218 = vmatpush2.bf16.msra.mxu0 0
  %219 = vmatprep.subr.bf16.mxu0 0
  %220 = vmatpush2.bf16.msra.mxu0 0
  %221 = vmatprep.subr.bf16.mxu0 0
  %222 = vmatpush2.bf16.msra.mxu0 0
  %223 = vmatprep.subr.bf16.mxu0 0
  %224 = vmatpush2.bf16.msra.mxu0 0
  %225 = vmatprep.subr.bf16.mxu0 0
  %226 = vmatpush2.bf16.msra.mxu0 0
  %227 = vmatprep.subr.bf16.mxu0 0
  %228 = vmatpush2.bf16.msra.mxu0 0
  %229 = vmatprep.mubr.bf16.mxu0 0
  %230 = vmatmul.mubr.bf16.gmra.mxu0 %v72
  %v231 = vpop.f32.mrf.mxu0
  %v232 = vadd.f32 0.0, %v231
  %v233 = vpop.f32.mrf.mxu0
  %v234 = vadd.f32 0.0, %v233
  %v235 = vpop.f32.mrf.mxu0
  %v236 = vpop.f32.mrf.mxu0
  %237 = vdwg.mxu0
  %v246 = vcombine.low %v109, %v111
  %v247 = vcombine.low %v150, %v152
  %v249 = vunpack.c.l.s4 1983009808
  %v250 = vunpack.c.0.s8 %v249
  %v251 = vlaneseq
  %v252 = vshrl.u32 %v251, 7
  %v253 = vsub.s32 %v250, %v252
  %v254 = vrot.slane %v246, %v253
  %v256 = vunpack.c.l.s4 1983009808
  %v257 = vunpack.c.0.s8 %v256
  %v258 = vlaneseq
  %v259 = vshrl.u32 %v258, 7
  %v260 = vsub.s32 %v257, %v259
  %v261 = vrot.slane %v247, %v260
  %v262 = vcombine.low %v254, %v261
  %v263 = vcombine.low %v191, %v193
  %v264 = vcombine.low %v232, %v234
  %v266 = vunpack.c.l.s4 1983009808
  %v267 = vunpack.c.0.s8 %v266
  %v268 = vlaneseq
  %v269 = vshrl.u32 %v268, 7
  %v270 = vsub.s32 %v267, %v269
  %v271 = vrot.slane %v263, %v270
  %v273 = vunpack.c.l.s4 1983009808
  %v274 = vunpack.c.0.s8 %v273
  %v275 = vlaneseq
  %v276 = vshrl.u32 %v275, 7
  %v277 = vsub.s32 %v274, %v276
  %v278 = vrot.slane %v264, %v277
  %v279 = vcombine.low %v271, %v278
  %282 = vst [vmem:[%s2] sm:$0xff] %v262
  %283 = vst [vmem:[%s2 + $0x8] sm:$0xff] %v279
  %v284 = vld [vmem:[%s3] sm:$0xff]
  %vm285 = vcmask 1041408
  %v286 = vsel %vm285, %v109, 0.0
  %v287 = vrot.slane %v286, 4
  %v288 = vadd.f32 %v286, %v287
  %v289 = vrot.slane %v288, 2
  %v290 = vadd.f32 %v288, %v289
  %v291 = vrot.slane %v290, 1
  %v292 = vadd.f32 %v290, %v291
  %v293 = vsel %vm285, %v111, 0.0
  %v294 = vrot.slane %v293, 4
  %v295 = vadd.f32 %v293, %v294
  %v296 = vrot.slane %v295, 2
  %v297 = vadd.f32 %v295, %v296
  %v298 = vrot.slane %v297, 1
  %v299 = vadd.f32 %v297, %v298
  %v300 = vsel %vm285, %v150, 0.0
  %v301 = vrot.slane %v300, 4
  %v302 = vadd.f32 %v300, %v301
  %v303 = vrot.slane %v302, 2
  %v304 = vadd.f32 %v302, %v303
  %v305 = vrot.slane %v304, 1
  %v306 = vadd.f32 %v304, %v305
  %v307 = vsel %vm285, %v152, 0.0
  %v308 = vrot.slane %v307, 4
  %v309 = vadd.f32 %v307, %v308
  %v310 = vrot.slane %v309, 2
  %v311 = vadd.f32 %v309, %v310
  %v312 = vrot.slane %v311, 1
  %v313 = vadd.f32 %v311, %v312
  %v314 = vsel %vm285, %v191, 0.0
  %v315 = vrot.slane %v314, 4
  %v316 = vadd.f32 %v314, %v315
  %v317 = vrot.slane %v316, 2
  %v318 = vadd.f32 %v316, %v317
  %v319 = vrot.slane %v318, 1
  %v320 = vadd.f32 %v318, %v319
  %v321 = vsel %vm285, %v193, 0.0
  %v322 = vrot.slane %v321, 4
  %v323 = vadd.f32 %v321, %v322
  %v324 = vrot.slane %v323, 2
  %v325 = vadd.f32 %v323, %v324
  %v326 = vrot.slane %v325, 1
  %v327 = vadd.f32 %v325, %v326
  %v328 = vsel %vm285, %v232, 0.0
  %v329 = vrot.slane %v328, 4
  %v330 = vadd.f32 %v328, %v329
  %v331 = vrot.slane %v330, 2
  %v332 = vadd.f32 %v330, %v331
  %v333 = vrot.slane %v332, 1
  %v334 = vadd.f32 %v332, %v333
  %v335 = vsel %vm285, %v234, 0.0
  %v336 = vrot.slane %v335, 4
  %v337 = vadd.f32 %v335, %v336
  %v338 = vrot.slane %v337, 2
  %v339 = vadd.f32 %v337, %v338
  %v340 = vrot.slane %v339, 1
  %v341 = vadd.f32 %v339, %v340
  %v350 = vcombine.low %v292, %v299
  %v351 = vcombine.low %v306, %v313
  %v352 = vcombine.low %v320, %v327
  %v353 = vcombine.low %v334, %v341
  %v355 = vunpack.c.l.s4 1966171168
  %v356 = vunpack.c.0.s8 %v355
  %v357 = vlaneseq
  %v358 = vshrl.u32 %v357, 7
  %v359 = vsub.s32 %v356, %v358
  %v360 = vrot.slane %v350, %v359
  %v362 = vunpack.c.l.s4 1966171168
  %v363 = vunpack.c.0.s8 %v362
  %v364 = vlaneseq
  %v365 = vshrl.u32 %v364, 7
  %v366 = vsub.s32 %v363, %v365
  %v367 = vrot.slane %v351, %v366
  %v369 = vunpack.c.l.s4 1966171168
  %v370 = vunpack.c.0.s8 %v369
  %v371 = vlaneseq
  %v372 = vshrl.u32 %v371, 7
  %v373 = vsub.s32 %v370, %v372
  %v374 = vrot.slane %v352, %v373
  %v376 = vunpack.c.l.s4 1966171168
  %v377 = vunpack.c.0.s8 %v376
  %v378 = vlaneseq
  %v379 = vshrl.u32 %v378, 7
  %v380 = vsub.s32 %v377, %v379
  %v381 = vrot.slane %v353, %v380
  %v382 = vcombine.low %v360, %v367
  %v383 = vcombine.low %v374, %v381
  %v385 = vunpack.c.l.s4 1966171168
  %v386 = vunpack.c.0.s8 %v385
  %v387 = vlaneseq
  %v388 = vshrl.u32 %v387, 7
  %v389 = vsub.s32 %v386, %v388
  %v390 = vrot.slane %v382, %v389
  %v392 = vunpack.c.l.s4 1966171168
  %v393 = vunpack.c.0.s8 %v392
  %v394 = vlaneseq
  %v395 = vshrl.u32 %v394, 7
  %v396 = vsub.s32 %v393, %v395
  %v397 = vrot.slane %v383, %v396
  %v398 = vcombine.low %v390, %v397
  %v400 = vadd.f32 %v284, %v398
  %401 = vst [vmem:[%s3] sm:$0xff] %v400
  %v402 = vld [vmem:[%s4] sm:$0xff]
  %v403 = vmul.f32 %v109, %v109
  %v404 = vmul.f32 %v111, %v111
  %v405 = vmul.f32 %v150, %v150
  %v406 = vmul.f32 %v152, %v152
  %v407 = vmul.f32 %v191, %v191
  %v408 = vmul.f32 %v193, %v193
  %v409 = vmul.f32 %v232, %v232
  %v410 = vmul.f32 %v234, %v234
  %v411 = vsel %vm285, %v403, 0.0
  %v412 = vrot.slane %v411, 4
  %v413 = vadd.f32 %v411, %v412
  %v414 = vrot.slane %v413, 2
  %v415 = vadd.f32 %v413, %v414
  %v416 = vrot.slane %v415, 1
  %v417 = vadd.f32 %v415, %v416
  %v418 = vsel %vm285, %v404, 0.0
  %v419 = vrot.slane %v418, 4
  %v420 = vadd.f32 %v418, %v419
  %v421 = vrot.slane %v420, 2
  %v422 = vadd.f32 %v420, %v421
  %v423 = vrot.slane %v422, 1
  %v424 = vadd.f32 %v422, %v423
  %v425 = vsel %vm285, %v405, 0.0
  %v426 = vrot.slane %v425, 4
  %v427 = vadd.f32 %v425, %v426
  %v428 = vrot.slane %v427, 2
  %v429 = vadd.f32 %v427, %v428
  %v430 = vrot.slane %v429, 1
  %v431 = vadd.f32 %v429, %v430
  %v432 = vsel %vm285, %v406, 0.0
  %v433 = vrot.slane %v432, 4
  %v434 = vadd.f32 %v432, %v433
  %v435 = vrot.slane %v434, 2
  %v436 = vadd.f32 %v434, %v435
  %v437 = vrot.slane %v436, 1
  %v438 = vadd.f32 %v436, %v437
  %v439 = vsel %vm285, %v407, 0.0
  %v440 = vrot.slane %v439, 4
  %v441 = vadd.f32 %v439, %v440
  %v442 = vrot.slane %v441, 2
  %v443 = vadd.f32 %v441, %v442
  %v444 = vrot.slane %v443, 1
  %v445 = vadd.f32 %v443, %v444
  %v446 = vsel %vm285, %v408, 0.0
  %v447 = vrot.slane %v446, 4
  %v448 = vadd.f32 %v446, %v447
  %v449 = vrot.slane %v448, 2
  %v450 = vadd.f32 %v448, %v449
  %v451 = vrot.slane %v450, 1
  %v452 = vadd.f32 %v450, %v451
  %v453 = vsel %vm285, %v409, 0.0
  %v454 = vrot.slane %v453, 4
  %v455 = vadd.f32 %v453, %v454
  %v456 = vrot.slane %v455, 2
  %v457 = vadd.f32 %v455, %v456
  %v458 = vrot.slane %v457, 1
  %v459 = vadd.f32 %v457, %v458
  %v460 = vsel %vm285, %v410, 0.0
  %v461 = vrot.slane %v460, 4
  %v462 = vadd.f32 %v460, %v461
  %v463 = vrot.slane %v462, 2
  %v464 = vadd.f32 %v462, %v463
  %v465 = vrot.slane %v464, 1
  %v466 = vadd.f32 %v464, %v465
  %v475 = vcombine.low %v417, %v424
  %v476 = vcombine.low %v431, %v438
  %v477 = vcombine.low %v445, %v452
  %v478 = vcombine.low %v459, %v466
  %v480 = vunpack.c.l.s4 1966171168
  %v481 = vunpack.c.0.s8 %v480
  %v482 = vlaneseq
  %v483 = vshrl.u32 %v482, 7
  %v484 = vsub.s32 %v481, %v483
  %v485 = vrot.slane %v475, %v484
  %v487 = vunpack.c.l.s4 1966171168
  %v488 = vunpack.c.0.s8 %v487
  %v489 = vlaneseq
  %v490 = vshrl.u32 %v489, 7
  %v491 = vsub.s32 %v488, %v490
  %v492 = vrot.slane %v476, %v491
  %v494 = vunpack.c.l.s4 1966171168
  %v495 = vunpack.c.0.s8 %v494
  %v496 = vlaneseq
  %v497 = vshrl.u32 %v496, 7
  %v498 = vsub.s32 %v495, %v497
  %v499 = vrot.slane %v477, %v498
  %v501 = vunpack.c.l.s4 1966171168
  %v502 = vunpack.c.0.s8 %v501
  %v503 = vlaneseq
  %v504 = vshrl.u32 %v503, 7
  %v505 = vsub.s32 %v502, %v504
  %v506 = vrot.slane %v478, %v505
  %v507 = vcombine.low %v485, %v492
  %v508 = vcombine.low %v499, %v506
  %v510 = vunpack.c.l.s4 1966171168
  %v511 = vunpack.c.0.s8 %v510
  %v512 = vlaneseq
  %v513 = vshrl.u32 %v512, 7
  %v514 = vsub.s32 %v511, %v513
  %v515 = vrot.slane %v507, %v514
  %v517 = vunpack.c.l.s4 1966171168
  %v518 = vunpack.c.0.s8 %v517
  %v519 = vlaneseq
  %v520 = vshrl.u32 %v519, 7
  %v521 = vsub.s32 %v518, %v520
  %v522 = vrot.slane %v508, %v521
  %v523 = vcombine.low %v515, %v522
  %v525 = vadd.f32 %v402, %v523
  %526 = vst [vmem:[%s4] sm:$0xff] %v525
  // Predicated region
  $region14: #{generator_forward.9} parent=0 // pred_check
    _
  $region15: #{generator_forward.9} parent=0 // pred_check_branch
    %528 = sbr.rel (0) target = $region17
  $region16: #{generator_forward.9} parent=0 // pred_region
    _
  $region17: #{generator_forward.9} parent=0 // pred_fallthru
    _
  // Predicated region
  $region18: #{generator_forward.9} parent=0 // pred_check
    _
  $region19: #{generator_forward.9} parent=0 // pred_check_branch
    %530 = sbr.rel (0) target = $region21
  $region20: #{generator_forward.9} parent=0 // pred_region
    _
  $region21: #{generator_forward.9} parent=0 // pred_fallthru
    _
  // Predicated region
  $region22: #{generator_forward.9} parent=0 // pred_check
    _
  $region23: #{generator_forward.9} parent=0 // pred_check_branch
    %532 = sbr.rel (0) target = $region25
  $region24: #{generator_forward.9} parent=0 // pred_region
    _
  $region25: #{generator_forward.9} parent=0 // pred_fallthru
    _
  // Predicated region
  $region26: #{generator_forward.9} parent=0 // pred_check
    _
  $region27: #{generator_forward.9} parent=0 // pred_check_branch
    %534 = sbr.rel (0) target = $region29
  $region28: #{generator_forward.9} parent=0 // pred_region
    _
  $region29: #{generator_forward.9} parent=0 // pred_fallthru
    _
  // Predicated region
  $region30: #{generator_forward.9} parent=0 // pred_check
    _
  $region31: #{generator_forward.9} parent=0 // pred_check_branch
    %536 = sbr.rel (0) target = $region33
  $region32: #{generator_forward.9} parent=0 // pred_region
    _
  $region33: #{generator_forward.9} parent=0 // pred_fallthru
    _
  // Predicated region
  $region34: #{generator_forward.9} parent=0 // pred_check
    _
  $region35: #{generator_forward.9} parent=0 // pred_check_branch
    %538 = sbr.rel (0) target = $region37
  $region36: #{generator_forward.9} parent=0 // pred_region
    _
  $region37: #{generator_forward.9} parent=0 // pred_fallthru
    _

// kernel: generator_forward.10
$region0: #{generator_forward.10}
  #allocation0 [shape = 'u32[]', space=smem, size = 0x4, offset = 0x4, fixed_abs, tag = 'smem constant byte address 0x4 - core index']
  #allocation1 [shape = 'u32[144,128]{1,0:T(1,128)}', space=vmem, size = 0x12000, scoped, tag = 'internal scratch']
  %s0 = inlined_call_operand.vmem [shape: f32[2,1024], index: 0, kind: input, shape index: {}]
  %s1 = inlined_call_operand.vmem [shape: f32[1,1024], index: 1, kind: input, shape index: {}]
  %s2 = inlined_call_operand.vmem [shape: f32[1,1024], index: 2, kind: input, shape index: {}]
  %s3 = inlined_call_operand.vmem [shape: bf16[2,1024], index: 3, kind: output, shape index: {}]
  %s4 = sld [smem:[#allocation0]]
  $region22: #{generator_forward.10} parent=0
    _
  %s6 = ssub.s32 1, %s4
  %s7 = scalar_select 0, %s6, %s4
  // Predicated region
  $region2: #{generator_forward.10} parent=0 // pred_check
    _
  $region3: #{generator_forward.10} parent=0 // pred_check_branch
    %9 = sbr.rel (0) target = $region5
  $region4: #{generator_forward.10} parent=0 // pred_region
    _
  $region5: #{generator_forward.10} parent=0 // pred_fallthru
    _
  // Predicated region
  $region6: #{generator_forward.10} parent=0 // pred_check
    _
  $region7: #{generator_forward.10} parent=0 // pred_check_branch
    %11 = sbr.rel (0) target = $region9
  $region8: #{generator_forward.10} parent=0 // pred_region
    _
  $region9: #{generator_forward.10} parent=0 // pred_fallthru
    _
  // Predicated region
  $region10: #{generator_forward.10} parent=0 // pred_check
    _
  $region11: #{generator_forward.10} parent=0 // pred_check_branch
    %13 = sbr.rel (0) target = $region13
  $region12: #{generator_forward.10} parent=0 // pred_region
    _
  $region13: #{generator_forward.10} parent=0 // pred_fallthru
    _
  %v14 = vld [vmem:[%s0] sm:$0xff]
  %v15 = vld [vmem:[%s0 + $0x8] sm:$0xff]
  %v16 = vld [vmem:[%s1] sm:$0xff]
  %v18 = vlaneseq
  %v19 = vshrl.u32 %v18, 7
  %v20 = vsub.s32 0, %v19
  %v21 = vrot.slane %v16, %v20
  %v22 = vlaneseq
  %v23 = vshrl.u32 %v22, 7
  %v24 = vsub.s32 1, %v23
  %v25 = vrot.slane %v16, %v24
  %v26 = vlaneseq
  %v27 = vshrl.u32 %v26, 7
  %v28 = vsub.s32 2, %v27
  %v29 = vrot.slane %v16, %v28
  %v30 = vlaneseq
  %v31 = vshrl.u32 %v30, 7
  %v32 = vsub.s32 3, %v31
  %v33 = vrot.slane %v16, %v32
  %v34 = vlaneseq
  %v35 = vshrl.u32 %v34, 7
  %v36 = vsub.s32 4, %v35
  %v37 = vrot.slane %v16, %v36
  %v38 = vlaneseq
  %v39 = vshrl.u32 %v38, 7
  %v40 = vsub.s32 5, %v39
  %v41 = vrot.slane %v16, %v40
  %v42 = vlaneseq
  %v43 = vshrl.u32 %v42, 7
  %v44 = vsub.s32 6, %v43
  %v45 = vrot.slane %v16, %v44
  %v46 = vlaneseq
  %v47 = vshrl.u32 %v46, 7
  %v48 = vsub.s32 7, %v47
  %v49 = vrot.slane %v16, %v48
  %v50 = vcombine.low %v21, %v25
  %v51 = vcombine.low %v29, %v33
  %v53 = vunpack.c.l.s4 1983009808
  %v54 = vunpack.c.0.s8 %v53
  %v55 = vlaneseq
  %v56 = vshrl.u32 %v55, 7
  %v57 = vsub.s32 %v54, %v56
  %v58 = vrot.slane %v50, %v57
  %v60 = vunpack.c.l.s4 1983009808
  %v61 = vunpack.c.0.s8 %v60
  %v62 = vlaneseq
  %v63 = vshrl.u32 %v62, 7
  %v64 = vsub.s32 %v61, %v63
  %v65 = vrot.slane %v51, %v64
  %v66 = vcombine.low %v58, %v65
  %v67 = vcombine.low %v37, %v41
  %v68 = vcombine.low %v45, %v49
  %v70 = vunpack.c.l.s4 1983009808
  %v71 = vunpack.c.0.s8 %v70
  %v72 = vlaneseq
  %v73 = vshrl.u32 %v72, 7
  %v74 = vsub.s32 %v71, %v73
  %v75 = vrot.slane %v67, %v74
  %v77 = vunpack.c.l.s4 1983009808
  %v78 = vunpack.c.0.s8 %v77
  %v79 = vlaneseq
  %v80 = vshrl.u32 %v79, 7
  %v81 = vsub.s32 %v78, %v80
  %v82 = vrot.slane %v68, %v81
  %v83 = vcombine.low %v75, %v82
  %v86 = vmul.f32 %v14, %v66
  %v87 = vmul.f32 %v15, %v83
  %v88 = vld [vmem:[%s2] sm:$0xff]
  %v90 = vlaneseq
  %v91 = vshrl.u32 %v90, 7
  %v92 = vsub.s32 0, %v91
  %v93 = vrot.slane %v88, %v92
  %v94 = vlaneseq
  %v95 = vshrl.u32 %v94, 7
  %v96 = vsub.s32 1, %v95
  %v97 = vrot.slane %v88, %v96
  %v98 = vlaneseq
  %v99 = vshrl.u32 %v98, 7
  %v100 = vsub.s32 2, %v99
  %v101 = vrot.slane %v88, %v100
  %v102 = vlaneseq
  %v103 = vshrl.u32 %v102, 7
  %v104 = vsub.s32 3, %v103
  %v105 = vrot.slane %v88, %v104
  %v106 = vlaneseq
  %v107 = vshrl.u32 %v106, 7
  %v108 = vsub.s32 4, %v107
  %v109 = vrot.slane %v88, %v108
  %v110 = vlaneseq
  %v111 = vshrl.u32 %v110, 7
  %v112 = vsub.s32 5, %v111
  %v113 = vrot.slane %v88, %v112
  %v114 = vlaneseq
  %v115 = vshrl.u32 %v114, 7
  %v116 = vsub.s32 6, %v115
  %v117 = vrot.slane %v88, %v116
  %v118 = vlaneseq
  %v119 = vshrl.u32 %v118, 7
  %v120 = vsub.s32 7, %v119
  %v121 = vrot.slane %v88, %v120
  %v122 = vcombine.low %v93, %v97
  %v123 = vcombine.low %v101, %v105
  %v125 = vunpack.c.l.s4 1983009808
  %v126 = vunpack.c.0.s8 %v125
  %v127 = vlaneseq
  %v128 = vshrl.u32 %v127, 7
  %v129 = vsub.s32 %v126, %v128
  %v130 = vrot.slane %v122, %v129
  %v132 = vunpack.c.l.s4 1983009808
  %v133 = vunpack.c.0.s8 %v132
  %v134 = vlaneseq
  %v135 = vshrl.u32 %v134, 7
  %v136 = vsub.s32 %v133, %v135
  %v137 = vrot.slane %v123, %v136
  %v138 = vcombine.low %v130, %v137
  %v139 = vcombine.low %v109, %v113
  %v140 = vcombine.low %v117, %v121
  %v142 = vunpack.c.l.s4 1983009808
  %v143 = vunpack.c.0.s8 %v142
  %v144 = vlaneseq
  %v145 = vshrl.u32 %v144, 7
  %v146 = vsub.s32 %v143, %v145
  %v147 = vrot.slane %v139, %v146
  %v149 = vunpack.c.l.s4 1983009808
  %v150 = vunpack.c.0.s8 %v149
  %v151 = vlaneseq
  %v152 = vshrl.u32 %v151, 7
  %v153 = vsub.s32 %v150, %v152
  %v154 = vrot.slane %v140, %v153
  %v155 = vcombine.low %v147, %v154
  %v158 = vadd.f32 %v86, %v138
  %v159 = vadd.f32 %v87, %v155
  %v160 = vmax.f32 %v158, 0.0
  %v161 = vmax.f32 %v159, 0.0
  %v164 = vcombine.high %v160, %v160
  %v166 = vunpack.c.l.s4 1983009808
  %v167 = vunpack.c.0.s8 %v166
  %v168 = vlaneseq
  %v169 = vshrl.u32 %v168, 7
  %v170 = vsub.s32 %v167, %v169
  %v171 = vrot.slane %v160, %v170
  %v173 = vunpack.c.l.s4 1983009808
  %v174 = vunpack.c.0.s8 %v173
  %v175 = vlaneseq
  %v176 = vshrl.u32 %v175, 7
  %v177 = vsub.s32 %v174, %v176
  %v178 = vrot.slane %v164, %v177
  %v179 = vcombine.high %v171, %v171
  %v180 = vcombine.high %v178, %v178
  %v181 = vcombine.high %v161, %v161
  %v183 = vunpack.c.l.s4 1983009808
  %v184 = vunpack.c.0.s8 %v183
  %v185 = vlaneseq
  %v186 = vshrl.u32 %v185, 7
  %v187 = vsub.s32 %v184, %v186
  %v188 = vrot.slane %v161, %v187
  %v190 = vunpack.c.l.s4 1983009808
  %v191 = vunpack.c.0.s8 %v190
  %v192 = vlaneseq
  %v193 = vshrl.u32 %v192, 7
  %v194 = vsub.s32 %v191, %v193
  %v195 = vrot.slane %v181, %v194
  %v196 = vcombine.high %v188, %v188
  %v197 = vcombine.high %v195, %v195
  %v206 = vpack.c.bf16 %v171, %v171
  %v207 = vpack.c.bf16 %v179, %v179
  %v208 = vpack.c.bf16 %v178, %v178
  %v209 = vpack.c.bf16 %v180, %v180
  %v210 = vpack.c.bf16 %v188, %v188
  %v211 = vpack.c.bf16 %v196, %v196
  %v212 = vpack.c.bf16 %v195, %v195
  %v213 = vpack.c.bf16 %v197, %v197
  %v222 = vcombine.low %v206, %v207
  %v223 = vcombine.low %v208, %v209
  %v224 = vcombine.low %v210, %v211
  %v225 = vcombine.low %v212, %v213
  %v227 = vunpack.c.l.s4 1966171168
  %v228 = vunpack.c.0.s8 %v227
  %v229 = vlaneseq
  %v230 = vshrl.u32 %v229, 7
  %v231 = vsub.s32 %v228, %v230
  %v232 = vrot.slane %v222, %v231
  %v234 = vunpack.c.l.s4 1966171168
  %v235 = vunpack.c.0.s8 %v234
  %v236 = vlaneseq
  %v237 = vshrl.u32 %v236, 7
  %v238 = vsub.s32 %v235, %v237
  %v239 = vrot.slane %v223, %v238
  %v241 = vunpack.c.l.s4 1966171168
  %v242 = vunpack.c.0.s8 %v241
  %v243 = vlaneseq
  %v244 = vshrl.u32 %v243, 7
  %v245 = vsub.s32 %v242, %v244
  %v246 = vrot.slane %v224, %v245
  %v248 = vunpack.c.l.s4 1966171168
  %v249 = vunpack.c.0.s8 %v248
  %v250 = vlaneseq
  %v251 = vshrl.u32 %v250, 7
  %v252 = vsub.s32 %v249, %v251
  %v253 = vrot.slane %v225, %v252
  %v254 = vcombine.low %v232, %v239
  %v255 = vcombine.low %v246, %v253
  %v257 = vunpack.c.l.s4 1966171168
  %v258 = vunpack.c.0.s8 %v257
  %v259 = vlaneseq
  %v260 = vshrl.u32 %v259, 7
  %v261 = vsub.s32 %v258, %v260
  %v262 = vrot.slane %v254, %v261
  %v264 = vunpack.c.l.s4 1966171168
  %v265 = vunpack.c.0.s8 %v264
  %v266 = vlaneseq
  %v267 = vshrl.u32 %v266, 7
  %v268 = vsub.s32 %v265, %v267
  %v269 = vrot.slane %v255, %v268
  %v270 = vcombine.low %v262, %v269
  %272 = vst [vmem:[%s3] sm:$0xff] %v270
  // Predicated region
  $region14: #{generator_forward.10} parent=0 // pred_check
    _
  $region15: #{generator_forward.10} parent=0 // pred_check_branch
    %274 = sbr.rel (0) target = $region17
  $region16: #{generator_forward.10} parent=0 // pred_region
    _
  $region17: #{generator_forward.10} parent=0 // pred_fallthru
    _
  // Predicated region
  $region18: #{generator_forward.10} parent=0 // pred_check
    _
  $region19: #{generator_forward.10} parent=0 // pred_check_branch
    %276 = sbr.rel (0) target = $region21
  $region20: #{generator_forward.10} parent=0 // pred_region
    _
  $region21: #{generator_forward.10} parent=0 // pred_fallthru
    _

// kernel: generator_forward.12
$region0: #{generator_forward.12}
  #allocation0 [shape = 'u32[]', space=smem, size = 0x4, offset = 0x4, fixed_abs, tag = 'smem constant byte address 0x4 - core index']
  #allocation1 [shape = 'u32[144,128]{1,0:T(1,128)}', space=vmem, size = 0x12000, scoped, tag = 'internal scratch']
  %s0 = inlined_call_operand.vmem [shape: f32[32,128], index: 0, kind: input, shape index: {}]
  %s1 = inlined_call_operand.vmem [shape: f32[1,128], index: 1, kind: input, shape index: {}]
  %s2 = inlined_call_operand.vmem [shape: f32[1,128], index: 2, kind: input, shape index: {}]
  %s3 = inlined_call_operand.vmem [shape: bf16[32,128], index: 3, kind: output, shape index: {}]
  %s4 = sld [smem:[#allocation0]]
  $region22: #{generator_forward.12} parent=0
    _
  %s6 = ssub.s32 1, %s4
  %s7 = scalar_select 0, %s6, %s4
  // Predicated region
  $region2: #{generator_forward.12} parent=0 // pred_check
    _
  $region3: #{generator_forward.12} parent=0 // pred_check_branch
    %9 = sbr.rel (0) target = $region5
  $region4: #{generator_forward.12} parent=0 // pred_region
    _
  $region5: #{generator_forward.12} parent=0 // pred_fallthru
    _
  // Predicated region
  $region6: #{generator_forward.12} parent=0 // pred_check
    _
  $region7: #{generator_forward.12} parent=0 // pred_check_branch
    %11 = sbr.rel (0) target = $region9
  $region8: #{generator_forward.12} parent=0 // pred_region
    _
  $region9: #{generator_forward.12} parent=0 // pred_fallthru
    _
  // Predicated region
  $region10: #{generator_forward.12} parent=0 // pred_check
    _
  $region11: #{generator_forward.12} parent=0 // pred_check_branch
    %13 = sbr.rel (0) target = $region13
  $region12: #{generator_forward.12} parent=0 // pred_region
    _
  $region13: #{generator_forward.12} parent=0 // pred_fallthru
    _
  %v14 = vld [vmem:[%s0] sm:$0xff]
  %v15 = vld [vmem:[%s0 + $0x8] sm:$0xff]
  %v16 = vld [vmem:[%s0 + $0x10] sm:$0xff]
  %v17 = vld [vmem:[%s0 + $0x18] sm:$0xff]
  %v18 = vld [vmem:[%s1] sm:$0x1]
  %v20 = vlaneseq
  %v21 = vshrl.u32 %v20, 7
  %v22 = vsub.s32 0, %v21
  %v23 = vrot.slane %v18, %v22
  %v25 = vmul.f32 %v14, %v23
  %v26 = vmul.f32 %v15, %v23
  %v27 = vmul.f32 %v16, %v23
  %v28 = vmul.f32 %v17, %v23
  %v29 = vld [vmem:[%s2] sm:$0x1]
  %v31 = vlaneseq
  %v32 = vshrl.u32 %v31, 7
  %v33 = vsub.s32 0, %v32
  %v34 = vrot.slane %v29, %v33
  %v36 = vadd.f32 %v25, %v34
  %v37 = vadd.f32 %v26, %v34
  %v38 = vadd.f32 %v27, %v34
  %v39 = vadd.f32 %v28, %v34
  %v40 = vmax.f32 %v36, 0.0
  %v41 = vmax.f32 %v37, 0.0
  %v42 = vmax.f32 %v38, 0.0
  %v43 = vmax.f32 %v39, 0.0
  %v44 = vpack.c.bf16 %v41, %v40
  %v45 = vpack.c.bf16 %v43, %v42
  %v48 = vunpack.c.l.b16 %v44
  %v49 = vunpack.c.h.b16 %v44
  %v50 = vunpack.c.l.b16 %v45
  %v51 = vunpack.c.h.b16 %v45
  %v52 = vpack.c.b16 %v48, %v48
  %v53 = vpack.c.b16 %v49, %v49
  %v54 = vpack.c.b16 %v50, %v50
  %v55 = vpack.c.b16 %v51, %v51
  %60 = vst [vmem:[%s3] sm:$0xf] %v52
  %61 = vst [vmem:[%s3 + $0x4] sm:$0xf] %v53
  %62 = vst [vmem:[%s3 + $0x8] sm:$0xf] %v54
  %63 = vst [vmem:[%s3 + $0xc] sm:$0xf] %v55
  // Predicated region
  $region14: #{generator_forward.12} parent=0 // pred_check
    _
  $region15: #{generator_forward.12} parent=0 // pred_check_branch
    %65 = sbr.rel (0) target = $region17
  $region16: #{generator_forward.12} parent=0 // pred_region
    _
  $region17: #{generator_forward.12} parent=0 // pred_fallthru
    _
  // Predicated region
  $region18: #{generator_forward.12} parent=0 // pred_check
    _
  $region19: #{generator_forward.12} parent=0 // pred_check_branch
    %67 = sbr.rel (0) target = $region21
  $region20: #{generator_forward.12} parent=0 // pred_region
    _
  $region21: #{generator_forward.12} parent=0 // pred_fallthru
    _

// kernel: generator_forward.11
$region0: #{generator_forward.11}
  #allocation0 [shape = 'u32[]', space=smem, size = 0x4, offset = 0x4, fixed_abs, tag = 'smem constant byte address 0x4 - core index']
  #allocation1 [shape = 'u32[144,128]{1,0:T(1,128)}', space=vmem, size = 0x12000, scoped, tag = 'internal scratch']
  %s0 = inlined_call_operand.vmem [shape: bf16[32,576], index: 0, kind: input, shape index: {}]
  %s1 = inlined_call_operand.vmem [shape: bf16[576,128], index: 1, kind: input, shape index: {}]
  %s2 = inlined_call_operand.vmem [shape: f32[32,128], index: 2, kind: output, shape index: {0}]
  %s3 = inlined_call_operand.vmem [shape: f32[1,128], index: 3, kind: output, shape index: {1}]
  %s4 = inlined_call_operand.vmem [shape: f32[1,128], index: 4, kind: output, shape index: {2}]
  %5 = xla_tuple %s2, %s3, %s4
  %s6 = sld [smem:[#allocation0]]
  $region38: #{generator_forward.11} parent=0
    _
  %s8 = ssub.s32 1, %s6
  %s9 = scalar_select 0, %s8, %s6
  // Predicated region
  $region2: #{generator_forward.11} parent=0 // pred_check
    _
  $region3: #{generator_forward.11} parent=0 // pred_check_branch
    %11 = sbr.rel (0) target = $region5
  $region4: #{generator_forward.11} parent=0 // pred_region
    _
  $region5: #{generator_forward.11} parent=0 // pred_fallthru
    _
  // Predicated region
  $region6: #{generator_forward.11} parent=0 // pred_check
    _
  $region7: #{generator_forward.11} parent=0 // pred_check_branch
    %13 = sbr.rel (0) target = $region9
  $region8: #{generator_forward.11} parent=0 // pred_region
    _
  $region9: #{generator_forward.11} parent=0 // pred_fallthru
    _
  %p15 = scmp.eq.s32.totalorder 0, 0
  // Predicated region
  $region10: #{generator_forward.11} parent=0 // pred_check
    %p16 = pneg %p15
  $region11: #{generator_forward.11} parent=0 // pred_check_branch
    %18 = sbr.rel (%p16) target = $region13
  $region12: #{generator_forward.11} parent=0 // pred_region
    %19 = vst [vmem:[%s3] sm:$0x1] 0.0
    %20 = vst [vmem:[%s4] sm:$0x1] 0.0
  $region13: #{generator_forward.11} parent=0 // pred_fallthru
    _
  %v21 = vld [vmem:[%s0] sm:$0xff]
  %v22 = vld [vmem:[%s0 + $0x8] sm:$0xff]
  %v23 = vld [vmem:[%s0 + $0x10] sm:$0xf]
  %v24 = vld [vmem:[%s0 + $0x14] sm:$0xff]
  %v25 = vld [vmem:[%s0 + $0x1c] sm:$0xff]
  %v26 = vld [vmem:[%s0 + $0x24] sm:$0xf]
  %v27 = vld [vmem:[%s0 + $0x28] sm:$0xff]
  %v28 = vld [vmem:[%s0 + $0x30] sm:$0xff]
  %v29 = vld [vmem:[%s0 + $0x38] sm:$0xf]
  %v30 = vld [vmem:[%s0 + $0x3c] sm:$0xff]
  %v31 = vld [vmem:[%s0 + $0x44] sm:$0xff]
  %v32 = vld [vmem:[%s0 + $0x4c] sm:$0xf]
  %v33 = vld [vmem:[%s1] sm:$0xf]
  %v34 = vld [vmem:[%s1 + $0x4] sm:$0xf]
  %v35 = vld [vmem:[%s1 + $0x8] sm:$0xf]
  %v36 = vld [vmem:[%s1 + $0xc] sm:$0xf]
  %v37 = vld [vmem:[%s1 + $0x10] sm:$0xf]
  %v38 = vld [vmem:[%s1 + $0x14] sm:$0xf]
  %v39 = vld [vmem:[%s1 + $0x18] sm:$0xf]
  %v40 = vld [vmem:[%s1 + $0x1c] sm:$0xf]
  %v41 = vld [vmem:[%s1 + $0x20] sm:$0xf]
  %v42 = vld [vmem:[%s1 + $0x24] sm:$0xf]
  %v43 = vld [vmem:[%s1 + $0x28] sm:$0xf]
  %v44 = vld [vmem:[%s1 + $0x2c] sm:$0xf]
  %v45 = vld [vmem:[%s1 + $0x30] sm:$0xf]
  %v46 = vld [vmem:[%s1 + $0x34] sm:$0xf]
  %v47 = vld [vmem:[%s1 + $0x38] sm:$0xf]
  %v48 = vld [vmem:[%s1 + $0x3c] sm:$0xf]
  %v49 = vld [vmem:[%s1 + $0x40] sm:$0xf]
  %v50 = vld [vmem:[%s1 + $0x44] sm:$0xf]
  %v51 = vld [vmem:[%s1 + $0x48] sm:$0xf]
  %v52 = vld [vmem:[%s1 + $0x4c] sm:$0xf]
  %v53 = vld [vmem:[%s1 + $0x50] sm:$0xf]
  %v54 = vld [vmem:[%s1 + $0x54] sm:$0xf]
  %v55 = vld [vmem:[%s1 + $0x58] sm:$0xf]
  %v56 = vld [vmem:[%s1 + $0x5c] sm:$0xf]
  %v57 = vld [vmem:[%s1 + $0x60] sm:$0xf]
  %v58 = vld [vmem:[%s1 + $0x64] sm:$0xf]
  %v59 = vld [vmem:[%s1 + $0x68] sm:$0xf]
  %v60 = vld [vmem:[%s1 + $0x6c] sm:$0xf]
  %v61 = vld [vmem:[%s1 + $0x70] sm:$0xf]
  %v62 = vld [vmem:[%s1 + $0x74] sm:$0xf]
  %v63 = vld [vmem:[%s1 + $0x78] sm:$0xf]
  %v64 = vld [vmem:[%s1 + $0x7c] sm:$0xf]
  %v65 = vld [vmem:[%s1 + $0x80] sm:$0xf]
  %v66 = vld [vmem:[%s1 + $0x84] sm:$0xf]
  %v67 = vld [vmem:[%s1 + $0x88] sm:$0xf]
  %v68 = vld [vmem:[%s1 + $0x8c] sm:$0xf]
  %v69 = vld [vmem:[%s1 + $0x90] sm:$0xf]
  %v70 = vld [vmem:[%s1 + $0x94] sm:$0xf]
  %v71 = vld [vmem:[%s1 + $0x98] sm:$0xf]
  %v72 = vld [vmem:[%s1 + $0x9c] sm:$0xf]
  %v73 = vld [vmem:[%s1 + $0xa0] sm:$0xf]
  %v74 = vld [vmem:[%s1 + $0xa4] sm:$0xf]
  %v75 = vld [vmem:[%s1 + $0xa8] sm:$0xf]
  %v76 = vld [vmem:[%s1 + $0xac] sm:$0xf]
  %v77 = vld [vmem:[%s1 + $0xb0] sm:$0xf]
  %v78 = vld [vmem:[%s1 + $0xb4] sm:$0xf]
  %v79 = vld [vmem:[%s1 + $0xb8] sm:$0xf]
  %v80 = vld [vmem:[%s1 + $0xbc] sm:$0xf]
  %v81 = vld [vmem:[%s1 + $0xc0] sm:$0xf]
  %v82 = vld [vmem:[%s1 + $0xc4] sm:$0xf]
  %v83 = vld [vmem:[%s1 + $0xc8] sm:$0xf]
  %v84 = vld [vmem:[%s1 + $0xcc] sm:$0xf]
  %v85 = vld [vmem:[%s1 + $0xd0] sm:$0xf]
  %v86 = vld [vmem:[%s1 + $0xd4] sm:$0xf]
  %v87 = vld [vmem:[%s1 + $0xd8] sm:$0xf]
  %v88 = vld [vmem:[%s1 + $0xdc] sm:$0xf]
  %v89 = vld [vmem:[%s1 + $0xe0] sm:$0xf]
  %v90 = vld [vmem:[%s1 + $0xe4] sm:$0xf]
  %v91 = vld [vmem:[%s1 + $0xe8] sm:$0xf]
  %v92 = vld [vmem:[%s1 + $0xec] sm:$0xf]
  %v93 = vld [vmem:[%s1 + $0xf0] sm:$0xf]
  %v94 = vld [vmem:[%s1 + $0xf4] sm:$0xf]
  %v95 = vld [vmem:[%s1 + $0xf8] sm:$0xf]
  %v96 = vld [vmem:[%s1 + $0xfc] sm:$0xf]
  %v97 = vld [vmem:[%s1 + $0x100] sm:$0xf]
  %v98 = vld [vmem:[%s1 + $0x104] sm:$0xf]
  %v99 = vld [vmem:[%s1 + $0x108] sm:$0xf]
  %v100 = vld [vmem:[%s1 + $0x10c] sm:$0xf]
  %v101 = vld [vmem:[%s1 + $0x110] sm:$0xf]
  %v102 = vld [vmem:[%s1 + $0x114] sm:$0xf]
  %v103 = vld [vmem:[%s1 + $0x118] sm:$0xf]
  %v104 = vld [vmem:[%s1 + $0x11c] sm:$0xf]
  %v117 = vunpack.c.l.b16 %v21
  %v118 = vunpack.c.h.b16 %v21
  %v119 = vunpack.c.l.b16 %v22
  %v120 = vunpack.c.h.b16 %v22
  %v121 = vunpack.c.l.b16 %v23
  %v122 = vunpack.c.l.b16 %v24
  %v123 = vunpack.c.h.b16 %v24
  %v124 = vunpack.c.l.b16 %v25
  %v125 = vunpack.c.h.b16 %v25
  %v126 = vunpack.c.l.b16 %v26
  %v127 = vunpack.c.l.b16 %v27
  %v128 = vunpack.c.h.b16 %v27
  %v129 = vunpack.c.l.b16 %v28
  %v130 = vunpack.c.h.b16 %v28
  %v131 = vunpack.c.l.b16 %v29
  %v132 = vunpack.c.l.b16 %v30
  %v133 = vunpack.c.h.b16 %v30
  %v134 = vunpack.c.l.b16 %v31
  %v135 = vunpack.c.h.b16 %v31
  %v136 = vunpack.c.l.b16 %v32
  %v137 = vpack.c.b16 %v122, %v117
  %v138 = vpack.c.b16 %v123, %v118
  %v139 = vpack.c.b16 %v124, %v119
  %v140 = vpack.c.b16 %v125, %v120
  %v141 = vpack.c.b16 %v126, %v121
  %v142 = vpack.c.b16 %v132, %v127
  %v143 = vpack.c.b16 %v133, %v128
  %v144 = vpack.c.b16 %v134, %v129
  %v145 = vpack.c.b16 %v135, %v130
  %v146 = vpack.c.b16 %v136, %v131
  %v227 = vunpack.c.l.b16 %v33
  %v228 = vunpack.c.l.b16 %v34
  %v229 = vunpack.c.l.b16 %v35
  %v230 = vunpack.c.l.b16 %v36
  %v231 = vunpack.c.l.b16 %v37
  %v232 = vunpack.c.l.b16 %v38
  %v233 = vunpack.c.l.b16 %v39
  %v234 = vunpack.c.l.b16 %v40
  %v235 = vunpack.c.l.b16 %v41
  %v236 = vunpack.c.l.b16 %v42
  %v237 = vunpack.c.l.b16 %v43
  %v238 = vunpack.c.l.b16 %v44
  %v239 = vunpack.c.l.b16 %v45
  %v240 = vunpack.c.l.b16 %v46
  %v241 = vunpack.c.l.b16 %v47
  %v242 = vunpack.c.l.b16 %v48
  %v243 = vunpack.c.l.b16 %v49
  %v244 = vunpack.c.l.b16 %v50
  %v245 = vunpack.c.l.b16 %v51
  %v246 = vunpack.c.l.b16 %v52
  %v247 = vunpack.c.l.b16 %v53
  %v248 = vunpack.c.l.b16 %v54
  %v249 = vunpack.c.l.b16 %v55
  %v250 = vunpack.c.l.b16 %v56
  %v251 = vunpack.c.l.b16 %v57
  %v252 = vunpack.c.l.b16 %v58
  %v253 = vunpack.c.l.b16 %v59
  %v254 = vunpack.c.l.b16 %v60
  %v255 = vunpack.c.l.b16 %v61
  %v256 = vunpack.c.l.b16 %v62
  %v257 = vunpack.c.l.b16 %v63
  %v258 = vunpack.c.l.b16 %v64
  %v259 = vunpack.c.l.b16 %v65
  %v260 = vunpack.c.l.b16 %v66
  %v261 = vunpack.c.l.b16 %v67
  %v262 = vunpack.c.l.b16 %v68
  %v263 = vunpack.c.l.b16 %v69
  %v264 = vunpack.c.l.b16 %v70
  %v265 = vunpack.c.l.b16 %v71
  %v266 = vunpack.c.l.b16 %v72
  %v267 = vunpack.c.l.b16 %v73
  %v268 = vunpack.c.l.b16 %v74
  %v269 = vunpack.c.l.b16 %v75
  %v270 = vunpack.c.l.b16 %v76
  %v271 = vunpack.c.l.b16 %v77
  %v272 = vunpack.c.l.b16 %v78
  %v273 = vunpack.c.l.b16 %v79
  %v274 = vunpack.c.l.b16 %v80
  %v275 = vunpack.c.l.b16 %v81
  %v276 = vunpack.c.l.b16 %v82
  %v277 = vunpack.c.l.b16 %v83
  %v278 = vunpack.c.l.b16 %v84
  %v279 = vunpack.c.l.b16 %v85
  %v280 = vunpack.c.l.b16 %v86
  %v281 = vunpack.c.l.b16 %v87
  %v282 = vunpack.c.l.b16 %v88
  %v283 = vunpack.c.l.b16 %v89
  %v284 = vunpack.c.l.b16 %v90
  %v285 = vunpack.c.l.b16 %v91
  %v286 = vunpack.c.l.b16 %v92
  %v287 = vunpack.c.l.b16 %v93
  %v288 = vunpack.c.l.b16 %v94
  %v289 = vunpack.c.l.b16 %v95
  %v290 = vunpack.c.l.b16 %v96
  %v291 = vunpack.c.l.b16 %v97
  %v292 = vunpack.c.l.b16 %v98
  %v293 = vunpack.c.l.b16 %v99
  %v294 = vunpack.c.l.b16 %v100
  %v295 = vunpack.c.l.b16 %v101
  %v296 = vunpack.c.l.b16 %v102
  %v297 = vunpack.c.l.b16 %v103
  %v298 = vunpack.c.l.b16 %v104
  %v299 = vpack.c.b16 %v228, %v227
  %v300 = vpack.c.b16 %v230, %v229
  %v301 = vpack.c.b16 %v232, %v231
  %v302 = vpack.c.b16 %v234, %v233
  %v303 = vpack.c.b16 %v236, %v235
  %v304 = vpack.c.b16 %v238, %v237
  %v305 = vpack.c.b16 %v240, %v239
  %v306 = vpack.c.b16 %v242, %v241
  %v307 = vpack.c.b16 %v244, %v243
  %v308 = vpack.c.b16 %v246, %v245
  %v309 = vpack.c.b16 %v248, %v247
  %v310 = vpack.c.b16 %v250, %v249
  %v311 = vpack.c.b16 %v252, %v251
  %v312 = vpack.c.b16 %v254, %v253
  %v313 = vpack.c.b16 %v256, %v255
  %v314 = vpack.c.b16 %v258, %v257
  %v315 = vpack.c.b16 %v260, %v259
  %v316 = vpack.c.b16 %v262, %v261
  %v317 = vpack.c.b16 %v264, %v263
  %v318 = vpack.c.b16 %v266, %v265
  %v319 = vpack.c.b16 %v268, %v267
  %v320 = vpack.c.b16 %v270, %v269
  %v321 = vpack.c.b16 %v272, %v271
  %v322 = vpack.c.b16 %v274, %v273
  %v323 = vpack.c.b16 %v276, %v275
  %v324 = vpack.c.b16 %v278, %v277
  %v325 = vpack.c.b16 %v280, %v279
  %v326 = vpack.c.b16 %v282, %v281
  %v327 = vpack.c.b16 %v284, %v283
  %v328 = vpack.c.b16 %v286, %v285
  %v329 = vpack.c.b16 %v288, %v287
  %v330 = vpack.c.b16 %v290, %v289
  %v331 = vpack.c.b16 %v292, %v291
  %v332 = vpack.c.b16 %v294, %v293
  %v333 = vpack.c.b16 %v296, %v295
  %v334 = vpack.c.b16 %v298, %v297
  %vm371 = vcmask 523264
  %v373 = vsel %vm371, %v141, 0
  %v376 = vsel %vm371, %v146, 0
  %378 = vmatprep.subr.bf16.mxu0 0
  %379 = vmatpush1.bf16.msra.mxu0 %v306
  %380 = vmatprep.subr.bf16.mxu0 0
  %381 = vmatpush1.bf16.msra.mxu0 %v305
  %382 = vmatprep.subr.bf16.mxu0 0
  %383 = vmatpush1.bf16.msra.mxu0 %v304
  %384 = vmatprep.subr.bf16.mxu0 0
  %385 = vmatpush1.bf16.msra.mxu0 %v303
  %386 = vmatprep.subr.bf16.mxu0 0
  %387 = vmatpush1.bf16.msra.mxu0 %v302
  %388 = vmatprep.subr.bf16.mxu0 0
  %389 = vmatpush1.bf16.msra.mxu0 %v301
  %390 = vmatprep.subr.bf16.mxu0 0
  %391 = vmatpush1.bf16.msra.mxu0 %v300
  %392 = vmatprep.subr.bf16.mxu0 0
  %393 = vmatpush1.bf16.msra.mxu0 %v299
  %394 = vmatprep.subr.bf16.mxu0 0
  %395 = vmatpush2.bf16.msra.mxu0 %v314
  %396 = vmatprep.subr.bf16.mxu0 0
  %397 = vmatpush2.bf16.msra.mxu0 %v313
  %398 = vmatprep.subr.bf16.mxu0 0
  %399 = vmatpush2.bf16.msra.mxu0 %v312
  %400 = vmatprep.subr.bf16.mxu0 0
  %401 = vmatpush2.bf16.msra.mxu0 %v311
  %402 = vmatprep.subr.bf16.mxu0 0
  %403 = vmatpush2.bf16.msra.mxu0 %v310
  %404 = vmatprep.subr.bf16.mxu0 0
  %405 = vmatpush2.bf16.msra.mxu0 %v309
  %406 = vmatprep.subr.bf16.mxu0 0
  %407 = vmatpush2.bf16.msra.mxu0 %v308
  %408 = vmatprep.subr.bf16.mxu0 0
  %409 = vmatpush2.bf16.msra.mxu0 %v307
  %410 = vmatprep.mubr.bf16.mxu0 %v138
  %411 = vmatmul.mubr.bf16.gmra.mxu0 %v137
  %v412 = vpop.f32.mrf.mxu0
  %v413 = vadd.f32 0.0, %v412
  %v414 = vpop.f32.mrf.mxu0
  %v415 = vpop.f32.mrf.mxu0
  %v416 = vadd.f32 0.0, %v415
  %v417 = vpop.f32.mrf.mxu0
  %418 = vmatprep.mubr.bf16.mxu0 %v143
  %419 = vmatmul.mubr.bf16.gmra.mxu0 %v142
  %v420 = vpop.f32.mrf.mxu0
  %v421 = vadd.f32 0.0, %v420
  %v422 = vpop.f32.mrf.mxu0
  %v423 = vpop.f32.mrf.mxu0
  %v424 = vadd.f32 0.0, %v423
  %v425 = vpop.f32.mrf.mxu0
  %426 = vdwg.mxu0
  %427 = vmatprep.subr.bf16.mxu0 0
  %428 = vmatpush1.bf16.msra.mxu0 %v322
  %429 = vmatprep.subr.bf16.mxu0 0
  %430 = vmatpush1.bf16.msra.mxu0 %v321
  %431 = vmatprep.subr.bf16.mxu0 0
  %432 = vmatpush1.bf16.msra.mxu0 %v320
  %433 = vmatprep.subr.bf16.mxu0 0
  %434 = vmatpush1.bf16.msra.mxu0 %v319
  %435 = vmatprep.subr.bf16.mxu0 0
  %436 = vmatpush1.bf16.msra.mxu0 %v318
  %437 = vmatprep.subr.bf16.mxu0 0
  %438 = vmatpush1.bf16.msra.mxu0 %v317
  %439 = vmatprep.subr.bf16.mxu0 0
  %440 = vmatpush1.bf16.msra.mxu0 %v316
  %441 = vmatprep.subr.bf16.mxu0 0
  %442 = vmatpush1.bf16.msra.mxu0 %v315
  %443 = vmatprep.subr.bf16.mxu0 0
  %444 = vmatpush2.bf16.msra.mxu0 %v330
  %445 = vmatprep.subr.bf16.mxu0 0
  %446 = vmatpush2.bf16.msra.mxu0 %v329
  %447 = vmatprep.subr.bf16.mxu0 0
  %448 = vmatpush2.bf16.msra.mxu0 %v328
  %449 = vmatprep.subr.bf16.mxu0 0
  %450 = vmatpush2.bf16.msra.mxu0 %v327
  %451 = vmatprep.subr.bf16.mxu0 0
  %452 = vmatpush2.bf16.msra.mxu0 %v326
  %453 = vmatprep.subr.bf16.mxu0 0
  %454 = vmatpush2.bf16.msra.mxu0 %v325
  %455 = vmatprep.subr.bf16.mxu0 0
  %456 = vmatpush2.bf16.msra.mxu0 %v324
  %457 = vmatprep.subr.bf16.mxu0 0
  %458 = vmatpush2.bf16.msra.mxu0 %v323
  %459 = vmatprep.mubr.bf16.mxu0 %v140
  %460 = vmatmul.mubr.bf16.gmra.mxu0 %v139
  %v461 = vpop.f32.mrf.mxu0
  %v462 = vadd.f32 %v413, %v461
  %v463 = vpop.f32.mrf.mxu0
  %v464 = vpop.f32.mrf.mxu0
  %v465 = vadd.f32 %v416, %v464
  %v466 = vpop.f32.mrf.mxu0
  %467 = vmatprep.mubr.bf16.mxu0 %v145
  %468 = vmatmul.mubr.bf16.gmra.mxu0 %v144
  %v469 = vpop.f32.mrf.mxu0
  %v470 = vadd.f32 %v421, %v469
  %v471 = vpop.f32.mrf.mxu0
  %v472 = vpop.f32.mrf.mxu0
  %v473 = vadd.f32 %v424, %v472
  %v474 = vpop.f32.mrf.mxu0
  %475 = vdwg.mxu0
  %476 = vmatprep.subr.bf16.mxu0 0
  %477 = vmatpush1.bf16.msra.mxu0 0
  %478 = vmatprep.subr.bf16.mxu0 0
  %479 = vmatpush1.bf16.msra.mxu0 0
  %480 = vmatprep.subr.bf16.mxu0 0
  %481 = vmatpush1.bf16.msra.mxu0 0
  %482 = vmatprep.subr.bf16.mxu0 0
  %483 = vmatpush1.bf16.msra.mxu0 0
  %484 = vmatprep.subr.bf16.mxu0 0
  %485 = vmatpush1.bf16.msra.mxu0 %v334
  %486 = vmatprep.subr.bf16.mxu0 0
  %487 = vmatpush1.bf16.msra.mxu0 %v333
  %488 = vmatprep.subr.bf16.mxu0 0
  %489 = vmatpush1.bf16.msra.mxu0 %v332
  %490 = vmatprep.subr.bf16.mxu0 0
  %491 = vmatpush1.bf16.msra.mxu0 %v331
  %492 = vmatprep.subr.bf16.mxu0 0
  %493 = vmatpush2.bf16.msra.mxu0 0
  %494 = vmatprep.subr.bf16.mxu0 0
  %495 = vmatpush2.bf16.msra.mxu0 0
  %496 = vmatprep.subr.bf16.mxu0 0
  %497 = vmatpush2.bf16.msra.mxu0 0
  %498 = vmatprep.subr.bf16.mxu0 0
  %499 = vmatpush2.bf16.msra.mxu0 0
  %500 = vmatprep.subr.bf16.mxu0 0
  %501 = vmatpush2.bf16.msra.mxu0 0
  %502 = vmatprep.subr.bf16.mxu0 0
  %503 = vmatpush2.bf16.msra.mxu0 0
  %504 = vmatprep.subr.bf16.mxu0 0
  %505 = vmatpush2.bf16.msra.mxu0 0
  %506 = vmatprep.subr.bf16.mxu0 0
  %507 = vmatpush2.bf16.msra.mxu0 0
  %508 = vmatprep.mubr.bf16.mxu0 0
  %509 = vmatmul.mubr.bf16.gmra.mxu0 %v373
  %v510 = vpop.f32.mrf.mxu0
  %v511 = vadd.f32 %v462, %v510
  %v512 = vpop.f32.mrf.mxu0
  %v513 = vpop.f32.mrf.mxu0
  %v514 = vadd.f32 %v465, %v513
  %v515 = vpop.f32.mrf.mxu0
  %516 = vmatprep.mubr.bf16.mxu0 0
  %517 = vmatmul.mubr.bf16.gmra.mxu0 %v376
  %v518 = vpop.f32.mrf.mxu0
  %v519 = vadd.f32 %v470, %v518
  %v520 = vpop.f32.mrf.mxu0
  %v521 = vpop.f32.mrf.mxu0
  %v522 = vadd.f32 %v473, %v521
  %v523 = vpop.f32.mrf.mxu0
  %524 = vdwg.mxu0
  %525 = vst [vmem:[%s2] sm:$0xff] %v511
  %526 = vst [vmem:[%s2 + $0x8] sm:$0xff] %v514
  %527 = vst [vmem:[%s2 + $0x10] sm:$0xff] %v519
  %528 = vst [vmem:[%s2 + $0x18] sm:$0xff] %v522
  %v529 = vld [vmem:[%s3] sm:$0x1]
  %v530 = vadd.f32 %v511, %v514
  %v531 = vadd.f32 %v530, %v519
  %v532 = vadd.f32 %v531, %v522
  %v533 = vrot.slane %v532, 4
  %v534 = vadd.f32 %v532, %v533
  %v535 = vrot.slane %v534, 2
  %v536 = vadd.f32 %v534, %v535
  %v537 = vrot.slane %v536, 1
  %v538 = vadd.f32 %v536, %v537
  %v539 = vadd.f32 %v529, %v538
  %540 = vst [vmem:[%s3] sm:$0x1] %v539
  %v541 = vld [vmem:[%s4] sm:$0x1]
  %v542 = vmul.f32 %v511, %v511
  %v543 = vmul.f32 %v514, %v514
  %v544 = vmul.f32 %v519, %v519
  %v545 = vmul.f32 %v522, %v522
  %v546 = vadd.f32 %v542, %v543
  %v547 = vadd.f32 %v546, %v544
  %v548 = vadd.f32 %v547, %v545
  %v549 = vrot.slane %v548, 4
  %v550 = vadd.f32 %v548, %v549
  %v551 = vrot.slane %v550, 2
  %v552 = vadd.f32 %v550, %v551
  %v553 = vrot.slane %v552, 1
  %v554 = vadd.f32 %v552, %v553
  %v555 = vadd.f32 %v541, %v554
  %556 = vst [vmem:[%s4] sm:$0x1] %v555
  // Predicated region
  $region14: #{generator_forward.11} parent=0 // pred_check
    _
  $region15: #{generator_forward.11} parent=0 // pred_check_branch
    %558 = sbr.rel (0) target = $region17
  $region16: #{generator_forward.11} parent=0 // pred_region
    _
  $region17: #{generator_forward.11} parent=0 // pred_fallthru
    _
  // Predicated region
  $region18: #{generator_forward.11} parent=0 // pred_check
    _
  $region19: #{generator_forward.11} parent=0 // pred_check_branch
    %560 = sbr.rel (0) target = $region21
  $region20: #{generator_forward.11} parent=0 // pred_region
    _
  $region21: #{generator_forward.11} parent=0 // pred_fallthru
    _
  // Predicated region
  $region22: #{generator_forward.11} parent=0 // pred_check
    _
  $region23: #{generator_forward.11} parent=0 // pred_check_branch
    %562 = sbr.rel (0) target = $region25
  $region24: #{generator_forward.11} parent=0 // pred_region
    _
  $region25: #{generator_forward.11} parent=0 // pred_fallthru
    _
  // Predicated region
  $region26: #{generator_forward.11} parent=0 // pred_check
    _
  $region27: #{generator_forward.11} parent=0 // pred_check_branch
    %564 = sbr.rel (0) target = $region29
  $region28: #{generator_forward.11} parent=0 // pred_region
    _
  $region29: #{generator_forward.11} parent=0 // pred_fallthru
    _
  // Predicated region
  $region30: #{generator_forward.11} parent=0 // pred_check
    _
  $region31: #{generator_forward.11} parent=0 // pred_check_branch
    %566 = sbr.rel (0) target = $region33
  $region32: #{generator_forward.11} parent=0 // pred_region
    _
  $region33: #{generator_forward.11} parent=0 // pred_fallthru
    _
  // Predicated region
  $region34: #{generator_forward.11} parent=0 // pred_check
    _
  $region35: #{generator_forward.11} parent=0 // pred_check_branch
    %568 = sbr.rel (0) target = $region37
  $region36: #{generator_forward.11} parent=0 // pred_region
    _
  $region37: #{generator_forward.11} parent=0 // pred_fallthru
    _

// kernel: generator_forward.13
$region0: #{generator_forward.13}
  #allocation0 [shape = 'u32[]', space=smem, size = 0x4, offset = 0x4, fixed_abs, tag = 'smem constant byte address 0x4 - core index']
  #allocation1 [shape = 'u32[144,128]{1,0:T(1,128)}', space=vmem, size = 0x12000, scoped, tag = 'internal scratch']
  %s0 = inlined_call_operand.vmem [shape: bf16[128,288], index: 0, kind: input, shape index: {}]
  %s1 = inlined_call_operand.vmem [shape: bf16[288,64], index: 1, kind: input, shape index: {}]
  %s2 = inlined_call_operand.vmem [shape: f32[128,64], index: 2, kind: output, shape index: {0}]
  %s3 = inlined_call_operand.vmem [shape: f32[1,64], index: 3, kind: output, shape index: {1}]
  %s4 = inlined_call_operand.vmem [shape: f32[1,64], index: 4, kind: output, shape index: {2}]
  %5 = xla_tuple %s2, %s3, %s4
  %s6 = sld [smem:[#allocation0]]
  $region38: #{generator_forward.13} parent=0
    _
  %s8 = ssub.s32 1, %s6
  %s9 = scalar_select 0, %s8, %s6
  // Predicated region
  $region2: #{generator_forward.13} parent=0 // pred_check
    _
  $region3: #{generator_forward.13} parent=0 // pred_check_branch
    %11 = sbr.rel (0) target = $region5
  $region4: #{generator_forward.13} parent=0 // pred_region
    _
  $region5: #{generator_forward.13} parent=0 // pred_fallthru
    _
  // Predicated region
  $region6: #{generator_forward.13} parent=0 // pred_check
    _
  $region7: #{generator_forward.13} parent=0 // pred_check_branch
    %13 = sbr.rel (0) target = $region9
  $region8: #{generator_forward.13} parent=0 // pred_region
    _
  $region9: #{generator_forward.13} parent=0 // pred_fallthru
    _
  %p15 = scmp.eq.s32.totalorder 0, 0
  // Predicated region
  $region10: #{generator_forward.13} parent=0 // pred_check
    %p16 = pneg %p15
  $region11: #{generator_forward.13} parent=0 // pred_check_branch
    %18 = sbr.rel (%p16) target = $region13
  $region12: #{generator_forward.13} parent=0 // pred_region
    %vm19 = vcmask 516096
    %20 = vst.msk [vmem:[%s3] sm:$0x1] %vm19, 0.0
    %21 = vst.msk [vmem:[%s4] sm:$0x1] %vm19, 0.0
  $region13: #{generator_forward.13} parent=0 // pred_fallthru
    _
  %v22 = vld [vmem:[%s0] sm:$0xff]
  %v23 = vld [vmem:[%s0 + $0x8] sm:$0xf]
  %v24 = vld [vmem:[%s0 + $0xc] sm:$0xff]
  %v25 = vld [vmem:[%s0 + $0x14] sm:$0xf]
  %v26 = vld [vmem:[%s0 + $0x18] sm:$0xff]
  %v27 = vld [vmem:[%s0 + $0x20] sm:$0xf]
  %v28 = vld [vmem:[%s0 + $0x24] sm:$0xff]
  %v29 = vld [vmem:[%s0 + $0x2c] sm:$0xf]
  %v30 = vld [vmem:[%s0 + $0x30] sm:$0xff]
  %v31 = vld [vmem:[%s0 + $0x38] sm:$0xf]
  %v32 = vld [vmem:[%s0 + $0x3c] sm:$0xff]
  %v33 = vld [vmem:[%s0 + $0x44] sm:$0xf]
  %v34 = vld [vmem:[%s0 + $0x48] sm:$0xff]
  %v35 = vld [vmem:[%s0 + $0x50] sm:$0xf]
  %v36 = vld [vmem:[%s0 + $0x54] sm:$0xff]
  %v37 = vld [vmem:[%s0 + $0x5c] sm:$0xf]
  %v38 = vld [vmem:[%s0 + $0x60] sm:$0xff]
  %v39 = vld [vmem:[%s0 + $0x68] sm:$0xf]
  %v40 = vld [vmem:[%s0 + $0x6c] sm:$0xff]
  %v41 = vld [vmem:[%s0 + $0x74] sm:$0xf]
  %v42 = vld [vmem:[%s0 + $0x78] sm:$0xff]
  %v43 = vld [vmem:[%s0 + $0x80] sm:$0xf]
  %v44 = vld [vmem:[%s0 + $0x84] sm:$0xff]
  %v45 = vld [vmem:[%s0 + $0x8c] sm:$0xf]
  %v46 = vld [vmem:[%s0 + $0x90] sm:$0xff]
  %v47 = vld [vmem:[%s0 + $0x98] sm:$0xf]
  %v48 = vld [vmem:[%s0 + $0x9c] sm:$0xff]
  %v49 = vld [vmem:[%s0 + $0xa4] sm:$0xf]
  %v50 = vld [vmem:[%s0 + $0xa8] sm:$0xff]
  %v51 = vld [vmem:[%s0 + $0xb0] sm:$0xf]
  %v52 = vld [vmem:[%s0 + $0xb4] sm:$0xff]
  %v53 = vld [vmem:[%s0 + $0xbc] sm:$0xf]
  %v54 = vld [vmem:[%s1] sm:$0xf]
  %v55 = vld [vmem:[%s1 + $0x4] sm:$0xf]
  %v56 = vld [vmem:[%s1 + $0x8] sm:$0xf]
  %v57 = vld [vmem:[%s1 + $0xc] sm:$0xf]
  %v58 = vld [vmem:[%s1 + $0x10] sm:$0xf]
  %v59 = vld [vmem:[%s1 + $0x14] sm:$0xf]
  %v60 = vld [vmem:[%s1 + $0x18] sm:$0xf]
  %v61 = vld [vmem:[%s1 + $0x1c] sm:$0xf]
  %v62 = vld [vmem:[%s1 + $0x20] sm:$0xf]
  %v63 = vld [vmem:[%s1 + $0x24] sm:$0xf]
  %v64 = vld [vmem:[%s1 + $0x28] sm:$0xf]
  %v65 = vld [vmem:[%s1 + $0x2c] sm:$0xf]
  %v66 = vld [vmem:[%s1 + $0x30] sm:$0xf]
  %v67 = vld [vmem:[%s1 + $0x34] sm:$0xf]
  %v68 = vld [vmem:[%s1 + $0x38] sm:$0xf]
  %v69 = vld [vmem:[%s1 + $0x3c] sm:$0xf]
  %v70 = vld [vmem:[%s1 + $0x40] sm:$0xf]
  %v71 = vld [vmem:[%s1 + $0x44] sm:$0xf]
  %v72 = vld [vmem:[%s1 + $0x48] sm:$0xf]
  %v73 = vld [vmem:[%s1 + $0x4c] sm:$0xf]
  %v74 = vld [vmem:[%s1 + $0x50] sm:$0xf]
  %v75 = vld [vmem:[%s1 + $0x54] sm:$0xf]
  %v76 = vld [vmem:[%s1 + $0x58] sm:$0xf]
  %v77 = vld [vmem:[%s1 + $0x5c] sm:$0xf]
  %v78 = vld [vmem:[%s1 + $0x60] sm:$0xf]
  %v79 = vld [vmem:[%s1 + $0x64] sm:$0xf]
  %v80 = vld [vmem:[%s1 + $0x68] sm:$0xf]
  %v81 = vld [vmem:[%s1 + $0x6c] sm:$0xf]
  %v82 = vld [vmem:[%s1 + $0x70] sm:$0xf]
  %v83 = vld [vmem:[%s1 + $0x74] sm:$0xf]
  %v84 = vld [vmem:[%s1 + $0x78] sm:$0xf]
  %v85 = vld [vmem:[%s1 + $0x7c] sm:$0xf]
  %v86 = vld [vmem:[%s1 + $0x80] sm:$0xf]
  %v87 = vld [vmem:[%s1 + $0x84] sm:$0xf]
  %v88 = vld [vmem:[%s1 + $0x88] sm:$0xf]
  %v89 = vld [vmem:[%s1 + $0x8c] sm:$0xf]
  %v122 = vunpack.c.l.b16 %v22
  %v123 = vunpack.c.h.b16 %v22
  %v124 = vunpack.c.l.b16 %v23
  %v125 = vunpack.c.l.b16 %v24
  %v126 = vunpack.c.h.b16 %v24
  %v127 = vunpack.c.l.b16 %v25
  %v128 = vunpack.c.l.b16 %v26
  %v129 = vunpack.c.h.b16 %v26
  %v130 = vunpack.c.l.b16 %v27
  %v131 = vunpack.c.l.b16 %v28
  %v132 = vunpack.c.h.b16 %v28
  %v133 = vunpack.c.l.b16 %v29
  %v134 = vunpack.c.l.b16 %v30
  %v135 = vunpack.c.h.b16 %v30
  %v136 = vunpack.c.l.b16 %v31
  %v137 = vunpack.c.l.b16 %v32
  %v138 = vunpack.c.h.b16 %v32
  %v139 = vunpack.c.l.b16 %v33
  %v140 = vunpack.c.l.b16 %v34
  %v141 = vunpack.c.h.b16 %v34
  %v142 = vunpack.c.l.b16 %v35
  %v143 = vunpack.c.l.b16 %v36
  %v144 = vunpack.c.h.b16 %v36
  %v145 = vunpack.c.l.b16 %v37
  %v146 = vunpack.c.l.b16 %v38
  %v147 = vunpack.c.h.b16 %v38
  %v148 = vunpack.c.l.b16 %v39
  %v149 = vunpack.c.l.b16 %v40
  %v150 = vunpack.c.h.b16 %v40
  %v151 = vunpack.c.l.b16 %v41
  %v152 = vunpack.c.l.b16 %v42
  %v153 = vunpack.c.h.b16 %v42
  %v154 = vunpack.c.l.b16 %v43
  %v155 = vunpack.c.l.b16 %v44
  %v156 = vunpack.c.h.b16 %v44
  %v157 = vunpack.c.l.b16 %v45
  %v158 = vunpack.c.l.b16 %v46
  %v159 = vunpack.c.h.b16 %v46
  %v160 = vunpack.c.l.b16 %v47
  %v161 = vunpack.c.l.b16 %v48
  %v162 = vunpack.c.h.b16 %v48
  %v163 = vunpack.c.l.b16 %v49
  %v164 = vunpack.c.l.b16 %v50
  %v165 = vunpack.c.h.b16 %v50
  %v166 = vunpack.c.l.b16 %v51
  %v167 = vunpack.c.l.b16 %v52
  %v168 = vunpack.c.h.b16 %v52
  %v169 = vunpack.c.l.b16 %v53
  %v170 = vpack.c.b16 %v125, %v122
  %v171 = vpack.c.b16 %v126, %v123
  %v172 = vpack.c.b16 %v127, %v124
  %v173 = vpack.c.b16 %v131, %v128
  %v174 = vpack.c.b16 %v132, %v129
  %v175 = vpack.c.b16 %v133, %v130
  %v176 = vpack.c.b16 %v137, %v134
  %v177 = vpack.c.b16 %v138, %v135
  %v178 = vpack.c.b16 %v139, %v136
  %v179 = vpack.c.b16 %v143, %v140
  %v180 = vpack.c.b16 %v144, %v141
  %v181 = vpack.c.b16 %v145, %v142
  %v182 = vpack.c.b16 %v149, %v146
  %v183 = vpack.c.b16 %v150, %v147
  %v184 = vpack.c.b16 %v151, %v148
  %v185 = vpack.c.b16 %v155, %v152
  %v186 = vpack.c.b16 %v156, %v153
  %v187 = vpack.c.b16 %v157, %v154
  %v188 = vpack.c.b16 %v161, %v158
  %v189 = vpack.c.b16 %v162, %v159
  %v190 = vpack.c.b16 %v163, %v160
  %v191 = vpack.c.b16 %v167, %v164
  %v192 = vpack.c.b16 %v168, %v165
  %v193 = vpack.c.b16 %v169, %v166
  %v246 = vunpack.c.l.b16 %v54
  %v247 = vunpack.c.l.b16 %v55
  %v248 = vunpack.c.l.b16 %v56
  %v249 = vunpack.c.l.b16 %v57
  %v250 = vunpack.c.l.b16 %v58
  %v251 = vunpack.c.l.b16 %v59
  %v252 = vunpack.c.l.b16 %v60
  %v253 = vunpack.c.l.b16 %v61
  %v254 = vunpack.c.l.b16 %v62
  %v255 = vunpack.c.l.b16 %v63
  %v256 = vunpack.c.l.b16 %v64
  %v257 = vunpack.c.l.b16 %v65
  %v258 = vunpack.c.l.b16 %v66
  %v259 = vunpack.c.l.b16 %v67
  %v260 = vunpack.c.l.b16 %v68
  %v261 = vunpack.c.l.b16 %v69
  %v262 = vunpack.c.l.b16 %v70
  %v263 = vunpack.c.l.b16 %v71
  %v264 = vunpack.c.l.b16 %v72
  %v265 = vunpack.c.l.b16 %v73
  %v266 = vunpack.c.l.b16 %v74
  %v267 = vunpack.c.l.b16 %v75
  %v268 = vunpack.c.l.b16 %v76
  %v269 = vunpack.c.l.b16 %v77
  %v270 = vunpack.c.l.b16 %v78
  %v271 = vunpack.c.l.b16 %v79
  %v272 = vunpack.c.l.b16 %v80
  %v273 = vunpack.c.l.b16 %v81
  %v274 = vunpack.c.l.b16 %v82
  %v275 = vunpack.c.l.b16 %v83
  %v276 = vunpack.c.l.b16 %v84
  %v277 = vunpack.c.l.b16 %v85
  %v278 = vunpack.c.l.b16 %v86
  %v279 = vunpack.c.l.b16 %v87
  %v280 = vunpack.c.l.b16 %v88
  %v281 = vunpack.c.l.b16 %v89
  %v282 = vpack.c.b16 %v247, %v246
  %v283 = vpack.c.b16 %v249, %v248
  %v284 = vpack.c.b16 %v251, %v250
  %v285 = vpack.c.b16 %v253, %v252
  %v286 = vpack.c.b16 %v255, %v254
  %v287 = vpack.c.b16 %v257, %v256
  %v288 = vpack.c.b16 %v259, %v258
  %v289 = vpack.c.b16 %v261, %v260
  %v290 = vpack.c.b16 %v263, %v262
  %v291 = vpack.c.b16 %v265, %v264
  %v292 = vpack.c.b16 %v267, %v266
  %v293 = vpack.c.b16 %v269, %v268
  %v294 = vpack.c.b16 %v271, %v270
  %v295 = vpack.c.b16 %v273, %v272
  %v296 = vpack.c.b16 %v275, %v274
  %v297 = vpack.c.b16 %v277, %v276
  %v298 = vpack.c.b16 %v279, %v278
  %v299 = vpack.c.b16 %v281, %v280
  %vm318 = vcmask 261120
  %v320 = vsel %vm318, %v172, 0
  %v323 = vsel %vm318, %v175, 0
  %v326 = vsel %vm318, %v178, 0
  %v329 = vsel %vm318, %v181, 0
  %v332 = vsel %vm318, %v184, 0
  %v335 = vsel %vm318, %v187, 0
  %v338 = vsel %vm318, %v190, 0
  %v341 = vsel %vm318, %v193, 0
  %343 = vmatprep.subr.bf16.mxu0 0
  %344 = vmatpush1.bf16.msra.mxu0 %v289
  %345 = vmatprep.subr.bf16.mxu0 0
  %346 = vmatpush1.bf16.msra.mxu0 %v288
  %347 = vmatprep.subr.bf16.mxu0 0
  %348 = vmatpush1.bf16.msra.mxu0 %v287
  %349 = vmatprep.subr.bf16.mxu0 0
  %350 = vmatpush1.bf16.msra.mxu0 %v286
  %351 = vmatprep.subr.bf16.mxu0 0
  %352 = vmatpush1.bf16.msra.mxu0 %v285
  %353 = vmatprep.subr.bf16.mxu0 0
  %354 = vmatpush1.bf16.msra.mxu0 %v284
  %355 = vmatprep.subr.bf16.mxu0 0
  %356 = vmatpush1.bf16.msra.mxu0 %v283
  %357 = vmatprep.subr.bf16.mxu0 0
  %358 = vmatpush1.bf16.msra.mxu0 %v282
  %359 = vmatprep.subr.bf16.mxu0 0
  %360 = vmatpush2.bf16.msra.mxu0 %v297
  %361 = vmatprep.subr.bf16.mxu0 0
  %362 = vmatpush2.bf16.msra.mxu0 %v296
  %363 = vmatprep.subr.bf16.mxu0 0
  %364 = vmatpush2.bf16.msra.mxu0 %v295
  %365 = vmatprep.subr.bf16.mxu0 0
  %366 = vmatpush2.bf16.msra.mxu0 %v294
  %367 = vmatprep.subr.bf16.mxu0 0
  %368 = vmatpush2.bf16.msra.mxu0 %v293
  %369 = vmatprep.subr.bf16.mxu0 0
  %370 = vmatpush2.bf16.msra.mxu0 %v292
  %371 = vmatprep.subr.bf16.mxu0 0
  %372 = vmatpush2.bf16.msra.mxu0 %v291
  %373 = vmatprep.subr.bf16.mxu0 0
  %374 = vmatpush2.bf16.msra.mxu0 %v290
  %375 = vmatprep.mubr.bf16.mxu0 %v171
  %376 = vmatmul.mubr.bf16.gmra.mxu0 %v170
  %v377 = vpop.f32.mrf.mxu0
  %v378 = vadd.f32 0.0, %v377
  %v379 = vpop.f32.mrf.mxu0
  %v380 = vpop.f32.mrf.mxu0
  %v381 = vadd.f32 0.0, %v380
  %v382 = vpop.f32.mrf.mxu0
  %383 = vmatprep.mubr.bf16.mxu0 %v174
  %384 = vmatmul.mubr.bf16.gmra.mxu0 %v173
  %v385 = vpop.f32.mrf.mxu0
  %v386 = vadd.f32 0.0, %v385
  %v387 = vpop.f32.mrf.mxu0
  %v388 = vpop.f32.mrf.mxu0
  %v389 = vadd.f32 0.0, %v388
  %v390 = vpop.f32.mrf.mxu0
  %391 = vmatprep.mubr.bf16.mxu0 %v177
  %392 = vmatmul.mubr.bf16.gmra.mxu0 %v176
  %v393 = vpop.f32.mrf.mxu0
  %v394 = vadd.f32 0.0, %v393
  %v395 = vpop.f32.mrf.mxu0
  %v396 = vpop.f32.mrf.mxu0
  %v397 = vadd.f32 0.0, %v396
  %v398 = vpop.f32.mrf.mxu0
  %399 = vmatprep.mubr.bf16.mxu0 %v180
  %400 = vmatmul.mubr.bf16.gmra.mxu0 %v179
  %v401 = vpop.f32.mrf.mxu0
  %v402 = vadd.f32 0.0, %v401
  %v403 = vpop.f32.mrf.mxu0
  %v404 = vpop.f32.mrf.mxu0
  %v405 = vadd.f32 0.0, %v404
  %v406 = vpop.f32.mrf.mxu0
  %407 = vmatprep.mubr.bf16.mxu0 %v183
  %408 = vmatmul.mubr.bf16.gmra.mxu0 %v182
  %v409 = vpop.f32.mrf.mxu0
  %v410 = vadd.f32 0.0, %v409
  %v411 = vpop.f32.mrf.mxu0
  %v412 = vpop.f32.mrf.mxu0
  %v413 = vadd.f32 0.0, %v412
  %v414 = vpop.f32.mrf.mxu0
  %415 = vmatprep.mubr.bf16.mxu0 %v186
  %416 = vmatmul.mubr.bf16.gmra.mxu0 %v185
  %v417 = vpop.f32.mrf.mxu0
  %v418 = vadd.f32 0.0, %v417
  %v419 = vpop.f32.mrf.mxu0
  %v420 = vpop.f32.mrf.mxu0
  %v421 = vadd.f32 0.0, %v420
  %v422 = vpop.f32.mrf.mxu0
  %423 = vmatprep.mubr.bf16.mxu0 %v189
  %424 = vmatmul.mubr.bf16.gmra.mxu0 %v188
  %v425 = vpop.f32.mrf.mxu0
  %v426 = vadd.f32 0.0, %v425
  %v427 = vpop.f32.mrf.mxu0
  %v428 = vpop.f32.mrf.mxu0
  %v429 = vadd.f32 0.0, %v428
  %v430 = vpop.f32.mrf.mxu0
  %431 = vmatprep.mubr.bf16.mxu0 %v192
  %432 = vmatmul.mubr.bf16.gmra.mxu0 %v191
  %v433 = vpop.f32.mrf.mxu0
  %v434 = vadd.f32 0.0, %v433
  %v435 = vpop.f32.mrf.mxu0
  %v436 = vpop.f32.mrf.mxu0
  %v437 = vadd.f32 0.0, %v436
  %v438 = vpop.f32.mrf.mxu0
  %439 = vdwg.mxu0
  %440 = vmatprep.subr.bf16.mxu0 0
  %441 = vmatpush1.bf16.msra.mxu0 0
  %442 = vmatprep.subr.bf16.mxu0 0
  %443 = vmatpush1.bf16.msra.mxu0 0
  %444 = vmatprep.subr.bf16.mxu0 0
  %445 = vmatpush1.bf16.msra.mxu0 0
  %446 = vmatprep.subr.bf16.mxu0 0
  %447 = vmatpush1.bf16.msra.mxu0 0
  %448 = vmatprep.subr.bf16.mxu0 0
  %449 = vmatpush1.bf16.msra.mxu0 0
  %450 = vmatprep.subr.bf16.mxu0 0
  %451 = vmatpush1.bf16.msra.mxu0 0
  %452 = vmatprep.subr.bf16.mxu0 0
  %453 = vmatpush1.bf16.msra.mxu0 %v299
  %454 = vmatprep.subr.bf16.mxu0 0
  %455 = vmatpush1.bf16.msra.mxu0 %v298
  %456 = vmatprep.subr.bf16.mxu0 0
  %457 = vmatpush2.bf16.msra.mxu0 0
  %458 = vmatprep.subr.bf16.mxu0 0
  %459 = vmatpush2.bf16.msra.mxu0 0
  %460 = vmatprep.subr.bf16.mxu0 0
  %461 = vmatpush2.bf16.msra.mxu0 0
  %462 = vmatprep.subr.bf16.mxu0 0
  %463 = vmatpush2.bf16.msra.mxu0 0
  %464 = vmatprep.subr.bf16.mxu0 0
  %465 = vmatpush2.bf16.msra.mxu0 0
  %466 = vmatprep.subr.bf16.mxu0 0
  %467 = vmatpush2.bf16.msra.mxu0 0
  %468 = vmatprep.subr.bf16.mxu0 0
  %469 = vmatpush2.bf16.msra.mxu0 0
  %470 = vmatprep.subr.bf16.mxu0 0
  %471 = vmatpush2.bf16.msra.mxu0 0
  %472 = vmatprep.mubr.bf16.mxu0 0
  %473 = vmatmul.mubr.bf16.gmra.mxu0 %v320
  %v474 = vpop.f32.mrf.mxu0
  %v475 = vadd.f32 %v378, %v474
  %v476 = vpop.f32.mrf.mxu0
  %v477 = vpop.f32.mrf.mxu0
  %v478 = vadd.f32 %v381, %v477
  %v479 = vpop.f32.mrf.mxu0
  %480 = vmatprep.mubr.bf16.mxu0 0
  %481 = vmatmul.mubr.bf16.gmra.mxu0 %v323
  %v482 = vpop.f32.mrf.mxu0
  %v483 = vadd.f32 %v386, %v482
  %v484 = vpop.f32.mrf.mxu0
  %v485 = vpop.f32.mrf.mxu0
  %v486 = vadd.f32 %v389, %v485
  %v487 = vpop.f32.mrf.mxu0
  %488 = vmatprep.mubr.bf16.mxu0 0
  %489 = vmatmul.mubr.bf16.gmra.mxu0 %v326
  %v490 = vpop.f32.mrf.mxu0
  %v491 = vadd.f32 %v394, %v490
  %v492 = vpop.f32.mrf.mxu0
  %v493 = vpop.f32.mrf.mxu0
  %v494 = vadd.f32 %v397, %v493
  %v495 = vpop.f32.mrf.mxu0
  %496 = vmatprep.mubr.bf16.mxu0 0
  %497 = vmatmul.mubr.bf16.gmra.mxu0 %v329
  %v498 = vpop.f32.mrf.mxu0
  %v499 = vadd.f32 %v402, %v498
  %v500 = vpop.f32.mrf.mxu0
  %v501 = vpop.f32.mrf.mxu0
  %v502 = vadd.f32 %v405, %v501
  %v503 = vpop.f32.mrf.mxu0
  %504 = vmatprep.mubr.bf16.mxu0 0
  %505 = vmatmul.mubr.bf16.gmra.mxu0 %v332
  %v506 = vpop.f32.mrf.mxu0
  %v507 = vadd.f32 %v410, %v506
  %v508 = vpop.f32.mrf.mxu0
  %v509 = vpop.f32.mrf.mxu0
  %v510 = vadd.f32 %v413, %v509
  %v511 = vpop.f32.mrf.mxu0
  %512 = vmatprep.mubr.bf16.mxu0 0
  %513 = vmatmul.mubr.bf16.gmra.mxu0 %v335
  %v514 = vpop.f32.mrf.mxu0
  %v515 = vadd.f32 %v418, %v514
  %v516 = vpop.f32.mrf.mxu0
  %v517 = vpop.f32.mrf.mxu0
  %v518 = vadd.f32 %v421, %v517
  %v519 = vpop.f32.mrf.mxu0
  %520 = vmatprep.mubr.bf16.mxu0 0
  %521 = vmatmul.mubr.bf16.gmra.mxu0 %v338
  %v522 = vpop.f32.mrf.mxu0
  %v523 = vadd.f32 %v426, %v522
  %v524 = vpop.f32.mrf.mxu0
  %v525 = vpop.f32.mrf.mxu0
  %v526 = vadd.f32 %v429, %v525
  %v527 = vpop.f32.mrf.mxu0
  %528 = vmatprep.mubr.bf16.mxu0 0
  %529 = vmatmul.mubr.bf16.gmra.mxu0 %v341
  %v530 = vpop.f32.mrf.mxu0
  %v531 = vadd.f32 %v434, %v530
  %v532 = vpop.f32.mrf.mxu0
  %v533 = vpop.f32.mrf.mxu0
  %v534 = vadd.f32 %v437, %v533
  %v535 = vpop.f32.mrf.mxu0
  %536 = vdwg.mxu0
  %vm537 = vcmask 523264
  %538 = vst.msk [vmem:[%s2] sm:$0xff] %vm537, %v475
  %539 = vst.msk [vmem:[%s2 + $0x8] sm:$0xff] %vm537, %v478
  %540 = vst.msk [vmem:[%s2 + $0x10] sm:$0xff] %vm537, %v483
  %541 = vst.msk [vmem:[%s2 + $0x18] sm:$0xff] %vm537, %v486
  %542 = vst.msk [vmem:[%s2 + $0x20] sm:$0xff] %vm537, %v491
  %543 = vst.msk [vmem:[%s2 + $0x28] sm:$0xff] %vm537, %v494
  %544 = vst.msk [vmem:[%s2 + $0x30] sm:$0xff] %vm537, %v499
  %545 = vst.msk [vmem:[%s2 + $0x38] sm:$0xff] %vm537, %v502
  %546 = vst.msk [vmem:[%s2 + $0x40] sm:$0xff] %vm537, %v507
  %547 = vst.msk [vmem:[%s2 + $0x48] sm:$0xff] %vm537, %v510
  %548 = vst.msk [vmem:[%s2 + $0x50] sm:$0xff] %vm537, %v515
  %549 = vst.msk [vmem:[%s2 + $0x58] sm:$0xff] %vm537, %v518
  %550 = vst.msk [vmem:[%s2 + $0x60] sm:$0xff] %vm537, %v523
  %551 = vst.msk [vmem:[%s2 + $0x68] sm:$0xff] %vm537, %v526
  %552 = vst.msk [vmem:[%s2 + $0x70] sm:$0xff] %vm537, %v531
  %553 = vst.msk [vmem:[%s2 + $0x78] sm:$0xff] %vm537, %v534
  %v554 = vld [vmem:[%s3] sm:$0x1]
  %v555 = vsel %vm537, %v475, 0.0
  %v556 = vsel %vm537, %v478, 0.0
  %v557 = vadd.f32 %v555, %v556
  %v558 = vsel %vm537, %v483, 0.0
  %v559 = vadd.f32 %v557, %v558
  %v560 = vsel %vm537, %v486, 0.0
  %v561 = vadd.f32 %v559, %v560
  %v562 = vsel %vm537, %v491, 0.0
  %v563 = vadd.f32 %v561, %v562
  %v564 = vsel %vm537, %v494, 0.0
  %v565 = vadd.f32 %v563, %v564
  %v566 = vsel %vm537, %v499, 0.0
  %v567 = vadd.f32 %v565, %v566
  %v568 = vsel %vm537, %v502, 0.0
  %v569 = vadd.f32 %v567, %v568
  %v570 = vsel %vm537, %v507, 0.0
  %v571 = vadd.f32 %v569, %v570
  %v572 = vsel %vm537, %v510, 0.0
  %v573 = vadd.f32 %v571, %v572
  %v574 = vsel %vm537, %v515, 0.0
  %v575 = vadd.f32 %v573, %v574
  %v576 = vsel %vm537, %v518, 0.0
  %v577 = vadd.f32 %v575, %v576
  %v578 = vsel %vm537, %v523, 0.0
  %v579 = vadd.f32 %v577, %v578
  %v580 = vsel %vm537, %v526, 0.0
  %v581 = vadd.f32 %v579, %v580
  %v582 = vsel %vm537, %v531, 0.0
  %v583 = vadd.f32 %v581, %v582
  %v584 = vsel %vm537, %v534, 0.0
  %v585 = vadd.f32 %v583, %v584
  %v586 = vrot.slane %v585, 4
  %v587 = vadd.f32 %v585, %v586
  %v588 = vrot.slane %v587, 2
  %v589 = vadd.f32 %v587, %v588
  %v590 = vrot.slane %v589, 1
  %v591 = vadd.f32 %v589, %v590
  %v592 = vadd.f32 %v554, %v591
  %vm593 = vcmask 516096
  %594 = vst.msk [vmem:[%s3] sm:$0x1] %vm593, %v592
  %v595 = vld [vmem:[%s4] sm:$0x1]
  %v596 = vmul.f32 %v475, %v475
  %v597 = vmul.f32 %v478, %v478
  %v598 = vmul.f32 %v483, %v483
  %v599 = vmul.f32 %v486, %v486
  %v600 = vmul.f32 %v491, %v491
  %v601 = vmul.f32 %v494, %v494
  %v602 = vmul.f32 %v499, %v499
  %v603 = vmul.f32 %v502, %v502
  %v604 = vmul.f32 %v507, %v507
  %v605 = vmul.f32 %v510, %v510
  %v606 = vmul.f32 %v515, %v515
  %v607 = vmul.f32 %v518, %v518
  %v608 = vmul.f32 %v523, %v523
  %v609 = vmul.f32 %v526, %v526
  %v610 = vmul.f32 %v531, %v531
  %v611 = vmul.f32 %v534, %v534
  %v612 = vsel %vm537, %v596, 0.0
  %v613 = vsel %vm537, %v597, 0.0
  %v614 = vadd.f32 %v612, %v613
  %v615 = vsel %vm537, %v598, 0.0
  %v616 = vadd.f32 %v614, %v615
  %v617 = vsel %vm537, %v599, 0.0
  %v618 = vadd.f32 %v616, %v617
  %v619 = vsel %vm537, %v600, 0.0
  %v620 = vadd.f32 %v618, %v619
  %v621 = vsel %vm537, %v601, 0.0
  %v622 = vadd.f32 %v620, %v621
  %v623 = vsel %vm537, %v602, 0.0
  %v624 = vadd.f32 %v622, %v623
  %v625 = vsel %vm537, %v603, 0.0
  %v626 = vadd.f32 %v624, %v625
  %v627 = vsel %vm537, %v604, 0.0
  %v628 = vadd.f32 %v626, %v627
  %v629 = vsel %vm537, %v605, 0.0
  %v630 = vadd.f32 %v628, %v629
  %v631 = vsel %vm537, %v606, 0.0
  %v632 = vadd.f32 %v630, %v631
  %v633 = vsel %vm537, %v607, 0.0
  %v634 = vadd.f32 %v632, %v633
  %v635 = vsel %vm537, %v608, 0.0
  %v636 = vadd.f32 %v634, %v635
  %v637 = vsel %vm537, %v609, 0.0
  %v638 = vadd.f32 %v636, %v637
  %v639 = vsel %vm537, %v610, 0.0
  %v640 = vadd.f32 %v638, %v639
  %v641 = vsel %vm537, %v611, 0.0
  %v642 = vadd.f32 %v640, %v641
  %v643 = vrot.slane %v642, 4
  %v644 = vadd.f32 %v642, %v643
  %v645 = vrot.slane %v644, 2
  %v646 = vadd.f32 %v644, %v645
  %v647 = vrot.slane %v646, 1
  %v648 = vadd.f32 %v646, %v647
  %v649 = vadd.f32 %v595, %v648
  %650 = vst.msk [vmem:[%s4] sm:$0x1] %vm593, %v649
  // Predicated region
  $region14: #{generator_forward.13} parent=0 // pred_check
    _
  $region15: #{generator_forward.13} parent=0 // pred_check_branch
    %652 = sbr.rel (0) target = $region17
  $region16: #{generator_forward.13} parent=0 // pred_region
    _
  $region17: #{generator_forward.13} parent=0 // pred_fallthru
    _
  // Predicated region
  $region18: #{generator_forward.13} parent=0 // pred_check
    _
  $region19: #{generator_forward.13} parent=0 // pred_check_branch
    %654 = sbr.rel (0) target = $region21
  $region20: #{generator_forward.13} parent=0 // pred_region
    _
  $region21: #{generator_forward.13} parent=0 // pred_fallthru
    _
  // Predicated region
  $region22: #{generator_forward.13} parent=0 // pred_check
    _
  $region23: #{generator_forward.13} parent=0 // pred_check_branch
    %656 = sbr.rel (0) target = $region25
  $region24: #{generator_forward.13} parent=0 // pred_region
    _
  $region25: #{generator_forward.13} parent=0 // pred_fallthru
    _
  // Predicated region
  $region26: #{generator_forward.13} parent=0 // pred_check
    _
  $region27: #{generator_forward.13} parent=0 // pred_check_branch
    %658 = sbr.rel (0) target = $region29
  $region28: #{generator_forward.13} parent=0 // pred_region
    _
  $region29: #{generator_forward.13} parent=0 // pred_fallthru
    _
  // Predicated region
  $region30: #{generator_forward.13} parent=0 // pred_check
    _
  $region31: #{generator_forward.13} parent=0 // pred_check_branch
    %660 = sbr.rel (0) target = $region33
  $region32: #{generator_forward.13} parent=0 // pred_region
    _
  $region33: #{generator_forward.13} parent=0 // pred_fallthru
    _
  // Predicated region
  $region34: #{generator_forward.13} parent=0 // pred_check
    _
  $region35: #{generator_forward.13} parent=0 // pred_check_branch
    %662 = sbr.rel (0) target = $region37
  $region36: #{generator_forward.13} parent=0 // pred_region
    _
  $region37: #{generator_forward.13} parent=0 // pred_fallthru
    _

// kernel: generator_forward.14
$region0: #{generator_forward.14}
  #allocation0 [shape = 'u32[]', space=smem, size = 0x4, offset = 0x4, fixed_abs, tag = 'smem constant byte address 0x4 - core index']
  #allocation1 [shape = 'u32[144,128]{1,0:T(1,128)}', space=vmem, size = 0x12000, scoped, tag = 'internal scratch']
  %s0 = inlined_call_operand.vmem [shape: f32[128,64], index: 0, kind: input, shape index: {}]
  %s1 = inlined_call_operand.vmem [shape: f32[1,64], index: 1, kind: input, shape index: {}]
  %s2 = inlined_call_operand.vmem [shape: f32[1,64], index: 2, kind: input, shape index: {}]
  %s3 = inlined_call_operand.vmem [shape: bf16[128,64], index: 3, kind: output, shape index: {}]
  %s4 = sld [smem:[#allocation0]]
  $region22: #{generator_forward.14} parent=0
    _
  %s6 = ssub.s32 1, %s4
  %s7 = scalar_select 0, %s6, %s4
  // Predicated region
  $region2: #{generator_forward.14} parent=0 // pred_check
    _
  $region3: #{generator_forward.14} parent=0 // pred_check_branch
    %9 = sbr.rel (0) target = $region5
  $region4: #{generator_forward.14} parent=0 // pred_region
    _
  $region5: #{generator_forward.14} parent=0 // pred_fallthru
    _
  // Predicated region
  $region6: #{generator_forward.14} parent=0 // pred_check
    _
  $region7: #{generator_forward.14} parent=0 // pred_check_branch
    %11 = sbr.rel (0) target = $region9
  $region8: #{generator_forward.14} parent=0 // pred_region
    _
  $region9: #{generator_forward.14} parent=0 // pred_fallthru
    _
  // Predicated region
  $region10: #{generator_forward.14} parent=0 // pred_check
    _
  $region11: #{generator_forward.14} parent=0 // pred_check_branch
    %13 = sbr.rel (0) target = $region13
  $region12: #{generator_forward.14} parent=0 // pred_region
    _
  $region13: #{generator_forward.14} parent=0 // pred_fallthru
    _
  %v14 = vld [vmem:[%s0] sm:$0xff]
  %v15 = vld [vmem:[%s0 + $0x8] sm:$0xff]
  %v16 = vld [vmem:[%s0 + $0x10] sm:$0xff]
  %v17 = vld [vmem:[%s0 + $0x18] sm:$0xff]
  %v18 = vld [vmem:[%s0 + $0x20] sm:$0xff]
  %v19 = vld [vmem:[%s0 + $0x28] sm:$0xff]
  %v20 = vld [vmem:[%s0 + $0x30] sm:$0xff]
  %v21 = vld [vmem:[%s0 + $0x38] sm:$0xff]
  %v22 = vld [vmem:[%s0 + $0x40] sm:$0xff]
  %v23 = vld [vmem:[%s0 + $0x48] sm:$0xff]
  %v24 = vld [vmem:[%s0 + $0x50] sm:$0xff]
  %v25 = vld [vmem:[%s0 + $0x58] sm:$0xff]
  %v26 = vld [vmem:[%s0 + $0x60] sm:$0xff]
  %v27 = vld [vmem:[%s0 + $0x68] sm:$0xff]
  %v28 = vld [vmem:[%s0 + $0x70] sm:$0xff]
  %v29 = vld [vmem:[%s0 + $0x78] sm:$0xff]
  %v30 = vld [vmem:[%s1] sm:$0x1]
  %v32 = vlaneseq
  %v33 = vshrl.u32 %v32, 7
  %v34 = vsub.s32 0, %v33
  %v35 = vrot.slane %v30, %v34
  %v37 = vmul.f32 %v14, %v35
  %v38 = vmul.f32 %v15, %v35
  %v39 = vmul.f32 %v16, %v35
  %v40 = vmul.f32 %v17, %v35
  %v41 = vmul.f32 %v18, %v35
  %v42 = vmul.f32 %v19, %v35
  %v43 = vmul.f32 %v20, %v35
  %v44 = vmul.f32 %v21, %v35
  %v45 = vmul.f32 %v22, %v35
  %v46 = vmul.f32 %v23, %v35
  %v47 = vmul.f32 %v24, %v35
  %v48 = vmul.f32 %v25, %v35
  %v49 = vmul.f32 %v26, %v35
  %v50 = vmul.f32 %v27, %v35
  %v51 = vmul.f32 %v28, %v35
  %v52 = vmul.f32 %v29, %v35
  %v53 = vld [vmem:[%s2] sm:$0x1]
  %v55 = vlaneseq
  %v56 = vshrl.u32 %v55, 7
  %v57 = vsub.s32 0, %v56
  %v58 = vrot.slane %v53, %v57
  %v60 = vadd.f32 %v37, %v58
  %v61 = vadd.f32 %v38, %v58
  %v62 = vadd.f32 %v39, %v58
  %v63 = vadd.f32 %v40, %v58
  %v64 = vadd.f32 %v41, %v58
  %v65 = vadd.f32 %v42, %v58
  %v66 = vadd.f32 %v43, %v58
  %v67 = vadd.f32 %v44, %v58
  %v68 = vadd.f32 %v45, %v58
  %v69 = vadd.f32 %v46, %v58
  %v70 = vadd.f32 %v47, %v58
  %v71 = vadd.f32 %v48, %v58
  %v72 = vadd.f32 %v49, %v58
  %v73 = vadd.f32 %v50, %v58
  %v74 = vadd.f32 %v51, %v58
  %v75 = vadd.f32 %v52, %v58
  %v76 = vmax.f32 %v60, 0.0
  %v77 = vmax.f32 %v61, 0.0
  %v78 = vmax.f32 %v62, 0.0
  %v79 = vmax.f32 %v63, 0.0
  %v80 = vmax.f32 %v64, 0.0
  %v81 = vmax.f32 %v65, 0.0
  %v82 = vmax.f32 %v66, 0.0
  %v83 = vmax.f32 %v67, 0.0
  %v84 = vmax.f32 %v68, 0.0
  %v85 = vmax.f32 %v69, 0.0
  %v86 = vmax.f32 %v70, 0.0
  %v87 = vmax.f32 %v71, 0.0
  %v88 = vmax.f32 %v72, 0.0
  %v89 = vmax.f32 %v73, 0.0
  %v90 = vmax.f32 %v74, 0.0
  %v91 = vmax.f32 %v75, 0.0
  %v92 = vpack.c.bf16 %v77, %v76
  %v93 = vpack.c.bf16 %v79, %v78
  %v94 = vpack.c.bf16 %v81, %v80
  %v95 = vpack.c.bf16 %v83, %v82
  %v96 = vpack.c.bf16 %v85, %v84
  %v97 = vpack.c.bf16 %v87, %v86
  %v98 = vpack.c.bf16 %v89, %v88
  %v99 = vpack.c.bf16 %v91, %v90
  %v108 = vunpack.c.l.b16 %v92
  %v109 = vunpack.c.h.b16 %v92
  %v110 = vunpack.c.l.b16 %v93
  %v111 = vunpack.c.h.b16 %v93
  %v112 = vunpack.c.l.b16 %v94
  %v113 = vunpack.c.h.b16 %v94
  %v114 = vunpack.c.l.b16 %v95
  %v115 = vunpack.c.h.b16 %v95
  %v116 = vunpack.c.l.b16 %v96
  %v117 = vunpack.c.h.b16 %v96
  %v118 = vunpack.c.l.b16 %v97
  %v119 = vunpack.c.h.b16 %v97
  %v120 = vunpack.c.l.b16 %v98
  %v121 = vunpack.c.h.b16 %v98
  %v122 = vunpack.c.l.b16 %v99
  %v123 = vunpack.c.h.b16 %v99
  %v124 = vpack.c.b16 %v108, %v108
  %v125 = vpack.c.b16 %v109, %v109
  %v126 = vpack.c.b16 %v110, %v110
  %v127 = vpack.c.b16 %v111, %v111
  %v128 = vpack.c.b16 %v112, %v112
  %v129 = vpack.c.b16 %v113, %v113
  %v130 = vpack.c.b16 %v114, %v114
  %v131 = vpack.c.b16 %v115, %v115
  %v132 = vpack.c.b16 %v116, %v116
  %v133 = vpack.c.b16 %v117, %v117
  %v134 = vpack.c.b16 %v118, %v118
  %v135 = vpack.c.b16 %v119, %v119
  %v136 = vpack.c.b16 %v120, %v120
  %v137 = vpack.c.b16 %v121, %v121
  %v138 = vpack.c.b16 %v122, %v122
  %v139 = vpack.c.b16 %v123, %v123
  %vm156 = vcmask 519168
  %157 = vst.msk [vmem:[%s3] sm:$0xf] %vm156, %v124
  %158 = vst.msk [vmem:[%s3 + $0x4] sm:$0xf] %vm156, %v125
  %159 = vst.msk [vmem:[%s3 + $0x8] sm:$0xf] %vm156, %v126
  %160 = vst.msk [vmem:[%s3 + $0xc] sm:$0xf] %vm156, %v127
  %161 = vst.msk [vmem:[%s3 + $0x10] sm:$0xf] %vm156, %v128
  %162 = vst.msk [vmem:[%s3 + $0x14] sm:$0xf] %vm156, %v129
  %163 = vst.msk [vmem:[%s3 + $0x18] sm:$0xf] %vm156, %v130
  %164 = vst.msk [vmem:[%s3 + $0x1c] sm:$0xf] %vm156, %v131
  %165 = vst.msk [vmem:[%s3 + $0x20] sm:$0xf] %vm156, %v132
  %166 = vst.msk [vmem:[%s3 + $0x24] sm:$0xf] %vm156, %v133
  %167 = vst.msk [vmem:[%s3 + $0x28] sm:$0xf] %vm156, %v134
  %168 = vst.msk [vmem:[%s3 + $0x2c] sm:$0xf] %vm156, %v135
  %169 = vst.msk [vmem:[%s3 + $0x30] sm:$0xf] %vm156, %v136
  %170 = vst.msk [vmem:[%s3 + $0x34] sm:$0xf] %vm156, %v137
  %171 = vst.msk [vmem:[%s3 + $0x38] sm:$0xf] %vm156, %v138
  %172 = vst.msk [vmem:[%s3 + $0x3c] sm:$0xf] %vm156, %v139
  // Predicated region
  $region14: #{generator_forward.14} parent=0 // pred_check
    _
  $region15: #{generator_forward.14} parent=0 // pred_check_branch
    %174 = sbr.rel (0) target = $region17
  $region16: #{generator_forward.14} parent=0 // pred_region
    _
  $region17: #{generator_forward.14} parent=0 // pred_fallthru
    _
  // Predicated region
  $region18: #{generator_forward.14} parent=0 // pred_check
    _
  $region19: #{generator_forward.14} parent=0 // pred_check_branch
    %176 = sbr.rel (0) target = $region21
  $region20: #{generator_forward.14} parent=0 // pred_region
    _
  $region21: #{generator_forward.14} parent=0 // pred_fallthru
    _

// kernel: generator_forward.15
$region0: #{generator_forward.15}
  #allocation0 [shape = 'u32[]', space=smem, size = 0x4, offset = 0x4, fixed_abs, tag = 'smem constant byte address 0x4 - core index']
  #allocation1 [shape = 'u32[144,128]{1,0:T(1,128)}', space=vmem, size = 0x12000, scoped, tag = 'internal scratch']
  %s0 = inlined_call_operand.vmem [shape: bf16[512,144], index: 0, kind: input, shape index: {}]
  %s1 = inlined_call_operand.vmem [shape: bf16[144,32], index: 1, kind: input, shape index: {}]
  %s2 = inlined_call_operand.vmem [shape: f32[512,32], index: 2, kind: output, shape index: {0}]
  %s3 = inlined_call_operand.vmem [shape: f32[1,32], index: 3, kind: output, shape index: {1}]
  %s4 = inlined_call_operand.vmem [shape: f32[1,32], index: 4, kind: output, shape index: {2}]
  %5 = xla_tuple %s2, %s3, %s4
  %s6 = sld [smem:[#allocation0]]
  $region38: #{generator_forward.15} parent=0
    _
  %s8 = ssub.s32 1, %s6
  %s9 = scalar_select 0, %s8, %s6
  // Predicated region
  $region2: #{generator_forward.15} parent=0 // pred_check
    _
  $region3: #{generator_forward.15} parent=0 // pred_check_branch
    %11 = sbr.rel (0) target = $region5
  $region4: #{generator_forward.15} parent=0 // pred_region
    _
  $region5: #{generator_forward.15} parent=0 // pred_fallthru
    _
  // Predicated region
  $region6: #{generator_forward.15} parent=0 // pred_check
    _
  $region7: #{generator_forward.15} parent=0 // pred_check_branch
    %13 = sbr.rel (0) target = $region9
  $region8: #{generator_forward.15} parent=0 // pred_region
    _
  $region9: #{generator_forward.15} parent=0 // pred_fallthru
    _
  %p15 = scmp.eq.s32.totalorder 0, 0
  // Predicated region
  $region10: #{generator_forward.15} parent=0 // pred_check
    %p16 = pneg %p15
  $region11: #{generator_forward.15} parent=0 // pred_check_branch
    %18 = sbr.rel (%p16) target = $region13
  $region12: #{generator_forward.15} parent=0 // pred_region
    %vm19 = vcmask 253952
    %20 = vst.msk [vmem:[%s3] sm:$0x1] %vm19, 0.0
    %21 = vst.msk [vmem:[%s4] sm:$0x1] %vm19, 0.0
  $region13: #{generator_forward.15} parent=0 // pred_fallthru
    _
  %v22 = vld [vmem:[%s0] sm:$0xff]
  %v23 = vld [vmem:[%s0 + $0x8] sm:$0xff]
  %v24 = vld [vmem:[%s0 + $0x10] sm:$0xff]
  %v25 = vld [vmem:[%s0 + $0x18] sm:$0xff]
  %v26 = vld [vmem:[%s0 + $0x20] sm:$0xff]
  %v27 = vld [vmem:[%s0 + $0x28] sm:$0xff]
  %v28 = vld [vmem:[%s0 + $0x30] sm:$0xff]
  %v29 = vld [vmem:[%s0 + $0x38] sm:$0xff]
  %v30 = vld [vmem:[%s0 + $0x40] sm:$0xff]
  %v31 = vld [vmem:[%s0 + $0x48] sm:$0xff]
  %v32 = vld [vmem:[%s0 + $0x50] sm:$0xff]
  %v33 = vld [vmem:[%s0 + $0x58] sm:$0xff]
  %v34 = vld [vmem:[%s0 + $0x60] sm:$0xff]
  %v35 = vld [vmem:[%s0 + $0x68] sm:$0xff]
  %v36 = vld [vmem:[%s0 + $0x70] sm:$0xff]
  %v37 = vld [vmem:[%s0 + $0x78] sm:$0xff]
  %v38 = vld [vmem:[%s0 + $0x80] sm:$0xff]
  %v39 = vld [vmem:[%s0 + $0x88] sm:$0xff]
  %v40 = vld [vmem:[%s0 + $0x90] sm:$0xff]
  %v41 = vld [vmem:[%s0 + $0x98] sm:$0xff]
  %v42 = vld [vmem:[%s0 + $0xa0] sm:$0xff]
  %v43 = vld [vmem:[%s0 + $0xa8] sm:$0xff]
  %v44 = vld [vmem:[%s0 + $0xb0] sm:$0xff]
  %v45 = vld [vmem:[%s0 + $0xb8] sm:$0xff]
  %v46 = vld [vmem:[%s0 + $0xc0] sm:$0xff]
  %v47 = vld [vmem:[%s0 + $0xc8] sm:$0xff]
  %v48 = vld [vmem:[%s0 + $0xd0] sm:$0xff]
  %v49 = vld [vmem:[%s0 + $0xd8] sm:$0xff]
  %v50 = vld [vmem:[%s0 + $0xe0] sm:$0xff]
  %v51 = vld [vmem:[%s0 + $0xe8] sm:$0xff]
  %v52 = vld [vmem:[%s0 + $0xf0] sm:$0xff]
  %v53 = vld [vmem:[%s0 + $0xf8] sm:$0xff]
  %v54 = vld [vmem:[%s0 + $0x100] sm:$0xff]
  %v55 = vld [vmem:[%s0 + $0x108] sm:$0xff]
  %v56 = vld [vmem:[%s0 + $0x110] sm:$0xff]
  %v57 = vld [vmem:[%s0 + $0x118] sm:$0xff]
  %v58 = vld [vmem:[%s0 + $0x120] sm:$0xff]
  %v59 = vld [vmem:[%s0 + $0x128] sm:$0xff]
  %v60 = vld [vmem:[%s0 + $0x130] sm:$0xff]
  %v61 = vld [vmem:[%s0 + $0x138] sm:$0xff]
  %v62 = vld [vmem:[%s0 + $0x140] sm:$0xff]
  %v63 = vld [vmem:[%s0 + $0x148] sm:$0xff]
  %v64 = vld [vmem:[%s0 + $0x150] sm:$0xff]
  %v65 = vld [vmem:[%s0 + $0x158] sm:$0xff]
  %v66 = vld [vmem:[%s0 + $0x160] sm:$0xff]
  %v67 = vld [vmem:[%s0 + $0x168] sm:$0xff]
  %v68 = vld [vmem:[%s0 + $0x170] sm:$0xff]
  %v69 = vld [vmem:[%s0 + $0x178] sm:$0xff]
  %v70 = vld [vmem:[%s0 + $0x180] sm:$0xff]
  %v71 = vld [vmem:[%s0 + $0x188] sm:$0xff]
  %v72 = vld [vmem:[%s0 + $0x190] sm:$0xff]
  %v73 = vld [vmem:[%s0 + $0x198] sm:$0xff]
  %v74 = vld [vmem:[%s0 + $0x1a0] sm:$0xff]
  %v75 = vld [vmem:[%s0 + $0x1a8] sm:$0xff]
  %v76 = vld [vmem:[%s0 + $0x1b0] sm:$0xff]
  %v77 = vld [vmem:[%s0 + $0x1b8] sm:$0xff]
  %v78 = vld [vmem:[%s0 + $0x1c0] sm:$0xff]
  %v79 = vld [vmem:[%s0 + $0x1c8] sm:$0xff]
  %v80 = vld [vmem:[%s0 + $0x1d0] sm:$0xff]
  %v81 = vld [vmem:[%s0 + $0x1d8] sm:$0xff]
  %v82 = vld [vmem:[%s0 + $0x1e0] sm:$0xff]
  %v83 = vld [vmem:[%s0 + $0x1e8] sm:$0xff]
  %v84 = vld [vmem:[%s0 + $0x1f0] sm:$0xff]
  %v85 = vld [vmem:[%s0 + $0x1f8] sm:$0xff]
  %v86 = vld [vmem:[%s1] sm:$0xf]
  %v87 = vld [vmem:[%s1 + $0x4] sm:$0xf]
  %v88 = vld [vmem:[%s1 + $0x8] sm:$0xf]
  %v89 = vld [vmem:[%s1 + $0xc] sm:$0xf]
  %v90 = vld [vmem:[%s1 + $0x10] sm:$0xf]
  %v91 = vld [vmem:[%s1 + $0x14] sm:$0xf]
  %v92 = vld [vmem:[%s1 + $0x18] sm:$0xf]
  %v93 = vld [vmem:[%s1 + $0x1c] sm:$0xf]
  %v94 = vld [vmem:[%s1 + $0x20] sm:$0xf]
  %v95 = vld [vmem:[%s1 + $0x24] sm:$0xf]
  %v96 = vld [vmem:[%s1 + $0x28] sm:$0xf]
  %v97 = vld [vmem:[%s1 + $0x2c] sm:$0xf]
  %v98 = vld [vmem:[%s1 + $0x30] sm:$0xf]
  %v99 = vld [vmem:[%s1 + $0x34] sm:$0xf]
  %v100 = vld [vmem:[%s1 + $0x38] sm:$0xf]
  %v101 = vld [vmem:[%s1 + $0x3c] sm:$0xf]
  %v102 = vld [vmem:[%s1 + $0x40] sm:$0xf]
  %v103 = vld [vmem:[%s1 + $0x44] sm:$0xf]
  %v168 = vunpack.c.l.b16 %v22
  %v169 = vunpack.c.h.b16 %v22
  %v170 = vunpack.c.l.b16 %v23
  %v171 = vunpack.c.h.b16 %v23
  %v172 = vunpack.c.l.b16 %v24
  %v173 = vunpack.c.h.b16 %v24
  %v174 = vunpack.c.l.b16 %v25
  %v175 = vunpack.c.h.b16 %v25
  %v176 = vunpack.c.l.b16 %v26
  %v177 = vunpack.c.h.b16 %v26
  %v178 = vunpack.c.l.b16 %v27
  %v179 = vunpack.c.h.b16 %v27
  %v180 = vunpack.c.l.b16 %v28
  %v181 = vunpack.c.h.b16 %v28
  %v182 = vunpack.c.l.b16 %v29
  %v183 = vunpack.c.h.b16 %v29
  %v184 = vunpack.c.l.b16 %v30
  %v185 = vunpack.c.h.b16 %v30
  %v186 = vunpack.c.l.b16 %v31
  %v187 = vunpack.c.h.b16 %v31
  %v188 = vunpack.c.l.b16 %v32
  %v189 = vunpack.c.h.b16 %v32
  %v190 = vunpack.c.l.b16 %v33
  %v191 = vunpack.c.h.b16 %v33
  %v192 = vunpack.c.l.b16 %v34
  %v193 = vunpack.c.h.b16 %v34
  %v194 = vunpack.c.l.b16 %v35
  %v195 = vunpack.c.h.b16 %v35
  %v196 = vunpack.c.l.b16 %v36
  %v197 = vunpack.c.h.b16 %v36
  %v198 = vunpack.c.l.b16 %v37
  %v199 = vunpack.c.h.b16 %v37
  %v200 = vunpack.c.l.b16 %v38
  %v201 = vunpack.c.h.b16 %v38
  %v202 = vunpack.c.l.b16 %v39
  %v203 = vunpack.c.h.b16 %v39
  %v204 = vunpack.c.l.b16 %v40
  %v205 = vunpack.c.h.b16 %v40
  %v206 = vunpack.c.l.b16 %v41
  %v207 = vunpack.c.h.b16 %v41
  %v208 = vunpack.c.l.b16 %v42
  %v209 = vunpack.c.h.b16 %v42
  %v210 = vunpack.c.l.b16 %v43
  %v211 = vunpack.c.h.b16 %v43
  %v212 = vunpack.c.l.b16 %v44
  %v213 = vunpack.c.h.b16 %v44
  %v214 = vunpack.c.l.b16 %v45
  %v215 = vunpack.c.h.b16 %v45
  %v216 = vunpack.c.l.b16 %v46
  %v217 = vunpack.c.h.b16 %v46
  %v218 = vunpack.c.l.b16 %v47
  %v219 = vunpack.c.h.b16 %v47
  %v220 = vunpack.c.l.b16 %v48
  %v221 = vunpack.c.h.b16 %v48
  %v222 = vunpack.c.l.b16 %v49
  %v223 = vunpack.c.h.b16 %v49
  %v224 = vunpack.c.l.b16 %v50
  %v225 = vunpack.c.h.b16 %v50
  %v226 = vunpack.c.l.b16 %v51
  %v227 = vunpack.c.h.b16 %v51
  %v228 = vunpack.c.l.b16 %v52
  %v229 = vunpack.c.h.b16 %v52
  %v230 = vunpack.c.l.b16 %v53
  %v231 = vunpack.c.h.b16 %v53
  %v232 = vunpack.c.l.b16 %v54
  %v233 = vunpack.c.h.b16 %v54
  %v234 = vunpack.c.l.b16 %v55
  %v235 = vunpack.c.h.b16 %v55
  %v236 = vunpack.c.l.b16 %v56
  %v237 = vunpack.c.h.b16 %v56
  %v238 = vunpack.c.l.b16 %v57
  %v239 = vunpack.c.h.b16 %v57
  %v240 = vunpack.c.l.b16 %v58
  %v241 = vunpack.c.h.b16 %v58
  %v242 = vunpack.c.l.b16 %v59
  %v243 = vunpack.c.h.b16 %v59
  %v244 = vunpack.c.l.b16 %v60
  %v245 = vunpack.c.h.b16 %v60
  %v246 = vunpack.c.l.b16 %v61
  %v247 = vunpack.c.h.b16 %v61
  %v248 = vunpack.c.l.b16 %v62
  %v249 = vunpack.c.h.b16 %v62
  %v250 = vunpack.c.l.b16 %v63
  %v251 = vunpack.c.h.b16 %v63
  %v252 = vunpack.c.l.b16 %v64
  %v253 = vunpack.c.h.b16 %v64
  %v254 = vunpack.c.l.b16 %v65
  %v255 = vunpack.c.h.b16 %v65
  %v256 = vunpack.c.l.b16 %v66
  %v257 = vunpack.c.h.b16 %v66
  %v258 = vunpack.c.l.b16 %v67
  %v259 = vunpack.c.h.b16 %v67
  %v260 = vunpack.c.l.b16 %v68
  %v261 = vunpack.c.h.b16 %v68
  %v262 = vunpack.c.l.b16 %v69
  %v263 = vunpack.c.h.b16 %v69
  %v264 = vunpack.c.l.b16 %v70
  %v265 = vunpack.c.h.b16 %v70
  %v266 = vunpack.c.l.b16 %v71
  %v267 = vunpack.c.h.b16 %v71
  %v268 = vunpack.c.l.b16 %v72
  %v269 = vunpack.c.h.b16 %v72
  %v270 = vunpack.c.l.b16 %v73
  %v271 = vunpack.c.h.b16 %v73
  %v272 = vunpack.c.l.b16 %v74
  %v273 = vunpack.c.h.b16 %v74
  %v274 = vunpack.c.l.b16 %v75
  %v275 = vunpack.c.h.b16 %v75
  %v276 = vunpack.c.l.b16 %v76
  %v277 = vunpack.c.h.b16 %v76
  %v278 = vunpack.c.l.b16 %v77
  %v279 = vunpack.c.h.b16 %v77
  %v280 = vunpack.c.l.b16 %v78
  %v281 = vunpack.c.h.b16 %v78
  %v282 = vunpack.c.l.b16 %v79
  %v283 = vunpack.c.h.b16 %v79
  %v284 = vunpack.c.l.b16 %v80
  %v285 = vunpack.c.h.b16 %v80
  %v286 = vunpack.c.l.b16 %v81
  %v287 = vunpack.c.h.b16 %v81
  %v288 = vunpack.c.l.b16 %v82
  %v289 = vunpack.c.h.b16 %v82
  %v290 = vunpack.c.l.b16 %v83
  %v291 = vunpack.c.h.b16 %v83
  %v292 = vunpack.c.l.b16 %v84
  %v293 = vunpack.c.h.b16 %v84
  %v294 = vunpack.c.l.b16 %v85
  %v295 = vunpack.c.h.b16 %v85
  %v296 = vpack.c.b16 %v170, %v168
  %v297 = vpack.c.b16 %v171, %v169
  %v298 = vpack.c.b16 %v174, %v172
  %v299 = vpack.c.b16 %v175, %v173
  %v300 = vpack.c.b16 %v178, %v176
  %v301 = vpack.c.b16 %v179, %v177
  %v302 = vpack.c.b16 %v182, %v180
  %v303 = vpack.c.b16 %v183, %v181
  %v304 = vpack.c.b16 %v186, %v184
  %v305 = vpack.c.b16 %v187, %v185
  %v306 = vpack.c.b16 %v190, %v188
  %v307 = vpack.c.b16 %v191, %v189
  %v308 = vpack.c.b16 %v194, %v192
  %v309 = vpack.c.b16 %v195, %v193
  %v310 = vpack.c.b16 %v198, %v196
  %v311 = vpack.c.b16 %v199, %v197
  %v312 = vpack.c.b16 %v202, %v200
  %v313 = vpack.c.b16 %v203, %v201
  %v314 = vpack.c.b16 %v206, %v204
  %v315 = vpack.c.b16 %v207, %v205
  %v316 = vpack.c.b16 %v210, %v208
  %v317 = vpack.c.b16 %v211, %v209
  %v318 = vpack.c.b16 %v214, %v212
  %v319 = vpack.c.b16 %v215, %v213
  %v320 = vpack.c.b16 %v218, %v216
  %v321 = vpack.c.b16 %v219, %v217
  %v322 = vpack.c.b16 %v222, %v220
  %v323 = vpack.c.b16 %v223, %v221
  %v324 = vpack.c.b16 %v226, %v224
  %v325 = vpack.c.b16 %v227, %v225
  %v326 = vpack.c.b16 %v230, %v228
  %v327 = vpack.c.b16 %v231, %v229
  %v328 = vpack.c.b16 %v234, %v232
  %v329 = vpack.c.b16 %v235, %v233
  %v330 = vpack.c.b16 %v238, %v236
  %v331 = vpack.c.b16 %v239, %v237
  %v332 = vpack.c.b16 %v242, %v240
  %v333 = vpack.c.b16 %v243, %v241
  %v334 = vpack.c.b16 %v246, %v244
  %v335 = vpack.c.b16 %v247, %v245
  %v336 = vpack.c.b16 %v250, %v248
  %v337 = vpack.c.b16 %v251, %v249
  %v338 = vpack.c.b16 %v254, %v252
  %v339 = vpack.c.b16 %v255, %v253
  %v340 = vpack.c.b16 %v258, %v256
  %v341 = vpack.c.b16 %v259, %v257
  %v342 = vpack.c.b16 %v262, %v260
  %v343 = vpack.c.b16 %v263, %v261
  %v344 = vpack.c.b16 %v266, %v264
  %v345 = vpack.c.b16 %v267, %v265
  %v346 = vpack.c.b16 %v270, %v268
  %v347 = vpack.c.b16 %v271, %v269
  %v348 = vpack.c.b16 %v274, %v272
  %v349 = vpack.c.b16 %v275, %v273
  %v350 = vpack.c.b16 %v278, %v276
  %v351 = vpack.c.b16 %v279, %v277
  %v352 = vpack.c.b16 %v282, %v280
  %v353 = vpack.c.b16 %v283, %v281
  %v354 = vpack.c.b16 %v286, %v284
  %v355 = vpack.c.b16 %v287, %v285
  %v356 = vpack.c.b16 %v290, %v288
  %v357 = vpack.c.b16 %v291, %v289
  %v358 = vpack.c.b16 %v294, %v292
  %v359 = vpack.c.b16 %v295, %v293
  %v410 = vunpack.c.l.b16 %v86
  %v411 = vunpack.c.l.b16 %v87
  %v412 = vunpack.c.l.b16 %v88
  %v413 = vunpack.c.l.b16 %v89
  %v414 = vunpack.c.l.b16 %v90
  %v415 = vunpack.c.l.b16 %v91
  %v416 = vunpack.c.l.b16 %v92
  %v417 = vunpack.c.l.b16 %v93
  %v418 = vunpack.c.l.b16 %v94
  %v419 = vunpack.c.l.b16 %v95
  %v420 = vunpack.c.l.b16 %v96
  %v421 = vunpack.c.l.b16 %v97
  %v422 = vunpack.c.l.b16 %v98
  %v423 = vunpack.c.l.b16 %v99
  %v424 = vunpack.c.l.b16 %v100
  %v425 = vunpack.c.l.b16 %v101
  %v426 = vunpack.c.l.b16 %v102
  %v427 = vunpack.c.l.b16 %v103
  %v428 = vpack.c.b16 %v411, %v410
  %v429 = vpack.c.b16 %v413, %v412
  %v430 = vpack.c.b16 %v415, %v414
  %v431 = vpack.c.b16 %v417, %v416
  %v432 = vpack.c.b16 %v419, %v418
  %v433 = vpack.c.b16 %v421, %v420
  %v434 = vpack.c.b16 %v423, %v422
  %v435 = vpack.c.b16 %v425, %v424
  %v436 = vpack.c.b16 %v427, %v426
  %vm446 = vcmask 130048
  %v448 = vsel %vm446, %v297, 0
  %v451 = vsel %vm446, %v299, 0
  %v454 = vsel %vm446, %v301, 0
  %v457 = vsel %vm446, %v303, 0
  %v460 = vsel %vm446, %v305, 0
  %v463 = vsel %vm446, %v307, 0
  %v466 = vsel %vm446, %v309, 0
  %v469 = vsel %vm446, %v311, 0
  %v472 = vsel %vm446, %v313, 0
  %v475 = vsel %vm446, %v315, 0
  %v478 = vsel %vm446, %v317, 0
  %v481 = vsel %vm446, %v319, 0
  %v484 = vsel %vm446, %v321, 0
  %v487 = vsel %vm446, %v323, 0
  %v490 = vsel %vm446, %v325, 0
  %v493 = vsel %vm446, %v327, 0
  %v496 = vsel %vm446, %v329, 0
  %v499 = vsel %vm446, %v331, 0
  %v502 = vsel %vm446, %v333, 0
  %v505 = vsel %vm446, %v335, 0
  %v508 = vsel %vm446, %v337, 0
  %v511 = vsel %vm446, %v339, 0
  %v514 = vsel %vm446, %v341, 0
  %v517 = vsel %vm446, %v343, 0
  %v520 = vsel %vm446, %v345, 0
  %v523 = vsel %vm446, %v347, 0
  %v526 = vsel %vm446, %v349, 0
  %v529 = vsel %vm446, %v351, 0
  %v532 = vsel %vm446, %v353, 0
  %v535 = vsel %vm446, %v355, 0
  %v538 = vsel %vm446, %v357, 0
  %v541 = vsel %vm446, %v359, 0
  %543 = vmatprep.subr.bf16.mxu0 0
  %544 = vmatpush1.bf16.msra.mxu0 %v435
  %545 = vmatprep.subr.bf16.mxu0 0
  %546 = vmatpush1.bf16.msra.mxu0 %v434
  %547 = vmatprep.subr.bf16.mxu0 0
  %548 = vmatpush1.bf16.msra.mxu0 %v433
  %549 = vmatprep.subr.bf16.mxu0 0
  %550 = vmatpush1.bf16.msra.mxu0 %v432
  %551 = vmatprep.subr.bf16.mxu0 0
  %552 = vmatpush1.bf16.msra.mxu0 %v431
  %553 = vmatprep.subr.bf16.mxu0 0
  %554 = vmatpush1.bf16.msra.mxu0 %v430
  %555 = vmatprep.subr.bf16.mxu0 0
  %556 = vmatpush1.bf16.msra.mxu0 %v429
  %557 = vmatprep.subr.bf16.mxu0 0
  %558 = vmatpush1.bf16.msra.mxu0 %v428
  %559 = vmatprep.subr.bf16.mxu0 0
  %560 = vmatpush2.bf16.msra.mxu0 0
  %561 = vmatprep.subr.bf16.mxu0 0
  %562 = vmatpush2.bf16.msra.mxu0 0
  %563 = vmatprep.subr.bf16.mxu0 0
  %564 = vmatpush2.bf16.msra.mxu0 0
  %565 = vmatprep.subr.bf16.mxu0 0
  %566 = vmatpush2.bf16.msra.mxu0 0
  %567 = vmatprep.subr.bf16.mxu0 0
  %568 = vmatpush2.bf16.msra.mxu0 0
  %569 = vmatprep.subr.bf16.mxu0 0
  %570 = vmatpush2.bf16.msra.mxu0 0
  %571 = vmatprep.subr.bf16.mxu0 0
  %572 = vmatpush2.bf16.msra.mxu0 0
  %573 = vmatprep.subr.bf16.mxu0 0
  %574 = vmatpush2.bf16.msra.mxu0 %v436
  %575 = vmatprep.mubr.bf16.mxu0 %v448
  %576 = vmatmul.mubr.bf16.gmra.mxu0 %v296
  %v577 = vpop.f32.mrf.mxu0
  %v578 = vadd.f32 0.0, %v577
  %v579 = vpop.f32.mrf.mxu0
  %v580 = vpop.f32.mrf.mxu0
  %v581 = vadd.f32 0.0, %v580
  %v582 = vpop.f32.mrf.mxu0
  %583 = vmatprep.mubr.bf16.mxu0 %v451
  %584 = vmatmul.mubr.bf16.gmra.mxu0 %v298
  %v585 = vpop.f32.mrf.mxu0
  %v586 = vadd.f32 0.0, %v585
  %v587 = vpop.f32.mrf.mxu0
  %v588 = vpop.f32.mrf.mxu0
  %v589 = vadd.f32 0.0, %v588
  %v590 = vpop.f32.mrf.mxu0
  %591 = vmatprep.mubr.bf16.mxu0 %v454
  %592 = vmatmul.mubr.bf16.gmra.mxu0 %v300
  %v593 = vpop.f32.mrf.mxu0
  %v594 = vadd.f32 0.0, %v593
  %v595 = vpop.f32.mrf.mxu0
  %v596 = vpop.f32.mrf.mxu0
  %v597 = vadd.f32 0.0, %v596
  %v598 = vpop.f32.mrf.mxu0
  %599 = vmatprep.mubr.bf16.mxu0 %v457
  %600 = vmatmul.mubr.bf16.gmra.mxu0 %v302
  %v601 = vpop.f32.mrf.mxu0
  %v602 = vadd.f32 0.0, %v601
  %v603 = vpop.f32.mrf.mxu0
  %v604 = vpop.f32.mrf.mxu0
  %v605 = vadd.f32 0.0, %v604
  %v606 = vpop.f32.mrf.mxu0
  %607 = vmatprep.mubr.bf16.mxu0 %v460
  %608 = vmatmul.mubr.bf16.gmra.mxu0 %v304
  %v609 = vpop.f32.mrf.mxu0
  %v610 = vadd.f32 0.0, %v609
  %v611 = vpop.f32.mrf.mxu0
  %v612 = vpop.f32.mrf.mxu0
  %v613 = vadd.f32 0.0, %v612
  %v614 = vpop.f32.mrf.mxu0
  %615 = vmatprep.mubr.bf16.mxu0 %v463
  %616 = vmatmul.mubr.bf16.gmra.mxu0 %v306
  %v617 = vpop.f32.mrf.mxu0
  %v618 = vadd.f32 0.0, %v617
  %v619 = vpop.f32.mrf.mxu0
  %v620 = vpop.f32.mrf.mxu0
  %v621 = vadd.f32 0.0, %v620
  %v622 = vpop.f32.mrf.mxu0
  %623 = vmatprep.mubr.bf16.mxu0 %v466
  %624 = vmatmul.mubr.bf16.gmra.mxu0 %v308
  %v625 = vpop.f32.mrf.mxu0
  %v626 = vadd.f32 0.0, %v625
  %v627 = vpop.f32.mrf.mxu0
  %v628 = vpop.f32.mrf.mxu0
  %v629 = vadd.f32 0.0, %v628
  %v630 = vpop.f32.mrf.mxu0
  %631 = vmatprep.mubr.bf16.mxu0 %v469
  %632 = vmatmul.mubr.bf16.gmra.mxu0 %v310
  %v633 = vpop.f32.mrf.mxu0
  %v634 = vadd.f32 0.0, %v633
  %v635 = vpop.f32.mrf.mxu0
  %v636 = vpop.f32.mrf.mxu0
  %v637 = vadd.f32 0.0, %v636
  %v638 = vpop.f32.mrf.mxu0
  %639 = vmatprep.mubr.bf16.mxu0 %v472
  %640 = vmatmul.mubr.bf16.gmra.mxu0 %v312
  %v641 = vpop.f32.mrf.mxu0
  %v642 = vadd.f32 0.0, %v641
  %v643 = vpop.f32.mrf.mxu0
  %v644 = vpop.f32.mrf.mxu0
  %v645 = vadd.f32 0.0, %v644
  %v646 = vpop.f32.mrf.mxu0
  %647 = vmatprep.mubr.bf16.mxu0 %v475
  %648 = vmatmul.mubr.bf16.gmra.mxu0 %v314
  %v649 = vpop.f32.mrf.mxu0
  %v650 = vadd.f32 0.0, %v649
  %v651 = vpop.f32.mrf.mxu0
  %v652 = vpop.f32.mrf.mxu0
  %v653 = vadd.f32 0.0, %v652
  %v654 = vpop.f32.mrf.mxu0
  %655 = vmatprep.mubr.bf16.mxu0 %v478
  %656 = vmatmul.mubr.bf16.gmra.mxu0 %v316
  %v657 = vpop.f32.mrf.mxu0
  %v658 = vadd.f32 0.0, %v657
  %v659 = vpop.f32.mrf.mxu0
  %v660 = vpop.f32.mrf.mxu0
  %v661 = vadd.f32 0.0, %v660
  %v662 = vpop.f32.mrf.mxu0
  %663 = vmatprep.mubr.bf16.mxu0 %v481
  %664 = vmatmul.mubr.bf16.gmra.mxu0 %v318
  %v665 = vpop.f32.mrf.mxu0
  %v666 = vadd.f32 0.0, %v665
  %v667 = vpop.f32.mrf.mxu0
  %v668 = vpop.f32.mrf.mxu0
  %v669 = vadd.f32 0.0, %v668
  %v670 = vpop.f32.mrf.mxu0
  %671 = vmatprep.mubr.bf16.mxu0 %v484
  %672 = vmatmul.mubr.bf16.gmra.mxu0 %v320
  %v673 = vpop.f32.mrf.mxu0
  %v674 = vadd.f32 0.0, %v673
  %v675 = vpop.f32.mrf.mxu0
  %v676 = vpop.f32.mrf.mxu0
  %v677 = vadd.f32 0.0, %v676
  %v678 = vpop.f32.mrf.mxu0
  %679 = vmatprep.mubr.bf16.mxu0 %v487
  %680 = vmatmul.mubr.bf16.gmra.mxu0 %v322
  %v681 = vpop.f32.mrf.mxu0
  %v682 = vadd.f32 0.0, %v681
  %v683 = vpop.f32.mrf.mxu0
  %v684 = vpop.f32.mrf.mxu0
  %v685 = vadd.f32 0.0, %v684
  %v686 = vpop.f32.mrf.mxu0
  %687 = vmatprep.mubr.bf16.mxu0 %v490
  %688 = vmatmul.mubr.bf16.gmra.mxu0 %v324
  %v689 = vpop.f32.mrf.mxu0
  %v690 = vadd.f32 0.0, %v689
  %v691 = vpop.f32.mrf.mxu0
  %v692 = vpop.f32.mrf.mxu0
  %v693 = vadd.f32 0.0, %v692
  %v694 = vpop.f32.mrf.mxu0
  %695 = vmatprep.mubr.bf16.mxu0 %v493
  %696 = vmatmul.mubr.bf16.gmra.mxu0 %v326
  %v697 = vpop.f32.mrf.mxu0
  %v698 = vadd.f32 0.0, %v697
  %v699 = vpop.f32.mrf.mxu0
  %v700 = vpop.f32.mrf.mxu0
  %v701 = vadd.f32 0.0, %v700
  %v702 = vpop.f32.mrf.mxu0
  %703 = vmatprep.mubr.bf16.mxu0 %v496
  %704 = vmatmul.mubr.bf16.gmra.mxu0 %v328
  %v705 = vpop.f32.mrf.mxu0
  %v706 = vadd.f32 0.0, %v705
  %v707 = vpop.f32.mrf.mxu0
  %v708 = vpop.f32.mrf.mxu0
  %v709 = vadd.f32 0.0, %v708
  %v710 = vpop.f32.mrf.mxu0
  %711 = vmatprep.mubr.bf16.mxu0 %v499
  %712 = vmatmul.mubr.bf16.gmra.mxu0 %v330
  %v713 = vpop.f32.mrf.mxu0
  %v714 = vadd.f32 0.0, %v713
  %v715 = vpop.f32.mrf.mxu0
  %v716 = vpop.f32.mrf.mxu0
  %v717 = vadd.f32 0.0, %v716
  %v718 = vpop.f32.mrf.mxu0
  %719 = vmatprep.mubr.bf16.mxu0 %v502
  %720 = vmatmul.mubr.bf16.gmra.mxu0 %v332
  %v721 = vpop.f32.mrf.mxu0
  %v722 = vadd.f32 0.0, %v721
  %v723 = vpop.f32.mrf.mxu0
  %v724 = vpop.f32.mrf.mxu0
  %v725 = vadd.f32 0.0, %v724
  %v726 = vpop.f32.mrf.mxu0
  %727 = vmatprep.mubr.bf16.mxu0 %v505
  %728 = vmatmul.mubr.bf16.gmra.mxu0 %v334
  %v729 = vpop.f32.mrf.mxu0
  %v730 = vadd.f32 0.0, %v729
  %v731 = vpop.f32.mrf.mxu0
  %v732 = vpop.f32.mrf.mxu0
  %v733 = vadd.f32 0.0, %v732
  %v734 = vpop.f32.mrf.mxu0
  %735 = vmatprep.mubr.bf16.mxu0 %v508
  %736 = vmatmul.mubr.bf16.gmra.mxu0 %v336
  %v737 = vpop.f32.mrf.mxu0
  %v738 = vadd.f32 0.0, %v737
  %v739 = vpop.f32.mrf.mxu0
  %v740 = vpop.f32.mrf.mxu0
  %v741 = vadd.f32 0.0, %v740
  %v742 = vpop.f32.mrf.mxu0
  %743 = vmatprep.mubr.bf16.mxu0 %v511
  %744 = vmatmul.mubr.bf16.gmra.mxu0 %v338
  %v745 = vpop.f32.mrf.mxu0
  %v746 = vadd.f32 0.0, %v745
  %v747 = vpop.f32.mrf.mxu0
  %v748 = vpop.f32.mrf.mxu0
  %v749 = vadd.f32 0.0, %v748
  %v750 = vpop.f32.mrf.mxu0
  %751 = vmatprep.mubr.bf16.mxu0 %v514
  %752 = vmatmul.mubr.bf16.gmra.mxu0 %v340
  %v753 = vpop.f32.mrf.mxu0
  %v754 = vadd.f32 0.0, %v753
  %v755 = vpop.f32.mrf.mxu0
  %v756 = vpop.f32.mrf.mxu0
  %v757 = vadd.f32 0.0, %v756
  %v758 = vpop.f32.mrf.mxu0
  %759 = vmatprep.mubr.bf16.mxu0 %v517
  %760 = vmatmul.mubr.bf16.gmra.mxu0 %v342
  %v761 = vpop.f32.mrf.mxu0
  %v762 = vadd.f32 0.0, %v761
  %v763 = vpop.f32.mrf.mxu0
  %v764 = vpop.f32.mrf.mxu0
  %v765 = vadd.f32 0.0, %v764
  %v766 = vpop.f32.mrf.mxu0
  %767 = vmatprep.mubr.bf16.mxu0 %v520
  %768 = vmatmul.mubr.bf16.gmra.mxu0 %v344
  %v769 = vpop.f32.mrf.mxu0
  %v770 = vadd.f32 0.0, %v769
  %v771 = vpop.f32.mrf.mxu0
  %v772 = vpop.f32.mrf.mxu0
  %v773 = vadd.f32 0.0, %v772
  %v774 = vpop.f32.mrf.mxu0
  %775 = vmatprep.mubr.bf16.mxu0 %v523
  %776 = vmatmul.mubr.bf16.gmra.mxu0 %v346
  %v777 = vpop.f32.mrf.mxu0
  %v778 = vadd.f32 0.0, %v777
  %v779 = vpop.f32.mrf.mxu0
  %v780 = vpop.f32.mrf.mxu0
  %v781 = vadd.f32 0.0, %v780
  %v782 = vpop.f32.mrf.mxu0
  %783 = vmatprep.mubr.bf16.mxu0 %v526
  %784 = vmatmul.mubr.bf16.gmra.mxu0 %v348
  %v785 = vpop.f32.mrf.mxu0
  %v786 = vadd.f32 0.0, %v785
  %v787 = vpop.f32.mrf.mxu0
  %v788 = vpop.f32.mrf.mxu0
  %v789 = vadd.f32 0.0, %v788
  %v790 = vpop.f32.mrf.mxu0
  %791 = vmatprep.mubr.bf16.mxu0 %v529
  %792 = vmatmul.mubr.bf16.gmra.mxu0 %v350
  %v793 = vpop.f32.mrf.mxu0
  %v794 = vadd.f32 0.0, %v793
  %v795 = vpop.f32.mrf.mxu0
  %v796 = vpop.f32.mrf.mxu0
  %v797 = vadd.f32 0.0, %v796
  %v798 = vpop.f32.mrf.mxu0
  %799 = vmatprep.mubr.bf16.mxu0 %v532
  %800 = vmatmul.mubr.bf16.gmra.mxu0 %v352
  %v801 = vpop.f32.mrf.mxu0
  %v802 = vadd.f32 0.0, %v801
  %v803 = vpop.f32.mrf.mxu0
  %v804 = vpop.f32.mrf.mxu0
  %v805 = vadd.f32 0.0, %v804
  %v806 = vpop.f32.mrf.mxu0
  %807 = vmatprep.mubr.bf16.mxu0 %v535
  %808 = vmatmul.mubr.bf16.gmra.mxu0 %v354
  %v809 = vpop.f32.mrf.mxu0
  %v810 = vadd.f32 0.0, %v809
  %v811 = vpop.f32.mrf.mxu0
  %v812 = vpop.f32.mrf.mxu0
  %v813 = vadd.f32 0.0, %v812
  %v814 = vpop.f32.mrf.mxu0
  %815 = vmatprep.mubr.bf16.mxu0 %v538
  %816 = vmatmul.mubr.bf16.gmra.mxu0 %v356
  %v817 = vpop.f32.mrf.mxu0
  %v818 = vadd.f32 0.0, %v817
  %v819 = vpop.f32.mrf.mxu0
  %v820 = vpop.f32.mrf.mxu0
  %v821 = vadd.f32 0.0, %v820
  %v822 = vpop.f32.mrf.mxu0
  %823 = vmatprep.mubr.bf16.mxu0 %v541
  %824 = vmatmul.mubr.bf16.gmra.mxu0 %v358
  %v825 = vpop.f32.mrf.mxu0
  %v826 = vadd.f32 0.0, %v825
  %v827 = vpop.f32.mrf.mxu0
  %v828 = vpop.f32.mrf.mxu0
  %v829 = vadd.f32 0.0, %v828
  %v830 = vpop.f32.mrf.mxu0
  %831 = vdwg.mxu0
  %vm832 = vcmask 261120
  %833 = vst.msk [vmem:[%s2] sm:$0xff] %vm832, %v578
  %834 = vst.msk [vmem:[%s2 + $0x8] sm:$0xff] %vm832, %v581
  %835 = vst.msk [vmem:[%s2 + $0x10] sm:$0xff] %vm832, %v586
  %836 = vst.msk [vmem:[%s2 + $0x18] sm:$0xff] %vm832, %v589
  %837 = vst.msk [vmem:[%s2 + $0x20] sm:$0xff] %vm832, %v594
  %838 = vst.msk [vmem:[%s2 + $0x28] sm:$0xff] %vm832, %v597
  %839 = vst.msk [vmem:[%s2 + $0x30] sm:$0xff] %vm832, %v602
  %840 = vst.msk [vmem:[%s2 + $0x38] sm:$0xff] %vm832, %v605
  %841 = vst.msk [vmem:[%s2 + $0x40] sm:$0xff] %vm832, %v610
  %842 = vst.msk [vmem:[%s2 + $0x48] sm:$0xff] %vm832, %v613
  %843 = vst.msk [vmem:[%s2 + $0x50] sm:$0xff] %vm832, %v618
  %844 = vst.msk [vmem:[%s2 + $0x58] sm:$0xff] %vm832, %v621
  %845 = vst.msk [vmem:[%s2 + $0x60] sm:$0xff] %vm832, %v626
  %846 = vst.msk [vmem:[%s2 + $0x68] sm:$0xff] %vm832, %v629
  %847 = vst.msk [vmem:[%s2 + $0x70] sm:$0xff] %vm832, %v634
  %848 = vst.msk [vmem:[%s2 + $0x78] sm:$0xff] %vm832, %v637
  %849 = vst.msk [vmem:[%s2 + $0x80] sm:$0xff] %vm832, %v642
  %850 = vst.msk [vmem:[%s2 + $0x88] sm:$0xff] %vm832, %v645
  %851 = vst.msk [vmem:[%s2 + $0x90] sm:$0xff] %vm832, %v650
  %852 = vst.msk [vmem:[%s2 + $0x98] sm:$0xff] %vm832, %v653
  %853 = vst.msk [vmem:[%s2 + $0xa0] sm:$0xff] %vm832, %v658
  %854 = vst.msk [vmem:[%s2 + $0xa8] sm:$0xff] %vm832, %v661
  %855 = vst.msk [vmem:[%s2 + $0xb0] sm:$0xff] %vm832, %v666
  %856 = vst.msk [vmem:[%s2 + $0xb8] sm:$0xff] %vm832, %v669
  %857 = vst.msk [vmem:[%s2 + $0xc0] sm:$0xff] %vm832, %v674
  %858 = vst.msk [vmem:[%s2 + $0xc8] sm:$0xff] %vm832, %v677
  %859 = vst.msk [vmem:[%s2 + $0xd0] sm:$0xff] %vm832, %v682
  %860 = vst.msk [vmem:[%s2 + $0xd8] sm:$0xff] %vm832, %v685
  %861 = vst.msk [vmem:[%s2 + $0xe0] sm:$0xff] %vm832, %v690
  %862 = vst.msk [vmem:[%s2 + $0xe8] sm:$0xff] %vm832, %v693
  %863 = vst.msk [vmem:[%s2 + $0xf0] sm:$0xff] %vm832, %v698
  %864 = vst.msk [vmem:[%s2 + $0xf8] sm:$0xff] %vm832, %v701
  %865 = vst.msk [vmem:[%s2 + $0x100] sm:$0xff] %vm832, %v706
  %866 = vst.msk [vmem:[%s2 + $0x108] sm:$0xff] %vm832, %v709
  %867 = vst.msk [vmem:[%s2 + $0x110] sm:$0xff] %vm832, %v714
  %868 = vst.msk [vmem:[%s2 + $0x118] sm:$0xff] %vm832, %v717
  %869 = vst.msk [vmem:[%s2 + $0x120] sm:$0xff] %vm832, %v722
  %870 = vst.msk [vmem:[%s2 + $0x128] sm:$0xff] %vm832, %v725
  %871 = vst.msk [vmem:[%s2 + $0x130] sm:$0xff] %vm832, %v730
  %872 = vst.msk [vmem:[%s2 + $0x138] sm:$0xff] %vm832, %v733
  %873 = vst.msk [vmem:[%s2 + $0x140] sm:$0xff] %vm832, %v738
  %874 = vst.msk [vmem:[%s2 + $0x148] sm:$0xff] %vm832, %v741
  %875 = vst.msk [vmem:[%s2 + $0x150] sm:$0xff] %vm832, %v746
  %876 = vst.msk [vmem:[%s2 + $0x158] sm:$0xff] %vm832, %v749
  %877 = vst.msk [vmem:[%s2 + $0x160] sm:$0xff] %vm832, %v754
  %878 = vst.msk [vmem:[%s2 + $0x168] sm:$0xff] %vm832, %v757
  %879 = vst.msk [vmem:[%s2 + $0x170] sm:$0xff] %vm832, %v762
  %880 = vst.msk [vmem:[%s2 + $0x178] sm:$0xff] %vm832, %v765
  %881 = vst.msk [vmem:[%s2 + $0x180] sm:$0xff] %vm832, %v770
  %882 = vst.msk [vmem:[%s2 + $0x188] sm:$0xff] %vm832, %v773
  %883 = vst.msk [vmem:[%s2 + $0x190] sm:$0xff] %vm832, %v778
  %884 = vst.msk [vmem:[%s2 + $0x198] sm:$0xff] %vm832, %v781
  %885 = vst.msk [vmem:[%s2 + $0x1a0] sm:$0xff] %vm832, %v786
  %886 = vst.msk [vmem:[%s2 + $0x1a8] sm:$0xff] %vm832, %v789
  %887 = vst.msk [vmem:[%s2 + $0x1b0] sm:$0xff] %vm832, %v794
  %888 = vst.msk [vmem:[%s2 + $0x1b8] sm:$0xff] %vm832, %v797
  %889 = vst.msk [vmem:[%s2 + $0x1c0] sm:$0xff] %vm832, %v802
  %890 = vst.msk [vmem:[%s2 + $0x1c8] sm:$0xff] %vm832, %v805
  %891 = vst.msk [vmem:[%s2 + $0x1d0] sm:$0xff] %vm832, %v810
  %892 = vst.msk [vmem:[%s2 + $0x1d8] sm:$0xff] %vm832, %v813
  %893 = vst.msk [vmem:[%s2 + $0x1e0] sm:$0xff] %vm832, %v818
  %894 = vst.msk [vmem:[%s2 + $0x1e8] sm:$0xff] %vm832, %v821
  %895 = vst.msk [vmem:[%s2 + $0x1f0] sm:$0xff] %vm832, %v826
  %896 = vst.msk [vmem:[%s2 + $0x1f8] sm:$0xff] %vm832, %v829
  %v897 = vld [vmem:[%s3] sm:$0x1]
  %v898 = vsel %vm832, %v578, 0.0
  %v899 = vsel %vm832, %v581, 0.0
  %v900 = vadd.f32 %v898, %v899
  %v901 = vsel %vm832, %v586, 0.0
  %v902 = vadd.f32 %v900, %v901
  %v903 = vsel %vm832, %v589, 0.0
  %v904 = vadd.f32 %v902, %v903
  %v905 = vsel %vm832, %v594, 0.0
  %v906 = vadd.f32 %v904, %v905
  %v907 = vsel %vm832, %v597, 0.0
  %v908 = vadd.f32 %v906, %v907
  %v909 = vsel %vm832, %v602, 0.0
  %v910 = vadd.f32 %v908, %v909
  %v911 = vsel %vm832, %v605, 0.0
  %v912 = vadd.f32 %v910, %v911
  %v913 = vsel %vm832, %v610, 0.0
  %v914 = vadd.f32 %v912, %v913
  %v915 = vsel %vm832, %v613, 0.0
  %v916 = vadd.f32 %v914, %v915
  %v917 = vsel %vm832, %v618, 0.0
  %v918 = vadd.f32 %v916, %v917
  %v919 = vsel %vm832, %v621, 0.0
  %v920 = vadd.f32 %v918, %v919
  %v921 = vsel %vm832, %v626, 0.0
  %v922 = vadd.f32 %v920, %v921
  %v923 = vsel %vm832, %v629, 0.0
  %v924 = vadd.f32 %v922, %v923
  %v925 = vsel %vm832, %v634, 0.0
  %v926 = vadd.f32 %v924, %v925
  %v927 = vsel %vm832, %v637, 0.0
  %v928 = vadd.f32 %v926, %v927
  %v929 = vsel %vm832, %v642, 0.0
  %v930 = vadd.f32 %v928, %v929
  %v931 = vsel %vm832, %v645, 0.0
  %v932 = vadd.f32 %v930, %v931
  %v933 = vsel %vm832, %v650, 0.0
  %v934 = vadd.f32 %v932, %v933
  %v935 = vsel %vm832, %v653, 0.0
  %v936 = vadd.f32 %v934, %v935
  %v937 = vsel %vm832, %v658, 0.0
  %v938 = vadd.f32 %v936, %v937
  %v939 = vsel %vm832, %v661, 0.0
  %v940 = vadd.f32 %v938, %v939
  %v941 = vsel %vm832, %v666, 0.0
  %v942 = vadd.f32 %v940, %v941
  %v943 = vsel %vm832, %v669, 0.0
  %v944 = vadd.f32 %v942, %v943
  %v945 = vsel %vm832, %v674, 0.0
  %v946 = vadd.f32 %v944, %v945
  %v947 = vsel %vm832, %v677, 0.0
  %v948 = vadd.f32 %v946, %v947
  %v949 = vsel %vm832, %v682, 0.0
  %v950 = vadd.f32 %v948, %v949
  %v951 = vsel %vm832, %v685, 0.0
  %v952 = vadd.f32 %v950, %v951
  %v953 = vsel %vm832, %v690, 0.0
  %v954 = vadd.f32 %v952, %v953
  %v955 = vsel %vm832, %v693, 0.0
  %v956 = vadd.f32 %v954, %v955
  %v957 = vsel %vm832, %v698, 0.0
  %v958 = vadd.f32 %v956, %v957
  %v959 = vsel %vm832, %v701, 0.0
  %v960 = vadd.f32 %v958, %v959
  %v961 = vsel %vm832, %v706, 0.0
  %v962 = vadd.f32 %v960, %v961
  %v963 = vsel %vm832, %v709, 0.0
  %v964 = vadd.f32 %v962, %v963
  %v965 = vsel %vm832, %v714, 0.0
  %v966 = vadd.f32 %v964, %v965
  %v967 = vsel %vm832, %v717, 0.0
  %v968 = vadd.f32 %v966, %v967
  %v969 = vsel %vm832, %v722, 0.0
  %v970 = vadd.f32 %v968, %v969
  %v971 = vsel %vm832, %v725, 0.0
  %v972 = vadd.f32 %v970, %v971
  %v973 = vsel %vm832, %v730, 0.0
  %v974 = vadd.f32 %v972, %v973
  %v975 = vsel %vm832, %v733, 0.0
  %v976 = vadd.f32 %v974, %v975
  %v977 = vsel %vm832, %v738, 0.0
  %v978 = vadd.f32 %v976, %v977
  %v979 = vsel %vm832, %v741, 0.0
  %v980 = vadd.f32 %v978, %v979
  %v981 = vsel %vm832, %v746, 0.0
  %v982 = vadd.f32 %v980, %v981
  %v983 = vsel %vm832, %v749, 0.0
  %v984 = vadd.f32 %v982, %v983
  %v985 = vsel %vm832, %v754, 0.0
  %v986 = vadd.f32 %v984, %v985
  %v987 = vsel %vm832, %v757, 0.0
  %v988 = vadd.f32 %v986, %v987
  %v989 = vsel %vm832, %v762, 0.0
  %v990 = vadd.f32 %v988, %v989
  %v991 = vsel %vm832, %v765, 0.0
  %v992 = vadd.f32 %v990, %v991
  %v993 = vsel %vm832, %v770, 0.0
  %v994 = vadd.f32 %v992, %v993
  %v995 = vsel %vm832, %v773, 0.0
  %v996 = vadd.f32 %v994, %v995
  %v997 = vsel %vm832, %v778, 0.0
  %v998 = vadd.f32 %v996, %v997
  %v999 = vsel %vm832, %v781, 0.0
  %v1000 = vadd.f32 %v998, %v999
  %v1001 = vsel %vm832, %v786, 0.0
  %v1002 = vadd.f32 %v1000, %v1001
  %v1003 = vsel %vm832, %v789, 0.0
  %v1004 = vadd.f32 %v1002, %v1003
  %v1005 = vsel %vm832, %v794, 0.0
  %v1006 = vadd.f32 %v1004, %v1005
  %v1007 = vsel %vm832, %v797, 0.0
  %v1008 = vadd.f32 %v1006, %v1007
  %v1009 = vsel %vm832, %v802, 0.0
  %v1010 = vadd.f32 %v1008, %v1009
  %v1011 = vsel %vm832, %v805, 0.0
  %v1012 = vadd.f32 %v1010, %v1011
  %v1013 = vsel %vm832, %v810, 0.0
  %v1014 = vadd.f32 %v1012, %v1013
  %v1015 = vsel %vm832, %v813, 0.0
  %v1016 = vadd.f32 %v1014, %v1015
  %v1017 = vsel %vm832, %v818, 0.0
  %v1018 = vadd.f32 %v1016, %v1017
  %v1019 = vsel %vm832, %v821, 0.0
  %v1020 = vadd.f32 %v1018, %v1019
  %v1021 = vsel %vm832, %v826, 0.0
  %v1022 = vadd.f32 %v1020, %v1021
  %v1023 = vsel %vm832, %v829, 0.0
  %v1024 = vadd.f32 %v1022, %v1023
  %v1025 = vrot.slane %v1024, 4
  %v1026 = vadd.f32 %v1024, %v1025
  %v1027 = vrot.slane %v1026, 2
  %v1028 = vadd.f32 %v1026, %v1027
  %v1029 = vrot.slane %v1028, 1
  %v1030 = vadd.f32 %v1028, %v1029
  %v1031 = vadd.f32 %v897, %v1030
  %vm1032 = vcmask 253952
  %1033 = vst.msk [vmem:[%s3] sm:$0x1] %vm1032, %v1031
  %v1034 = vld [vmem:[%s4] sm:$0x1]
  %v1035 = vmul.f32 %v578, %v578
  %v1036 = vmul.f32 %v581, %v581
  %v1037 = vmul.f32 %v586, %v586
  %v1038 = vmul.f32 %v589, %v589
  %v1039 = vmul.f32 %v594, %v594
  %v1040 = vmul.f32 %v597, %v597
  %v1041 = vmul.f32 %v602, %v602
  %v1042 = vmul.f32 %v605, %v605
  %v1043 = vmul.f32 %v610, %v610
  %v1044 = vmul.f32 %v613, %v613
  %v1045 = vmul.f32 %v618, %v618
  %v1046 = vmul.f32 %v621, %v621
  %v1047 = vmul.f32 %v626, %v626
  %v1048 = vmul.f32 %v629, %v629
  %v1049 = vmul.f32 %v634, %v634
  %v1050 = vmul.f32 %v637, %v637
  %v1051 = vmul.f32 %v642, %v642
  %v1052 = vmul.f32 %v645, %v645
  %v1053 = vmul.f32 %v650, %v650
  %v1054 = vmul.f32 %v653, %v653
  %v1055 = vmul.f32 %v658, %v658
  %v1056 = vmul.f32 %v661, %v661
  %v1057 = vmul.f32 %v666, %v666
  %v1058 = vmul.f32 %v669, %v669
  %v1059 = vmul.f32 %v674, %v674
  %v1060 = vmul.f32 %v677, %v677
  %v1061 = vmul.f32 %v682, %v682
  %v1062 = vmul.f32 %v685, %v685
  %v1063 = vmul.f32 %v690, %v690
  %v1064 = vmul.f32 %v693, %v693
  %v1065 = vmul.f32 %v698, %v698
  %v1066 = vmul.f32 %v701, %v701
  %v1067 = vmul.f32 %v706, %v706
  %v1068 = vmul.f32 %v709, %v709
  %v1069 = vmul.f32 %v714, %v714
  %v1070 = vmul.f32 %v717, %v717
  %v1071 = vmul.f32 %v722, %v722
  %v1072 = vmul.f32 %v725, %v725
  %v1073 = vmul.f32 %v730, %v730
  %v1074 = vmul.f32 %v733, %v733
  %v1075 = vmul.f32 %v738, %v738
  %v1076 = vmul.f32 %v741, %v741
  %v1077 = vmul.f32 %v746, %v746
  %v1078 = vmul.f32 %v749, %v749
  %v1079 = vmul.f32 %v754, %v754
  %v1080 = vmul.f32 %v757, %v757
  %v1081 = vmul.f32 %v762, %v762
  %v1082 = vmul.f32 %v765, %v765
  %v1083 = vmul.f32 %v770, %v770
  %v1084 = vmul.f32 %v773, %v773
  %v1085 = vmul.f32 %v778, %v778
  %v1086 = vmul.f32 %v781, %v781
  %v1087 = vmul.f32 %v786, %v786
  %v1088 = vmul.f32 %v789, %v789
  %v1089 = vmul.f32 %v794, %v794
  %v1090 = vmul.f32 %v797, %v797
  %v1091 = vmul.f32 %v802, %v802
  %v1092 = vmul.f32 %v805, %v805
  %v1093 = vmul.f32 %v810, %v810
  %v1094 = vmul.f32 %v813, %v813
  %v1095 = vmul.f32 %v818, %v818
  %v1096 = vmul.f32 %v821, %v821
  %v1097 = vmul.f32 %v826, %v826
  %v1098 = vmul.f32 %v829, %v829
  %v1099 = vsel %vm832, %v1035, 0.0
  %v1100 = vsel %vm832, %v1036, 0.0
  %v1101 = vadd.f32 %v1099, %v1100
  %v1102 = vsel %vm832, %v1037, 0.0
  %v1103 = vadd.f32 %v1101, %v1102
  %v1104 = vsel %vm832, %v1038, 0.0
  %v1105 = vadd.f32 %v1103, %v1104
  %v1106 = vsel %vm832, %v1039, 0.0
  %v1107 = vadd.f32 %v1105, %v1106
  %v1108 = vsel %vm832, %v1040, 0.0
  %v1109 = vadd.f32 %v1107, %v1108
  %v1110 = vsel %vm832, %v1041, 0.0
  %v1111 = vadd.f32 %v1109, %v1110
  %v1112 = vsel %vm832, %v1042, 0.0
  %v1113 = vadd.f32 %v1111, %v1112
  %v1114 = vsel %vm832, %v1043, 0.0
  %v1115 = vadd.f32 %v1113, %v1114
  %v1116 = vsel %vm832, %v1044, 0.0
  %v1117 = vadd.f32 %v1115, %v1116
  %v1118 = vsel %vm832, %v1045, 0.0
  %v1119 = vadd.f32 %v1117, %v1118
  %v1120 = vsel %vm832, %v1046, 0.0
  %v1121 = vadd.f32 %v1119, %v1120
  %v1122 = vsel %vm832, %v1047, 0.0
  %v1123 = vadd.f32 %v1121, %v1122
  %v1124 = vsel %vm832, %v1048, 0.0
  %v1125 = vadd.f32 %v1123, %v1124
  %v1126 = vsel %vm832, %v1049, 0.0
  %v1127 = vadd.f32 %v1125, %v1126
  %v1128 = vsel %vm832, %v1050, 0.0
  %v1129 = vadd.f32 %v1127, %v1128
  %v1130 = vsel %vm832, %v1051, 0.0
  %v1131 = vadd.f32 %v1129, %v1130
  %v1132 = vsel %vm832, %v1052, 0.0
  %v1133 = vadd.f32 %v1131, %v1132
  %v1134 = vsel %vm832, %v1053, 0.0
  %v1135 = vadd.f32 %v1133, %v1134
  %v1136 = vsel %vm832, %v1054, 0.0
  %v1137 = vadd.f32 %v1135, %v1136
  %v1138 = vsel %vm832, %v1055, 0.0
  %v1139 = vadd.f32 %v1137, %v1138
  %v1140 = vsel %vm832, %v1056, 0.0
  %v1141 = vadd.f32 %v1139, %v1140
  %v1142 = vsel %vm832, %v1057, 0.0
  %v1143 = vadd.f32 %v1141, %v1142
  %v1144 = vsel %vm832, %v1058, 0.0
  %v1145 = vadd.f32 %v1143, %v1144
  %v1146 = vsel %vm832, %v1059, 0.0
  %v1147 = vadd.f32 %v1145, %v1146
  %v1148 = vsel %vm832, %v1060, 0.0
  %v1149 = vadd.f32 %v1147, %v1148
  %v1150 = vsel %vm832, %v1061, 0.0
  %v1151 = vadd.f32 %v1149, %v1150
  %v1152 = vsel %vm832, %v1062, 0.0
  %v1153 = vadd.f32 %v1151, %v1152
  %v1154 = vsel %vm832, %v1063, 0.0
  %v1155 = vadd.f32 %v1153, %v1154
  %v1156 = vsel %vm832, %v1064, 0.0
  %v1157 = vadd.f32 %v1155, %v1156
  %v1158 = vsel %vm832, %v1065, 0.0
  %v1159 = vadd.f32 %v1157, %v1158
  %v1160 = vsel %vm832, %v1066, 0.0
  %v1161 = vadd.f32 %v1159, %v1160
  %v1162 = vsel %vm832, %v1067, 0.0
  %v1163 = vadd.f32 %v1161, %v1162
  %v1164 = vsel %vm832, %v1068, 0.0
  %v1165 = vadd.f32 %v1163, %v1164
  %v1166 = vsel %vm832, %v1069, 0.0
  %v1167 = vadd.f32 %v1165, %v1166
  %v1168 = vsel %vm832, %v1070, 0.0
  %v1169 = vadd.f32 %v1167, %v1168
  %v1170 = vsel %vm832, %v1071, 0.0
  %v1171 = vadd.f32 %v1169, %v1170
  %v1172 = vsel %vm832, %v1072, 0.0
  %v1173 = vadd.f32 %v1171, %v1172
  %v1174 = vsel %vm832, %v1073, 0.0
  %v1175 = vadd.f32 %v1173, %v1174
  %v1176 = vsel %vm832, %v1074, 0.0
  %v1177 = vadd.f32 %v1175, %v1176
  %v1178 = vsel %vm832, %v1075, 0.0
  %v1179 = vadd.f32 %v1177, %v1178
  %v1180 = vsel %vm832, %v1076, 0.0
  %v1181 = vadd.f32 %v1179, %v1180
  %v1182 = vsel %vm832, %v1077, 0.0
  %v1183 = vadd.f32 %v1181, %v1182
  %v1184 = vsel %vm832, %v1078, 0.0
  %v1185 = vadd.f32 %v1183, %v1184
  %v1186 = vsel %vm832, %v1079, 0.0
  %v1187 = vadd.f32 %v1185, %v1186
  %v1188 = vsel %vm832, %v1080, 0.0
  %v1189 = vadd.f32 %v1187, %v1188
  %v1190 = vsel %vm832, %v1081, 0.0
  %v1191 = vadd.f32 %v1189, %v1190
  %v1192 = vsel %vm832, %v1082, 0.0
  %v1193 = vadd.f32 %v1191, %v1192
  %v1194 = vsel %vm832, %v1083, 0.0
  %v1195 = vadd.f32 %v1193, %v1194
  %v1196 = vsel %vm832, %v1084, 0.0
  %v1197 = vadd.f32 %v1195, %v1196
  %v1198 = vsel %vm832, %v1085, 0.0
  %v1199 = vadd.f32 %v1197, %v1198
  %v1200 = vsel %vm832, %v1086, 0.0
  %v1201 = vadd.f32 %v1199, %v1200
  %v1202 = vsel %vm832, %v1087, 0.0
  %v1203 = vadd.f32 %v1201, %v1202
  %v1204 = vsel %vm832, %v1088, 0.0
  %v1205 = vadd.f32 %v1203, %v1204
  %v1206 = vsel %vm832, %v1089, 0.0
  %v1207 = vadd.f32 %v1205, %v1206
  %v1208 = vsel %vm832, %v1090, 0.0
  %v1209 = vadd.f32 %v1207, %v1208
  %v1210 = vsel %vm832, %v1091, 0.0
  %v1211 = vadd.f32 %v1209, %v1210
  %v1212 = vsel %vm832, %v1092, 0.0
  %v1213 = vadd.f32 %v1211, %v1212
  %v1214 = vsel %vm832, %v1093, 0.0
  %v1215 = vadd.f32 %v1213, %v1214
  %v1216 = vsel %vm832, %v1094, 0.0
  %v1217 = vadd.f32 %v1215, %v1216
  %v1218 = vsel %vm832, %v1095, 0.0
  %v1219 = vadd.f32 %v1217, %v1218
  %v1220 = vsel %vm832, %v1096, 0.0
  %v1221 = vadd.f32 %v1219, %v1220
  %v1222 = vsel %vm832, %v1097, 0.0
  %v1223 = vadd.f32 %v1221, %v1222
  %v1224 = vsel %vm832, %v1098, 0.0
  %v1225 = vadd.f32 %v1223, %v1224
  %v1226 = vrot.slane %v1225, 4
  %v1227 = vadd.f32 %v1225, %v1226
  %v1228 = vrot.slane %v1227, 2
  %v1229 = vadd.f32 %v1227, %v1228
  %v1230 = vrot.slane %v1229, 1
  %v1231 = vadd.f32 %v1229, %v1230
  %v1232 = vadd.f32 %v1034, %v1231
  %1233 = vst.msk [vmem:[%s4] sm:$0x1] %vm1032, %v1232
  // Predicated region
  $region14: #{generator_forward.15} parent=0 // pred_check
    _
  $region15: #{generator_forward.15} parent=0 // pred_check_branch
    %1235 = sbr.rel (0) target = $region17
  $region16: #{generator_forward.15} parent=0 // pred_region
    _
  $region17: #{generator_forward.15} parent=0 // pred_fallthru
    _
  // Predicated region
  $region18: #{generator_forward.15} parent=0 // pred_check
    _
  $region19: #{generator_forward.15} parent=0 // pred_check_branch
    %1237 = sbr.rel (0) target = $region21
  $region20: #{generator_forward.15} parent=0 // pred_region
    _
  $region21: #{generator_forward.15} parent=0 // pred_fallthru
    _
  // Predicated region
  $region22: #{generator_forward.15} parent=0 // pred_check
    _
  $region23: #{generator_forward.15} parent=0 // pred_check_branch
    %1239 = sbr.rel (0) target = $region25
  $region24: #{generator_forward.15} parent=0 // pred_region
    _
  $region25: #{generator_forward.15} parent=0 // pred_fallthru
    _
  // Predicated region
  $region26: #{generator_forward.15} parent=0 // pred_check
    _
  $region27: #{generator_forward.15} parent=0 // pred_check_branch
    %1241 = sbr.rel (0) target = $region29
  $region28: #{generator_forward.15} parent=0 // pred_region
    _
  $region29: #{generator_forward.15} parent=0 // pred_fallthru
    _
  // Predicated region
  $region30: #{generator_forward.15} parent=0 // pred_check
    _
  $region31: #{generator_forward.15} parent=0 // pred_check_branch
    %1243 = sbr.rel (0) target = $region33
  $region32: #{generator_forward.15} parent=0 // pred_region
    _
  $region33: #{generator_forward.15} parent=0 // pred_fallthru
    _
  // Predicated region
  $region34: #{generator_forward.15} parent=0 // pred_check
    _
  $region35: #{generator_forward.15} parent=0 // pred_check_branch
    %1245 = sbr.rel (0) target = $region37
  $region36: #{generator_forward.15} parent=0 // pred_region
    _
  $region37: #{generator_forward.15} parent=0 // pred_fallthru
    _

// kernel: generator_forward.16
$region0: #{generator_forward.16}
  #allocation0 [shape = 'u32[]', space=smem, size = 0x4, offset = 0x4, fixed_abs, tag = 'smem constant byte address 0x4 - core index']
  #allocation1 [shape = 'u32[144,128]{1,0:T(1,128)}', space=vmem, size = 0x12000, scoped, tag = 'internal scratch']
  %s0 = inlined_call_operand.vmem [shape: f32[512,32], index: 0, kind: input, shape index: {}]
  %s1 = inlined_call_operand.vmem [shape: f32[1,32], index: 1, kind: input, shape index: {}]
  %s2 = inlined_call_operand.vmem [shape: f32[1,32], index: 2, kind: input, shape index: {}]
  %s3 = inlined_call_operand.vmem [shape: bf16[512,32], index: 3, kind: output, shape index: {}]
  %s4 = sld [smem:[#allocation0]]
  $region22: #{generator_forward.16} parent=0
    _
  %s6 = ssub.s32 1, %s4
  %s7 = scalar_select 0, %s6, %s4
  // Predicated region
  $region2: #{generator_forward.16} parent=0 // pred_check
    _
  $region3: #{generator_forward.16} parent=0 // pred_check_branch
    %9 = sbr.rel (0) target = $region5
  $region4: #{generator_forward.16} parent=0 // pred_region
    _
  $region5: #{generator_forward.16} parent=0 // pred_fallthru
    _
  // Predicated region
  $region6: #{generator_forward.16} parent=0 // pred_check
    _
  $region7: #{generator_forward.16} parent=0 // pred_check_branch
    %11 = sbr.rel (0) target = $region9
  $region8: #{generator_forward.16} parent=0 // pred_region
    _
  $region9: #{generator_forward.16} parent=0 // pred_fallthru
    _
  // Predicated region
  $region10: #{generator_forward.16} parent=0 // pred_check
    _
  $region11: #{generator_forward.16} parent=0 // pred_check_branch
    %13 = sbr.rel (0) target = $region13
  $region12: #{generator_forward.16} parent=0 // pred_region
    _
  $region13: #{generator_forward.16} parent=0 // pred_fallthru
    _
  %v14 = vld [vmem:[%s0] sm:$0xff]
  %v15 = vld [vmem:[%s0 + $0x8] sm:$0xff]
  %v16 = vld [vmem:[%s0 + $0x10] sm:$0xff]
  %v17 = vld [vmem:[%s0 + $0x18] sm:$0xff]
  %v18 = vld [vmem:[%s0 + $0x20] sm:$0xff]
  %v19 = vld [vmem:[%s0 + $0x28] sm:$0xff]
  %v20 = vld [vmem:[%s0 + $0x30] sm:$0xff]
  %v21 = vld [vmem:[%s0 + $0x38] sm:$0xff]
  %v22 = vld [vmem:[%s0 + $0x40] sm:$0xff]
  %v23 = vld [vmem:[%s0 + $0x48] sm:$0xff]
  %v24 = vld [vmem:[%s0 + $0x50] sm:$0xff]
  %v25 = vld [vmem:[%s0 + $0x58] sm:$0xff]
  %v26 = vld [vmem:[%s0 + $0x60] sm:$0xff]
  %v27 = vld [vmem:[%s0 + $0x68] sm:$0xff]
  %v28 = vld [vmem:[%s0 + $0x70] sm:$0xff]
  %v29 = vld [vmem:[%s0 + $0x78] sm:$0xff]
  %v30 = vld [vmem:[%s0 + $0x80] sm:$0xff]
  %v31 = vld [vmem:[%s0 + $0x88] sm:$0xff]
  %v32 = vld [vmem:[%s0 + $0x90] sm:$0xff]
  %v33 = vld [vmem:[%s0 + $0x98] sm:$0xff]
  %v34 = vld [vmem:[%s0 + $0xa0] sm:$0xff]
  %v35 = vld [vmem:[%s0 + $0xa8] sm:$0xff]
  %v36 = vld [vmem:[%s0 + $0xb0] sm:$0xff]
  %v37 = vld [vmem:[%s0 + $0xb8] sm:$0xff]
  %v38 = vld [vmem:[%s0 + $0xc0] sm:$0xff]
  %v39 = vld [vmem:[%s0 + $0xc8] sm:$0xff]
  %v40 = vld [vmem:[%s0 + $0xd0] sm:$0xff]
  %v41 = vld [vmem:[%s0 + $0xd8] sm:$0xff]
  %v42 = vld [vmem:[%s0 + $0xe0] sm:$0xff]
  %v43 = vld [vmem:[%s0 + $0xe8] sm:$0xff]
  %v44 = vld [vmem:[%s0 + $0xf0] sm:$0xff]
  %v45 = vld [vmem:[%s0 + $0xf8] sm:$0xff]
  %v46 = vld [vmem:[%s0 + $0x100] sm:$0xff]
  %v47 = vld [vmem:[%s0 + $0x108] sm:$0xff]
  %v48 = vld [vmem:[%s0 + $0x110] sm:$0xff]
  %v49 = vld [vmem:[%s0 + $0x118] sm:$0xff]
  %v50 = vld [vmem:[%s0 + $0x120] sm:$0xff]
  %v51 = vld [vmem:[%s0 + $0x128] sm:$0xff]
  %v52 = vld [vmem:[%s0 + $0x130] sm:$0xff]
  %v53 = vld [vmem:[%s0 + $0x138] sm:$0xff]
  %v54 = vld [vmem:[%s0 + $0x140] sm:$0xff]
  %v55 = vld [vmem:[%s0 + $0x148] sm:$0xff]
  %v56 = vld [vmem:[%s0 + $0x150] sm:$0xff]
  %v57 = vld [vmem:[%s0 + $0x158] sm:$0xff]
  %v58 = vld [vmem:[%s0 + $0x160] sm:$0xff]
  %v59 = vld [vmem:[%s0 + $0x168] sm:$0xff]
  %v60 = vld [vmem:[%s0 + $0x170] sm:$0xff]
  %v61 = vld [vmem:[%s0 + $0x178] sm:$0xff]
  %v62 = vld [vmem:[%s0 + $0x180] sm:$0xff]
  %v63 = vld [vmem:[%s0 + $0x188] sm:$0xff]
  %v64 = vld [vmem:[%s0 + $0x190] sm:$0xff]
  %v65 = vld [vmem:[%s0 + $0x198] sm:$0xff]
  %v66 = vld [vmem:[%s0 + $0x1a0] sm:$0xff]
  %v67 = vld [vmem:[%s0 + $0x1a8] sm:$0xff]
  %v68 = vld [vmem:[%s0 + $0x1b0] sm:$0xff]
  %v69 = vld [vmem:[%s0 + $0x1b8] sm:$0xff]
  %v70 = vld [vmem:[%s0 + $0x1c0] sm:$0xff]
  %v71 = vld [vmem:[%s0 + $0x1c8] sm:$0xff]
  %v72 = vld [vmem:[%s0 + $0x1d0] sm:$0xff]
  %v73 = vld [vmem:[%s0 + $0x1d8] sm:$0xff]
  %v74 = vld [vmem:[%s0 + $0x1e0] sm:$0xff]
  %v75 = vld [vmem:[%s0 + $0x1e8] sm:$0xff]
  %v76 = vld [vmem:[%s0 + $0x1f0] sm:$0xff]
  %v77 = vld [vmem:[%s0 + $0x1f8] sm:$0xff]
  %v78 = vld [vmem:[%s1] sm:$0x1]
  %v80 = vlaneseq
  %v81 = vshrl.u32 %v80, 7
  %v82 = vsub.s32 0, %v81
  %v83 = vrot.slane %v78, %v82
  %v85 = vmul.f32 %v14, %v83
  %v86 = vmul.f32 %v15, %v83
  %v87 = vmul.f32 %v16, %v83
  %v88 = vmul.f32 %v17, %v83
  %v89 = vmul.f32 %v18, %v83
  %v90 = vmul.f32 %v19, %v83
  %v91 = vmul.f32 %v20, %v83
  %v92 = vmul.f32 %v21, %v83
  %v93 = vmul.f32 %v22, %v83
  %v94 = vmul.f32 %v23, %v83
  %v95 = vmul.f32 %v24, %v83
  %v96 = vmul.f32 %v25, %v83
  %v97 = vmul.f32 %v26, %v83
  %v98 = vmul.f32 %v27, %v83
  %v99 = vmul.f32 %v28, %v83
  %v100 = vmul.f32 %v29, %v83
  %v101 = vmul.f32 %v30, %v83
  %v102 = vmul.f32 %v31, %v83
  %v103 = vmul.f32 %v32, %v83
  %v104 = vmul.f32 %v33, %v83
  %v105 = vmul.f32 %v34, %v83
  %v106 = vmul.f32 %v35, %v83
  %v107 = vmul.f32 %v36, %v83
  %v108 = vmul.f32 %v37, %v83
  %v109 = vmul.f32 %v38, %v83
  %v110 = vmul.f32 %v39, %v83
  %v111 = vmul.f32 %v40, %v83
  %v112 = vmul.f32 %v41, %v83
  %v113 = vmul.f32 %v42, %v83
  %v114 = vmul.f32 %v43, %v83
  %v115 = vmul.f32 %v44, %v83
  %v116 = vmul.f32 %v45, %v83
  %v117 = vmul.f32 %v46, %v83
  %v118 = vmul.f32 %v47, %v83
  %v119 = vmul.f32 %v48, %v83
  %v120 = vmul.f32 %v49, %v83
  %v121 = vmul.f32 %v50, %v83
  %v122 = vmul.f32 %v51, %v83
  %v123 = vmul.f32 %v52, %v83
  %v124 = vmul.f32 %v53, %v83
  %v125 = vmul.f32 %v54, %v83
  %v126 = vmul.f32 %v55, %v83
  %v127 = vmul.f32 %v56, %v83
  %v128 = vmul.f32 %v57, %v83
  %v129 = vmul.f32 %v58, %v83
  %v130 = vmul.f32 %v59, %v83
  %v131 = vmul.f32 %v60, %v83
  %v132 = vmul.f32 %v61, %v83
  %v133 = vmul.f32 %v62, %v83
  %v134 = vmul.f32 %v63, %v83
  %v135 = vmul.f32 %v64, %v83
  %v136 = vmul.f32 %v65, %v83
  %v137 = vmul.f32 %v66, %v83
  %v138 = vmul.f32 %v67, %v83
  %v139 = vmul.f32 %v68, %v83
  %v140 = vmul.f32 %v69, %v83
  %v141 = vmul.f32 %v70, %v83
  %v142 = vmul.f32 %v71, %v83
  %v143 = vmul.f32 %v72, %v83
  %v144 = vmul.f32 %v73, %v83
  %v145 = vmul.f32 %v74, %v83
  %v146 = vmul.f32 %v75, %v83
  %v147 = vmul.f32 %v76, %v83
  %v148 = vmul.f32 %v77, %v83
  %v149 = vld [vmem:[%s2] sm:$0x1]
  %v151 = vlaneseq
  %v152 = vshrl.u32 %v151, 7
  %v153 = vsub.s32 0, %v152
  %v154 = vrot.slane %v149, %v153
  %v156 = vadd.f32 %v85, %v154
  %v157 = vadd.f32 %v86, %v154
  %v158 = vadd.f32 %v87, %v154
  %v159 = vadd.f32 %v88, %v154
  %v160 = vadd.f32 %v89, %v154
  %v161 = vadd.f32 %v90, %v154
  %v162 = vadd.f32 %v91, %v154
  %v163 = vadd.f32 %v92, %v154
  %v164 = vadd.f32 %v93, %v154
  %v165 = vadd.f32 %v94, %v154
  %v166 = vadd.f32 %v95, %v154
  %v167 = vadd.f32 %v96, %v154
  %v168 = vadd.f32 %v97, %v154
  %v169 = vadd.f32 %v98, %v154
  %v170 = vadd.f32 %v99, %v154
  %v171 = vadd.f32 %v100, %v154
  %v172 = vadd.f32 %v101, %v154
  %v173 = vadd.f32 %v102, %v154
  %v174 = vadd.f32 %v103, %v154
  %v175 = vadd.f32 %v104, %v154
  %v176 = vadd.f32 %v105, %v154
  %v177 = vadd.f32 %v106, %v154
  %v178 = vadd.f32 %v107, %v154
  %v179 = vadd.f32 %v108, %v154
  %v180 = vadd.f32 %v109, %v154
  %v181 = vadd.f32 %v110, %v154
  %v182 = vadd.f32 %v111, %v154
  %v183 = vadd.f32 %v112, %v154
  %v184 = vadd.f32 %v113, %v154
  %v185 = vadd.f32 %v114, %v154
  %v186 = vadd.f32 %v115, %v154
  %v187 = vadd.f32 %v116, %v154
  %v188 = vadd.f32 %v117, %v154
  %v189 = vadd.f32 %v118, %v154
  %v190 = vadd.f32 %v119, %v154
  %v191 = vadd.f32 %v120, %v154
  %v192 = vadd.f32 %v121, %v154
  %v193 = vadd.f32 %v122, %v154
  %v194 = vadd.f32 %v123, %v154
  %v195 = vadd.f32 %v124, %v154
  %v196 = vadd.f32 %v125, %v154
  %v197 = vadd.f32 %v126, %v154
  %v198 = vadd.f32 %v127, %v154
  %v199 = vadd.f32 %v128, %v154
  %v200 = vadd.f32 %v129, %v154
  %v201 = vadd.f32 %v130, %v154
  %v202 = vadd.f32 %v131, %v154
  %v203 = vadd.f32 %v132, %v154
  %v204 = vadd.f32 %v133, %v154
  %v205 = vadd.f32 %v134, %v154
  %v206 = vadd.f32 %v135, %v154
  %v207 = vadd.f32 %v136, %v154
  %v208 = vadd.f32 %v137, %v154
  %v209 = vadd.f32 %v138, %v154
  %v210 = vadd.f32 %v139, %v154
  %v211 = vadd.f32 %v140, %v154
  %v212 = vadd.f32 %v141, %v154
  %v213 = vadd.f32 %v142, %v154
  %v214 = vadd.f32 %v143, %v154
  %v215 = vadd.f32 %v144, %v154
  %v216 = vadd.f32 %v145, %v154
  %v217 = vadd.f32 %v146, %v154
  %v218 = vadd.f32 %v147, %v154
  %v219 = vadd.f32 %v148, %v154
  %v220 = vmax.f32 %v156, 0.0
  %v221 = vmax.f32 %v157, 0.0
  %v222 = vmax.f32 %v158, 0.0
  %v223 = vmax.f32 %v159, 0.0
  %v224 = vmax.f32 %v160, 0.0
  %v225 = vmax.f32 %v161, 0.0
  %v226 = vmax.f32 %v162, 0.0
  %v227 = vmax.f32 %v163, 0.0
  %v228 = vmax.f32 %v164, 0.0
  %v229 = vmax.f32 %v165, 0.0
  %v230 = vmax.f32 %v166, 0.0
  %v231 = vmax.f32 %v167, 0.0
  %v232 = vmax.f32 %v168, 0.0
  %v233 = vmax.f32 %v169, 0.0
  %v234 = vmax.f32 %v170, 0.0
  %v235 = vmax.f32 %v171, 0.0
  %v236 = vmax.f32 %v172, 0.0
  %v237 = vmax.f32 %v173, 0.0
  %v238 = vmax.f32 %v174, 0.0
  %v239 = vmax.f32 %v175, 0.0
  %v240 = vmax.f32 %v176, 0.0
  %v241 = vmax.f32 %v177, 0.0
  %v242 = vmax.f32 %v178, 0.0
  %v243 = vmax.f32 %v179, 0.0
  %v244 = vmax.f32 %v180, 0.0
  %v245 = vmax.f32 %v181, 0.0
  %v246 = vmax.f32 %v182, 0.0
  %v247 = vmax.f32 %v183, 0.0
  %v248 = vmax.f32 %v184, 0.0
  %v249 = vmax.f32 %v185, 0.0
  %v250 = vmax.f32 %v186, 0.0
  %v251 = vmax.f32 %v187, 0.0
  %v252 = vmax.f32 %v188, 0.0
  %v253 = vmax.f32 %v189, 0.0
  %v254 = vmax.f32 %v190, 0.0
  %v255 = vmax.f32 %v191, 0.0
  %v256 = vmax.f32 %v192, 0.0
  %v257 = vmax.f32 %v193, 0.0
  %v258 = vmax.f32 %v194, 0.0
  %v259 = vmax.f32 %v195, 0.0
  %v260 = vmax.f32 %v196, 0.0
  %v261 = vmax.f32 %v197, 0.0
  %v262 = vmax.f32 %v198, 0.0
  %v263 = vmax.f32 %v199, 0.0
  %v264 = vmax.f32 %v200, 0.0
  %v265 = vmax.f32 %v201, 0.0
  %v266 = vmax.f32 %v202, 0.0
  %v267 = vmax.f32 %v203, 0.0
  %v268 = vmax.f32 %v204, 0.0
  %v269 = vmax.f32 %v205, 0.0
  %v270 = vmax.f32 %v206, 0.0
  %v271 = vmax.f32 %v207, 0.0
  %v272 = vmax.f32 %v208, 0.0
  %v273 = vmax.f32 %v209, 0.0
  %v274 = vmax.f32 %v210, 0.0
  %v275 = vmax.f32 %v211, 0.0
  %v276 = vmax.f32 %v212, 0.0
  %v277 = vmax.f32 %v213, 0.0
  %v278 = vmax.f32 %v214, 0.0
  %v279 = vmax.f32 %v215, 0.0
  %v280 = vmax.f32 %v216, 0.0
  %v281 = vmax.f32 %v217, 0.0
  %v282 = vmax.f32 %v218, 0.0
  %v283 = vmax.f32 %v219, 0.0
  %v284 = vpack.c.bf16 %v221, %v220
  %v285 = vpack.c.bf16 %v223, %v222
  %v286 = vpack.c.bf16 %v225, %v224
  %v287 = vpack.c.bf16 %v227, %v226
  %v288 = vpack.c.bf16 %v229, %v228
  %v289 = vpack.c.bf16 %v231, %v230
  %v290 = vpack.c.bf16 %v233, %v232
  %v291 = vpack.c.bf16 %v235, %v234
  %v292 = vpack.c.bf16 %v237, %v236
  %v293 = vpack.c.bf16 %v239, %v238
  %v294 = vpack.c.bf16 %v241, %v240
  %v295 = vpack.c.bf16 %v243, %v242
  %v296 = vpack.c.bf16 %v245, %v244
  %v297 = vpack.c.bf16 %v247, %v246
  %v298 = vpack.c.bf16 %v249, %v248
  %v299 = vpack.c.bf16 %v251, %v250
  %v300 = vpack.c.bf16 %v253, %v252
  %v301 = vpack.c.bf16 %v255, %v254
  %v302 = vpack.c.bf16 %v257, %v256
  %v303 = vpack.c.bf16 %v259, %v258
  %v304 = vpack.c.bf16 %v261, %v260
  %v305 = vpack.c.bf16 %v263, %v262
  %v306 = vpack.c.bf16 %v265, %v264
  %v307 = vpack.c.bf16 %v267, %v266
  %v308 = vpack.c.bf16 %v269, %v268
  %v309 = vpack.c.bf16 %v271, %v270
  %v310 = vpack.c.bf16 %v273, %v272
  %v311 = vpack.c.bf16 %v275, %v274
  %v312 = vpack.c.bf16 %v277, %v276
  %v313 = vpack.c.bf16 %v279, %v278
  %v314 = vpack.c.bf16 %v281, %v280
  %v315 = vpack.c.bf16 %v283, %v282
  %v348 = vunpack.c.l.b16 %v284
  %v349 = vunpack.c.h.b16 %v284
  %v350 = vunpack.c.l.b16 %v285
  %v351 = vunpack.c.h.b16 %v285
  %v352 = vunpack.c.l.b16 %v286
  %v353 = vunpack.c.h.b16 %v286
  %v354 = vunpack.c.l.b16 %v287
  %v355 = vunpack.c.h.b16 %v287
  %v356 = vunpack.c.l.b16 %v288
  %v357 = vunpack.c.h.b16 %v288
  %v358 = vunpack.c.l.b16 %v289
  %v359 = vunpack.c.h.b16 %v289
  %v360 = vunpack.c.l.b16 %v290
  %v361 = vunpack.c.h.b16 %v290
  %v362 = vunpack.c.l.b16 %v291
  %v363 = vunpack.c.h.b16 %v291
  %v364 = vunpack.c.l.b16 %v292
  %v365 = vunpack.c.h.b16 %v292
  %v366 = vunpack.c.l.b16 %v293
  %v367 = vunpack.c.h.b16 %v293
  %v368 = vunpack.c.l.b16 %v294
  %v369 = vunpack.c.h.b16 %v294
  %v370 = vunpack.c.l.b16 %v295
  %v371 = vunpack.c.h.b16 %v295
  %v372 = vunpack.c.l.b16 %v296
  %v373 = vunpack.c.h.b16 %v296
  %v374 = vunpack.c.l.b16 %v297
  %v375 = vunpack.c.h.b16 %v297
  %v376 = vunpack.c.l.b16 %v298
  %v377 = vunpack.c.h.b16 %v298
  %v378 = vunpack.c.l.b16 %v299
  %v379 = vunpack.c.h.b16 %v299
  %v380 = vunpack.c.l.b16 %v300
  %v381 = vunpack.c.h.b16 %v300
  %v382 = vunpack.c.l.b16 %v301
  %v383 = vunpack.c.h.b16 %v301
  %v384 = vunpack.c.l.b16 %v302
  %v385 = vunpack.c.h.b16 %v302
  %v386 = vunpack.c.l.b16 %v303
  %v387 = vunpack.c.h.b16 %v303
  %v388 = vunpack.c.l.b16 %v304
  %v389 = vunpack.c.h.b16 %v304
  %v390 = vunpack.c.l.b16 %v305
  %v391 = vunpack.c.h.b16 %v305
  %v392 = vunpack.c.l.b16 %v306
  %v393 = vunpack.c.h.b16 %v306
  %v394 = vunpack.c.l.b16 %v307
  %v395 = vunpack.c.h.b16 %v307
  %v396 = vunpack.c.l.b16 %v308
  %v397 = vunpack.c.h.b16 %v308
  %v398 = vunpack.c.l.b16 %v309
  %v399 = vunpack.c.h.b16 %v309
  %v400 = vunpack.c.l.b16 %v310
  %v401 = vunpack.c.h.b16 %v310
  %v402 = vunpack.c.l.b16 %v311
  %v403 = vunpack.c.h.b16 %v311
  %v404 = vunpack.c.l.b16 %v312
  %v405 = vunpack.c.h.b16 %v312
  %v406 = vunpack.c.l.b16 %v313
  %v407 = vunpack.c.h.b16 %v313
  %v408 = vunpack.c.l.b16 %v314
  %v409 = vunpack.c.h.b16 %v314
  %v410 = vunpack.c.l.b16 %v315
  %v411 = vunpack.c.h.b16 %v315
  %v412 = vpack.c.b16 %v348, %v348
  %v413 = vpack.c.b16 %v349, %v349
  %v414 = vpack.c.b16 %v350, %v350
  %v415 = vpack.c.b16 %v351, %v351
  %v416 = vpack.c.b16 %v352, %v352
  %v417 = vpack.c.b16 %v353, %v353
  %v418 = vpack.c.b16 %v354, %v354
  %v419 = vpack.c.b16 %v355, %v355
  %v420 = vpack.c.b16 %v356, %v356
  %v421 = vpack.c.b16 %v357, %v357
  %v422 = vpack.c.b16 %v358, %v358
  %v423 = vpack.c.b16 %v359, %v359
  %v424 = vpack.c.b16 %v360, %v360
  %v425 = vpack.c.b16 %v361, %v361
  %v426 = vpack.c.b16 %v362, %v362
  %v427 = vpack.c.b16 %v363, %v363
  %v428 = vpack.c.b16 %v364, %v364
  %v429 = vpack.c.b16 %v365, %v365
  %v430 = vpack.c.b16 %v366, %v366
  %v431 = vpack.c.b16 %v367, %v367
  %v432 = vpack.c.b16 %v368, %v368
  %v433 = vpack.c.b16 %v369, %v369
  %v434 = vpack.c.b16 %v370, %v370
  %v435 = vpack.c.b16 %v371, %v371
  %v436 = vpack.c.b16 %v372, %v372
  %v437 = vpack.c.b16 %v373, %v373
  %v438 = vpack.c.b16 %v374, %v374
  %v439 = vpack.c.b16 %v375, %v375
  %v440 = vpack.c.b16 %v376, %v376
  %v441 = vpack.c.b16 %v377, %v377
  %v442 = vpack.c.b16 %v378, %v378
  %v443 = vpack.c.b16 %v379, %v379
  %v444 = vpack.c.b16 %v380, %v380
  %v445 = vpack.c.b16 %v381, %v381
  %v446 = vpack.c.b16 %v382, %v382
  %v447 = vpack.c.b16 %v383, %v383
  %v448 = vpack.c.b16 %v384, %v384
  %v449 = vpack.c.b16 %v385, %v385
  %v450 = vpack.c.b16 %v386, %v386
  %v451 = vpack.c.b16 %v387, %v387
  %v452 = vpack.c.b16 %v388, %v388
  %v453 = vpack.c.b16 %v389, %v389
  %v454 = vpack.c.b16 %v390, %v390
  %v455 = vpack.c.b16 %v391, %v391
  %v456 = vpack.c.b16 %v392, %v392
  %v457 = vpack.c.b16 %v393, %v393
  %v458 = vpack.c.b16 %v394, %v394
  %v459 = vpack.c.b16 %v395, %v395
  %v460 = vpack.c.b16 %v396, %v396
  %v461 = vpack.c.b16 %v397, %v397
  %v462 = vpack.c.b16 %v398, %v398
  %v463 = vpack.c.b16 %v399, %v399
  %v464 = vpack.c.b16 %v400, %v400
  %v465 = vpack.c.b16 %v401, %v401
  %v466 = vpack.c.b16 %v402, %v402
  %v467 = vpack.c.b16 %v403, %v403
  %v468 = vpack.c.b16 %v404, %v404
  %v469 = vpack.c.b16 %v405, %v405
  %v470 = vpack.c.b16 %v406, %v406
  %v471 = vpack.c.b16 %v407, %v407
  %v472 = vpack.c.b16 %v408, %v408
  %v473 = vpack.c.b16 %v409, %v409
  %v474 = vpack.c.b16 %v410, %v410
  %v475 = vpack.c.b16 %v411, %v411
  %vm540 = vcmask 257024
  %541 = vst.msk [vmem:[%s3] sm:$0xf] %vm540, %v412
  %542 = vst.msk [vmem:[%s3 + $0x4] sm:$0xf] %vm540, %v413
  %543 = vst.msk [vmem:[%s3 + $0x8] sm:$0xf] %vm540, %v414
  %544 = vst.msk [vmem:[%s3 + $0xc] sm:$0xf] %vm540, %v415
  %545 = vst.msk [vmem:[%s3 + $0x10] sm:$0xf] %vm540, %v416
  %546 = vst.msk [vmem:[%s3 + $0x14] sm:$0xf] %vm540, %v417
  %547 = vst.msk [vmem:[%s3 + $0x18] sm:$0xf] %vm540, %v418
  %548 = vst.msk [vmem:[%s3 + $0x1c] sm:$0xf] %vm540, %v419
  %549 = vst.msk [vmem:[%s3 + $0x20] sm:$0xf] %vm540, %v420
  %550 = vst.msk [vmem:[%s3 + $0x24] sm:$0xf] %vm540, %v421
  %551 = vst.msk [vmem:[%s3 + $0x28] sm:$0xf] %vm540, %v422
  %552 = vst.msk [vmem:[%s3 + $0x2c] sm:$0xf] %vm540, %v423
  %553 = vst.msk [vmem:[%s3 + $0x30] sm:$0xf] %vm540, %v424
  %554 = vst.msk [vmem:[%s3 + $0x34] sm:$0xf] %vm540, %v425
  %555 = vst.msk [vmem:[%s3 + $0x38] sm:$0xf] %vm540, %v426
  %556 = vst.msk [vmem:[%s3 + $0x3c] sm:$0xf] %vm540, %v427
  %557 = vst.msk [vmem:[%s3 + $0x40] sm:$0xf] %vm540, %v428
  %558 = vst.msk [vmem:[%s3 + $0x44] sm:$0xf] %vm540, %v429
  %559 = vst.msk [vmem:[%s3 + $0x48] sm:$0xf] %vm540, %v430
  %560 = vst.msk [vmem:[%s3 + $0x4c] sm:$0xf] %vm540, %v431
  %561 = vst.msk [vmem:[%s3 + $0x50] sm:$0xf] %vm540, %v432
  %562 = vst.msk [vmem:[%s3 + $0x54] sm:$0xf] %vm540, %v433
  %563 = vst.msk [vmem:[%s3 + $0x58] sm:$0xf] %vm540, %v434
  %564 = vst.msk [vmem:[%s3 + $0x5c] sm:$0xf] %vm540, %v435
  %565 = vst.msk [vmem:[%s3 + $0x60] sm:$0xf] %vm540, %v436
  %566 = vst.msk [vmem:[%s3 + $0x64] sm:$0xf] %vm540, %v437
  %567 = vst.msk [vmem:[%s3 + $0x68] sm:$0xf] %vm540, %v438
  %568 = vst.msk [vmem:[%s3 + $0x6c] sm:$0xf] %vm540, %v439
  %569 = vst.msk [vmem:[%s3 + $0x70] sm:$0xf] %vm540, %v440
  %570 = vst.msk [vmem:[%s3 + $0x74] sm:$0xf] %vm540, %v441
  %571 = vst.msk [vmem:[%s3 + $0x78] sm:$0xf] %vm540, %v442
  %572 = vst.msk [vmem:[%s3 + $0x7c] sm:$0xf] %vm540, %v443
  %573 = vst.msk [vmem:[%s3 + $0x80] sm:$0xf] %vm540, %v444
  %574 = vst.msk [vmem:[%s3 + $0x84] sm:$0xf] %vm540, %v445
  %575 = vst.msk [vmem:[%s3 + $0x88] sm:$0xf] %vm540, %v446
  %576 = vst.msk [vmem:[%s3 + $0x8c] sm:$0xf] %vm540, %v447
  %577 = vst.msk [vmem:[%s3 + $0x90] sm:$0xf] %vm540, %v448
  %578 = vst.msk [vmem:[%s3 + $0x94] sm:$0xf] %vm540, %v449
  %579 = vst.msk [vmem:[%s3 + $0x98] sm:$0xf] %vm540, %v450
  %580 = vst.msk [vmem:[%s3 + $0x9c] sm:$0xf] %vm540, %v451
  %581 = vst.msk [vmem:[%s3 + $0xa0] sm:$0xf] %vm540, %v452
  %582 = vst.msk [vmem:[%s3 + $0xa4] sm:$0xf] %vm540, %v453
  %583 = vst.msk [vmem:[%s3 + $0xa8] sm:$0xf] %vm540, %v454
  %584 = vst.msk [vmem:[%s3 + $0xac] sm:$0xf] %vm540, %v455
  %585 = vst.msk [vmem:[%s3 + $0xb0] sm:$0xf] %vm540, %v456
  %586 = vst.msk [vmem:[%s3 + $0xb4] sm:$0xf] %vm540, %v457
  %587 = vst.msk [vmem:[%s3 + $0xb8] sm:$0xf] %vm540, %v458
  %588 = vst.msk [vmem:[%s3 + $0xbc] sm:$0xf] %vm540, %v459
  %589 = vst.msk [vmem:[%s3 + $0xc0] sm:$0xf] %vm540, %v460
  %590 = vst.msk [vmem:[%s3 + $0xc4] sm:$0xf] %vm540, %v461
  %591 = vst.msk [vmem:[%s3 + $0xc8] sm:$0xf] %vm540, %v462
  %592 = vst.msk [vmem:[%s3 + $0xcc] sm:$0xf] %vm540, %v463
  %593 = vst.msk [vmem:[%s3 + $0xd0] sm:$0xf] %vm540, %v464
  %594 = vst.msk [vmem:[%s3 + $0xd4] sm:$0xf] %vm540, %v465
  %595 = vst.msk [vmem:[%s3 + $0xd8] sm:$0xf] %vm540, %v466
  %596 = vst.msk [vmem:[%s3 + $0xdc] sm:$0xf] %vm540, %v467
  %597 = vst.msk [vmem:[%s3 + $0xe0] sm:$0xf] %vm540, %v468
  %598 = vst.msk [vmem:[%s3 + $0xe4] sm:$0xf] %vm540, %v469
  %599 = vst.msk [vmem:[%s3 + $0xe8] sm:$0xf] %vm540, %v470
  %600 = vst.msk [vmem:[%s3 + $0xec] sm:$0xf] %vm540, %v471
  %601 = vst.msk [vmem:[%s3 + $0xf0] sm:$0xf] %vm540, %v472
  %602 = vst.msk [vmem:[%s3 + $0xf4] sm:$0xf] %vm540, %v473
  %603 = vst.msk [vmem:[%s3 + $0xf8] sm:$0xf] %vm540, %v474
  %604 = vst.msk [vmem:[%s3 + $0xfc] sm:$0xf] %vm540, %v475
  // Predicated region
  $region14: #{generator_forward.16} parent=0 // pred_check
    _
  $region15: #{generator_forward.16} parent=0 // pred_check_branch
    %606 = sbr.rel (0) target = $region17
  $region16: #{generator_forward.16} parent=0 // pred_region
    _
  $region17: #{generator_forward.16} parent=0 // pred_fallthru
    _
  // Predicated region
  $region18: #{generator_forward.16} parent=0 // pred_check
    _
  $region19: #{generator_forward.16} parent=0 // pred_check_branch
    %608 = sbr.rel (0) target = $region21
  $region20: #{generator_forward.16} parent=0 // pred_region
    _
  $region21: #{generator_forward.16} parent=0 // pred_fallthru
    _

// kernel: generator_forward.17
$region0: #{generator_forward.17}
  #allocation0 [shape = 'u32[]', space=smem, size = 0x4, offset = 0x4, fixed_abs, tag = 'smem constant byte address 0x4 - core index']
  #allocation1 [shape = 'u32[144,128]{1,0:T(1,128)}', space=vmem, size = 0x12000, scoped, tag = 'internal scratch']
  %s0 = inlined_call_operand.vmem [shape: bf16[2048,72], index: 0, kind: input, shape index: {}]
  %s1 = inlined_call_operand.vmem [shape: bf16[72,12], index: 1, kind: input, shape index: {}]
  %s2 = inlined_call_operand.vmem [shape: f32[2048,12], index: 2, kind: output, shape index: {}]
  %s3 = sld [smem:[#allocation0]]
  $region41: #{generator_forward.17} parent=0
    _
  %s5 = ssub.s32 1, %s3
  %s6 = scalar_select 0, %s5, %s3
  loop: start=0, step=1, limit=4
  $region2: #{generator_forward.17} parent=0 // loop_pre_header
    _
  $region3: #{generator_forward.17} parent=0 // loop_header
    %s8 = sphi 0, %s12
    %p9 = scmp.ge.s32.totalorder %s8, 4
    %s18 = sphi 0, %s20
    %s21 = sphi 0, %s18
    %s22 = sphi 0, %s21
    %s38 = sphi 0, %s22
    %s42 = sphi 0, %s42
    %s44 = sphi 0, %s42
    %s45 = sphi 0, %s44
    %s59 = sphi 0, %s45
    %s65 = sphi 0, %s67
    %s68 = sphi 0, %s65
    %s69 = sphi 0, %s68
    %s85 = sphi 0, %s69
  $region4: #{generator_forward.17} parent=0 // loop_header_branch
    %11 = sbr.rel (%p9) target = $region8
  $region5: #{generator_forward.17} parent=0 // loop_body
    %s13 = ssub.s32 %s8, 1
    %s14 = ssub.s32 %s8, 2
    %s15 = sadd.s32 %s8, 1
    %s16 = ssub.s32 %s8, %s15
    %p17 = scmp.eq.s32.totalorder %s16, 0
    %s19 = sadd.s32 %s18, 1
    %s20 = scalar_select %p17, %s18, %s19
    %p23 = pneg %p17
    %p24 = scmp.eq.s32.totalorder %s8, 1
    %p25 = por %p23, %p24
    %p26 = scmp.ne.s32.totalorder %s18, %s21
    %p27 = scmp.eq.s32.totalorder %s8, 0
    %p28 = por %p26, %p27
    %p29 = scmp.ne.s32.totalorder %s18, %s21
    %p30 = scmp.eq.s32.totalorder %s13, 1
    %p31 = por %p29, %p30
    %p32 = scmp.ne.s32.totalorder %s21, %s22
    %p33 = scmp.eq.s32.totalorder %s13, 0
    %p34 = por %p32, %p33
    %p35 = scmp.ne.s32.totalorder %s21, %s22
    %p36 = scmp.eq.s32.totalorder %s14, 1
    %p37 = por %p35, %p36
    %p39 = scmp.ne.s32.totalorder %s22, %s38
    %p40 = scmp.eq.s32.totalorder %s14, 0
    %p41 = por %p39, %p40
    %s43 = sadd.s32 %s42, 1
    %p46 = scmp.eq.s32.totalorder %s8, 1
    %p47 = scmp.ne.s32.totalorder %s42, %s44
    %p48 = scmp.eq.s32.totalorder %s8, 0
    %p49 = por %p47, %p48
    %p50 = scmp.ne.s32.totalorder %s42, %s44
    %p51 = scmp.eq.s32.totalorder %s13, 1
    %p52 = por %p50, %p51
    %p53 = scmp.ne.s32.totalorder %s44, %s45
    %p54 = scmp.eq.s32.totalorder %s13, 0
    %p55 = por %p53, %p54
    %p56 = scmp.ne.s32.totalorder %s44, %s45
    %p57 = scmp.eq.s32.totalorder %s14, 1
    %p58 = por %p56, %p57
    %p60 = scmp.ne.s32.totalorder %s45, %s59
    %p61 = scmp.eq.s32.totalorder %s14, 0
    %p62 = por %p60, %p61
    %s63 = ssub.s32 %s8, %s15
    %p64 = scmp.eq.s32.totalorder %s63, 0
    %s66 = sadd.s32 %s65, 1
    %s67 = scalar_select %p64, %s65, %s66
    %p70 = pneg %p64
    %p71 = scmp.eq.s32.totalorder %s8, 1
    %p72 = por %p70, %p71
    %p73 = scmp.ne.s32.totalorder %s65, %s68
    %p74 = scmp.eq.s32.totalorder %s8, 0
    %p75 = por %p73, %p74
    %p76 = scmp.ne.s32.totalorder %s65, %s68
    %p77 = scmp.eq.s32.totalorder %s13, 1
    %p78 = por %p76, %p77
    %p79 = scmp.ne.s32.totalorder %s68, %s69
    %p80 = scmp.eq.s32.totalorder %s13, 0
    %p81 = por %p79, %p80
    %p82 = scmp.ne.s32.totalorder %s68, %s69
    %p83 = scmp.eq.s32.totalorder %s14, 1
    %p84 = por %p82, %p83
    %p86 = scmp.ne.s32.totalorder %s69, %s85
    %p87 = scmp.eq.s32.totalorder %s14, 0
    %p88 = por %p86, %p87
    %p89 = scmp.le.s32.totalorder 1, %s8
    %p90 = scmp.lt.s32.totalorder %s8, 3
    %p91 = pnand %p89, %p90
    %p92 = pneg %p91
    // Predicated region
    $region9: #{generator_forward.17} parent=5 // pred_check
      _
    $region10: #{generator_forward.17} parent=5 // pred_check_branch
      %94 = sbr.rel (%p91) target = $region12
    $region11: #{generator_forward.17} parent=5 // pred_region
      %s95 = ssub.s32 %s8, 1
      // Predicated region
      $region13: #{generator_forward.17} parent=11 // pred_check
        %p96 = pneg %p55
      $region14: #{generator_forward.17} parent=11 // pred_check_branch
        %98 = sbr.rel (%p96) target = $region16
      $region15: #{generator_forward.17} parent=11 // pred_region
        _
      $region16: #{generator_forward.17} parent=11 // pred_fallthru
        _
    $region12: #{generator_forward.17} parent=5 // pred_fallthru
      _
    %p99 = scmp.lt.s32.totalorder %s8, 2
    // Predicated region
    $region17: #{generator_forward.17} parent=5 // pred_check
      %p100 = pneg %p99
    $region18: #{generator_forward.17} parent=5 // pred_check_branch
      %102 = sbr.rel (%p100) target = $region20
    $region19: #{generator_forward.17} parent=5 // pred_region
      // Predicated region
      $region21: #{generator_forward.17} parent=19 // pred_check
        %p103 = pneg %p28
      $region22: #{generator_forward.17} parent=19 // pred_check_branch
        %105 = sbr.rel (%p103) target = $region24
      $region23: #{generator_forward.17} parent=19 // pred_region
        %s106 = smul.u32 128, %s8
        %p107 = scmp.lt.s32.totalorder %s106, 255
        %s108 = scalar_select %p107, %s106, 255
        %s109 = smul.addr %s108, 4
        %s110 = scalar_lea.vmem %s0, %s109
        %s111 = smul.u32 128, %s8
      $region24: #{generator_forward.17} parent=19 // pred_fallthru
        _
    $region20: #{generator_forward.17} parent=5 // pred_fallthru
      _
    %p112 = scmp.le.s32.totalorder 1, %s8
    %p113 = scmp.lt.s32.totalorder %s8, 3
    %p114 = pnand %p112, %p113
    %p115 = pneg %p114
    // Predicated region
    $region25: #{generator_forward.17} parent=5 // pred_check
      _
    $region26: #{generator_forward.17} parent=5 // pred_check_branch
      %117 = sbr.rel (%p114) target = $region28
    $region27: #{generator_forward.17} parent=5 // pred_region
      %s118 = ssub.s32 %s8, 1
      %s119 = smul.u32 128, %s13
      %p120 = scmp.lt.s32.totalorder %s119, 255
      %s121 = scalar_select %p120, %s119, 255
      %s122 = smul.addr %s121, 4
      %s123 = scalar_lea.vmem %s0, %s122
      %p124 = pneg %p34
      %p125 = pneg %p31
      %p126 = pneg %p55
      %p127 = pneg %p52
      %p128 = pneg %p81
      %p129 = pneg %p78
      %s130 = smul.u32 128, %s13
      %p131 = scmp.lt.s32.totalorder %s130, 255
      %s132 = scalar_select %p131, %s130, 255
      %s133 = smul.addr %s132, 8
      %s134 = scalar_lea.vmem %s2, %s133
      %s135 = smul.u32 128, %s13
      %p136 = scmp.lt.s32.totalorder %s135, 255
      %s137 = scalar_select %p136, %s135, 255
      %s138 = smul.addr %s137, 4
      %s139 = scalar_lea.vmem %s0, %s138
      %s140 = smul.u32 128, %s13
      %s141 = smul.u32 128, %s13
      %p142 = scmp.lt.s32.totalorder %s141, 255
      %s143 = scalar_select %p142, %s141, 255
      %s144 = smul.addr %s143, 8
      %s145 = scalar_lea.vmem %s2, %s144
      %s146 = smul.u32 128, %s13
      %v148 = vld [vmem:[%s139] sm:$0xf]
      %v149 = vld [vmem:[%s139 + $0x4] sm:$0xf]
      %v150 = vld [vmem:[%s139 + $0x8] sm:$0xf]
      %v151 = vld [vmem:[%s139 + $0xc] sm:$0xf]
      %v152 = vld [vmem:[%s139 + $0x10] sm:$0xf]
      %v153 = vld [vmem:[%s139 + $0x14] sm:$0xf]
      %v154 = vld [vmem:[%s139 + $0x18] sm:$0xf]
      %v155 = vld [vmem:[%s139 + $0x1c] sm:$0xf]
      %v156 = vld [vmem:[%s139 + $0x20] sm:$0xf]
      %v157 = vld [vmem:[%s139 + $0x24] sm:$0xf]
      %v158 = vld [vmem:[%s139 + $0x28] sm:$0xf]
      %v159 = vld [vmem:[%s139 + $0x2c] sm:$0xf]
      %v160 = vld [vmem:[%s139 + $0x30] sm:$0xf]
      %v161 = vld [vmem:[%s139 + $0x34] sm:$0xf]
      %v162 = vld [vmem:[%s139 + $0x38] sm:$0xf]
      %v163 = vld [vmem:[%s139 + $0x3c] sm:$0xf]
      %v164 = vld [vmem:[%s139 + $0x40] sm:$0xf]
      %v165 = vld [vmem:[%s139 + $0x44] sm:$0xf]
      %v166 = vld [vmem:[%s139 + $0x48] sm:$0xf]
      %v167 = vld [vmem:[%s139 + $0x4c] sm:$0xf]
      %v168 = vld [vmem:[%s139 + $0x50] sm:$0xf]
      %v169 = vld [vmem:[%s139 + $0x54] sm:$0xf]
      %v170 = vld [vmem:[%s139 + $0x58] sm:$0xf]
      %v171 = vld [vmem:[%s139 + $0x5c] sm:$0xf]
      %v172 = vld [vmem:[%s139 + $0x60] sm:$0xf]
      %v173 = vld [vmem:[%s139 + $0x64] sm:$0xf]
      %v174 = vld [vmem:[%s139 + $0x68] sm:$0xf]
      %v175 = vld [vmem:[%s139 + $0x6c] sm:$0xf]
      %v176 = vld [vmem:[%s139 + $0x70] sm:$0xf]
      %v177 = vld [vmem:[%s139 + $0x74] sm:$0xf]
      %v178 = vld [vmem:[%s139 + $0x78] sm:$0xf]
      %v179 = vld [vmem:[%s139 + $0x7c] sm:$0xf]
      %v180 = vld [vmem:[%s139 + $0x80] sm:$0xf]
      %v181 = vld [vmem:[%s139 + $0x84] sm:$0xf]
      %v182 = vld [vmem:[%s139 + $0x88] sm:$0xf]
      %v183 = vld [vmem:[%s139 + $0x8c] sm:$0xf]
      %v184 = vld [vmem:[%s139 + $0x90] sm:$0xf]
      %v185 = vld [vmem:[%s139 + $0x94] sm:$0xf]
      %v186 = vld [vmem:[%s139 + $0x98] sm:$0xf]
      %v187 = vld [vmem:[%s139 + $0x9c] sm:$0xf]
      %v188 = vld [vmem:[%s139 + $0xa0] sm:$0xf]
      %v189 = vld [vmem:[%s139 + $0xa4] sm:$0xf]
      %v190 = vld [vmem:[%s139 + $0xa8] sm:$0xf]
      %v191 = vld [vmem:[%s139 + $0xac] sm:$0xf]
      %v192 = vld [vmem:[%s139 + $0xb0] sm:$0xf]
      %v193 = vld [vmem:[%s139 + $0xb4] sm:$0xf]
      %v194 = vld [vmem:[%s139 + $0xb8] sm:$0xf]
      %v195 = vld [vmem:[%s139 + $0xbc] sm:$0xf]
      %v196 = vld [vmem:[%s139 + $0xc0] sm:$0xf]
      %v197 = vld [vmem:[%s139 + $0xc4] sm:$0xf]
      %v198 = vld [vmem:[%s139 + $0xc8] sm:$0xf]
      %v199 = vld [vmem:[%s139 + $0xcc] sm:$0xf]
      %v200 = vld [vmem:[%s139 + $0xd0] sm:$0xf]
      %v201 = vld [vmem:[%s139 + $0xd4] sm:$0xf]
      %v202 = vld [vmem:[%s139 + $0xd8] sm:$0xf]
      %v203 = vld [vmem:[%s139 + $0xdc] sm:$0xf]
      %v204 = vld [vmem:[%s139 + $0xe0] sm:$0xf]
      %v205 = vld [vmem:[%s139 + $0xe4] sm:$0xf]
      %v206 = vld [vmem:[%s139 + $0xe8] sm:$0xf]
      %v207 = vld [vmem:[%s139 + $0xec] sm:$0xf]
      %v208 = vld [vmem:[%s139 + $0xf0] sm:$0xf]
      %v209 = vld [vmem:[%s139 + $0xf4] sm:$0xf]
      %v210 = vld [vmem:[%s139 + $0xf8] sm:$0xf]
      %v211 = vld [vmem:[%s139 + $0xfc] sm:$0xf]
      %v212 = vld [vmem:[%s139 + $0x100] sm:$0xf]
      %v213 = vld [vmem:[%s139 + $0x104] sm:$0xf]
      %v214 = vld [vmem:[%s139 + $0x108] sm:$0xf]
      %v215 = vld [vmem:[%s139 + $0x10c] sm:$0xf]
      %v216 = vld [vmem:[%s139 + $0x110] sm:$0xf]
      %v217 = vld [vmem:[%s139 + $0x114] sm:$0xf]
      %v218 = vld [vmem:[%s139 + $0x118] sm:$0xf]
      %v219 = vld [vmem:[%s139 + $0x11c] sm:$0xf]
      %v220 = vld [vmem:[%s139 + $0x120] sm:$0xf]
      %v221 = vld [vmem:[%s139 + $0x124] sm:$0xf]
      %v222 = vld [vmem:[%s139 + $0x128] sm:$0xf]
      %v223 = vld [vmem:[%s139 + $0x12c] sm:$0xf]
      %v224 = vld [vmem:[%s139 + $0x130] sm:$0xf]
      %v225 = vld [vmem:[%s139 + $0x134] sm:$0xf]
      %v226 = vld [vmem:[%s139 + $0x138] sm:$0xf]
      %v227 = vld [vmem:[%s139 + $0x13c] sm:$0xf]
      %v228 = vld [vmem:[%s139 + $0x140] sm:$0xf]
      %v229 = vld [vmem:[%s139 + $0x144] sm:$0xf]
      %v230 = vld [vmem:[%s139 + $0x148] sm:$0xf]
      %v231 = vld [vmem:[%s139 + $0x14c] sm:$0xf]
      %v232 = vld [vmem:[%s139 + $0x150] sm:$0xf]
      %v233 = vld [vmem:[%s139 + $0x154] sm:$0xf]
      %v234 = vld [vmem:[%s139 + $0x158] sm:$0xf]
      %v235 = vld [vmem:[%s139 + $0x15c] sm:$0xf]
      %v236 = vld [vmem:[%s139 + $0x160] sm:$0xf]
      %v237 = vld [vmem:[%s139 + $0x164] sm:$0xf]
      %v238 = vld [vmem:[%s139 + $0x168] sm:$0xf]
      %v239 = vld [vmem:[%s139 + $0x16c] sm:$0xf]
      %v240 = vld [vmem:[%s139 + $0x170] sm:$0xf]
      %v241 = vld [vmem:[%s139 + $0x174] sm:$0xf]
      %v242 = vld [vmem:[%s139 + $0x178] sm:$0xf]
      %v243 = vld [vmem:[%s139 + $0x17c] sm:$0xf]
      %v244 = vld [vmem:[%s139 + $0x180] sm:$0xf]
      %v245 = vld [vmem:[%s139 + $0x184] sm:$0xf]
      %v246 = vld [vmem:[%s139 + $0x188] sm:$0xf]
      %v247 = vld [vmem:[%s139 + $0x18c] sm:$0xf]
      %v248 = vld [vmem:[%s139 + $0x190] sm:$0xf]
      %v249 = vld [vmem:[%s139 + $0x194] sm:$0xf]
      %v250 = vld [vmem:[%s139 + $0x198] sm:$0xf]
      %v251 = vld [vmem:[%s139 + $0x19c] sm:$0xf]
      %v252 = vld [vmem:[%s139 + $0x1a0] sm:$0xf]
      %v253 = vld [vmem:[%s139 + $0x1a4] sm:$0xf]
      %v254 = vld [vmem:[%s139 + $0x1a8] sm:$0xf]
      %v255 = vld [vmem:[%s139 + $0x1ac] sm:$0xf]
      %v256 = vld [vmem:[%s139 + $0x1b0] sm:$0xf]
      %v257 = vld [vmem:[%s139 + $0x1b4] sm:$0xf]
      %v258 = vld [vmem:[%s139 + $0x1b8] sm:$0xf]
      %v259 = vld [vmem:[%s139 + $0x1bc] sm:$0xf]
      %v260 = vld [vmem:[%s139 + $0x1c0] sm:$0xf]
      %v261 = vld [vmem:[%s139 + $0x1c4] sm:$0xf]
      %v262 = vld [vmem:[%s139 + $0x1c8] sm:$0xf]
      %v263 = vld [vmem:[%s139 + $0x1cc] sm:$0xf]
      %v264 = vld [vmem:[%s139 + $0x1d0] sm:$0xf]
      %v265 = vld [vmem:[%s139 + $0x1d4] sm:$0xf]
      %v266 = vld [vmem:[%s139 + $0x1d8] sm:$0xf]
      %v267 = vld [vmem:[%s139 + $0x1dc] sm:$0xf]
      %v268 = vld [vmem:[%s139 + $0x1e0] sm:$0xf]
      %v269 = vld [vmem:[%s139 + $0x1e4] sm:$0xf]
      %v270 = vld [vmem:[%s139 + $0x1e8] sm:$0xf]
      %v271 = vld [vmem:[%s139 + $0x1ec] sm:$0xf]
      %v272 = vld [vmem:[%s139 + $0x1f0] sm:$0xf]
      %v273 = vld [vmem:[%s139 + $0x1f4] sm:$0xf]
      %v274 = vld [vmem:[%s139 + $0x1f8] sm:$0xf]
      %v275 = vld [vmem:[%s139 + $0x1fc] sm:$0xf]
      %v276 = vld [vmem:[%s1] sm:$0xf]
      %v277 = vld [vmem:[%s1 + $0x4] sm:$0xf]
      %v278 = vld [vmem:[%s1 + $0x8] sm:$0xf]
      %v279 = vld [vmem:[%s1 + $0xc] sm:$0xf]
      %v280 = vld [vmem:[%s1 + $0x10] sm:$0xf]
      %v281 = vld [vmem:[%s1 + $0x14] sm:$0xf]
      %v282 = vld [vmem:[%s1 + $0x18] sm:$0xf]
      %v283 = vld [vmem:[%s1 + $0x1c] sm:$0xf]
      %v284 = vld [vmem:[%s1 + $0x20] sm:$0xf]
      %v413 = vunpack.c.l.b16 %v148
      %v414 = vunpack.c.l.b16 %v149
      %v415 = vunpack.c.l.b16 %v150
      %v416 = vunpack.c.l.b16 %v151
      %v417 = vunpack.c.l.b16 %v152
      %v418 = vunpack.c.l.b16 %v153
      %v419 = vunpack.c.l.b16 %v154
      %v420 = vunpack.c.l.b16 %v155
      %v421 = vunpack.c.l.b16 %v156
      %v422 = vunpack.c.l.b16 %v157
      %v423 = vunpack.c.l.b16 %v158
      %v424 = vunpack.c.l.b16 %v159
      %v425 = vunpack.c.l.b16 %v160
      %v426 = vunpack.c.l.b16 %v161
      %v427 = vunpack.c.l.b16 %v162
      %v428 = vunpack.c.l.b16 %v163
      %v429 = vunpack.c.l.b16 %v164
      %v430 = vunpack.c.l.b16 %v165
      %v431 = vunpack.c.l.b16 %v166
      %v432 = vunpack.c.l.b16 %v167
      %v433 = vunpack.c.l.b16 %v168
      %v434 = vunpack.c.l.b16 %v169
      %v435 = vunpack.c.l.b16 %v170
      %v436 = vunpack.c.l.b16 %v171
      %v437 = vunpack.c.l.b16 %v172
      %v438 = vunpack.c.l.b16 %v173
      %v439 = vunpack.c.l.b16 %v174
      %v440 = vunpack.c.l.b16 %v175
      %v441 = vunpack.c.l.b16 %v176
      %v442 = vunpack.c.l.b16 %v177
      %v443 = vunpack.c.l.b16 %v178
      %v444 = vunpack.c.l.b16 %v179
      %v445 = vunpack.c.l.b16 %v180
      %v446 = vunpack.c.l.b16 %v181
      %v447 = vunpack.c.l.b16 %v182
      %v448 = vunpack.c.l.b16 %v183
      %v449 = vunpack.c.l.b16 %v184
      %v450 = vunpack.c.l.b16 %v185
      %v451 = vunpack.c.l.b16 %v186
      %v452 = vunpack.c.l.b16 %v187
      %v453 = vunpack.c.l.b16 %v188
      %v454 = vunpack.c.l.b16 %v189
      %v455 = vunpack.c.l.b16 %v190
      %v456 = vunpack.c.l.b16 %v191
      %v457 = vunpack.c.l.b16 %v192
      %v458 = vunpack.c.l.b16 %v193
      %v459 = vunpack.c.l.b16 %v194
      %v460 = vunpack.c.l.b16 %v195
      %v461 = vunpack.c.l.b16 %v196
      %v462 = vunpack.c.l.b16 %v197
      %v463 = vunpack.c.l.b16 %v198
      %v464 = vunpack.c.l.b16 %v199
      %v465 = vunpack.c.l.b16 %v200
      %v466 = vunpack.c.l.b16 %v201
      %v467 = vunpack.c.l.b16 %v202
      %v468 = vunpack.c.l.b16 %v203
      %v469 = vunpack.c.l.b16 %v204
      %v470 = vunpack.c.l.b16 %v205
      %v471 = vunpack.c.l.b16 %v206
      %v472 = vunpack.c.l.b16 %v207
      %v473 = vunpack.c.l.b16 %v208
      %v474 = vunpack.c.l.b16 %v209
      %v475 = vunpack.c.l.b16 %v210
      %v476 = vunpack.c.l.b16 %v211
      %v477 = vunpack.c.l.b16 %v212
      %v478 = vunpack.c.l.b16 %v213
      %v479 = vunpack.c.l.b16 %v214
      %v480 = vunpack.c.l.b16 %v215
      %v481 = vunpack.c.l.b16 %v216
      %v482 = vunpack.c.l.b16 %v217
      %v483 = vunpack.c.l.b16 %v218
      %v484 = vunpack.c.l.b16 %v219
      %v485 = vunpack.c.l.b16 %v220
      %v486 = vunpack.c.l.b16 %v221
      %v487 = vunpack.c.l.b16 %v222
      %v488 = vunpack.c.l.b16 %v223
      %v489 = vunpack.c.l.b16 %v224
      %v490 = vunpack.c.l.b16 %v225
      %v491 = vunpack.c.l.b16 %v226
      %v492 = vunpack.c.l.b16 %v227
      %v493 = vunpack.c.l.b16 %v228
      %v494 = vunpack.c.l.b16 %v229
      %v495 = vunpack.c.l.b16 %v230
      %v496 = vunpack.c.l.b16 %v231
      %v497 = vunpack.c.l.b16 %v232
      %v498 = vunpack.c.l.b16 %v233
      %v499 = vunpack.c.l.b16 %v234
      %v500 = vunpack.c.l.b16 %v235
      %v501 = vunpack.c.l.b16 %v236
      %v502 = vunpack.c.l.b16 %v237
      %v503 = vunpack.c.l.b16 %v238
      %v504 = vunpack.c.l.b16 %v239
      %v505 = vunpack.c.l.b16 %v240
      %v506 = vunpack.c.l.b16 %v241
      %v507 = vunpack.c.l.b16 %v242
      %v508 = vunpack.c.l.b16 %v243
      %v509 = vunpack.c.l.b16 %v244
      %v510 = vunpack.c.l.b16 %v245
      %v511 = vunpack.c.l.b16 %v246
      %v512 = vunpack.c.l.b16 %v247
      %v513 = vunpack.c.l.b16 %v248
      %v514 = vunpack.c.l.b16 %v249
      %v515 = vunpack.c.l.b16 %v250
      %v516 = vunpack.c.l.b16 %v251
      %v517 = vunpack.c.l.b16 %v252
      %v518 = vunpack.c.l.b16 %v253
      %v519 = vunpack.c.l.b16 %v254
      %v520 = vunpack.c.l.b16 %v255
      %v521 = vunpack.c.l.b16 %v256
      %v522 = vunpack.c.l.b16 %v257
      %v523 = vunpack.c.l.b16 %v258
      %v524 = vunpack.c.l.b16 %v259
      %v525 = vunpack.c.l.b16 %v260
      %v526 = vunpack.c.l.b16 %v261
      %v527 = vunpack.c.l.b16 %v262
      %v528 = vunpack.c.l.b16 %v263
      %v529 = vunpack.c.l.b16 %v264
      %v530 = vunpack.c.l.b16 %v265
      %v531 = vunpack.c.l.b16 %v266
      %v532 = vunpack.c.l.b16 %v267
      %v533 = vunpack.c.l.b16 %v268
      %v534 = vunpack.c.l.b16 %v269
      %v535 = vunpack.c.l.b16 %v270
      %v536 = vunpack.c.l.b16 %v271
      %v537 = vunpack.c.l.b16 %v272
      %v538 = vunpack.c.l.b16 %v273
      %v539 = vunpack.c.l.b16 %v274
      %v540 = vunpack.c.l.b16 %v275
      %v541 = vpack.c.b16 %v414, %v413
      %v542 = vpack.c.b16 %v416, %v415
      %v543 = vpack.c.b16 %v418, %v417
      %v544 = vpack.c.b16 %v420, %v419
      %v545 = vpack.c.b16 %v422, %v421
      %v546 = vpack.c.b16 %v424, %v423
      %v547 = vpack.c.b16 %v426, %v425
      %v548 = vpack.c.b16 %v428, %v427
      %v549 = vpack.c.b16 %v430, %v429
      %v550 = vpack.c.b16 %v432, %v431
      %v551 = vpack.c.b16 %v434, %v433
      %v552 = vpack.c.b16 %v436, %v435
      %v553 = vpack.c.b16 %v438, %v437
      %v554 = vpack.c.b16 %v440, %v439
      %v555 = vpack.c.b16 %v442, %v441
      %v556 = vpack.c.b16 %v444, %v443
      %v557 = vpack.c.b16 %v446, %v445
      %v558 = vpack.c.b16 %v448, %v447
      %v559 = vpack.c.b16 %v450, %v449
      %v560 = vpack.c.b16 %v452, %v451
      %v561 = vpack.c.b16 %v454, %v453
      %v562 = vpack.c.b16 %v456, %v455
      %v563 = vpack.c.b16 %v458, %v457
      %v564 = vpack.c.b16 %v460, %v459
      %v565 = vpack.c.b16 %v462, %v461
      %v566 = vpack.c.b16 %v464, %v463
      %v567 = vpack.c.b16 %v466, %v465
      %v568 = vpack.c.b16 %v468, %v467
      %v569 = vpack.c.b16 %v470, %v469
      %v570 = vpack.c.b16 %v472, %v471
      %v571 = vpack.c.b16 %v474, %v473
      %v572 = vpack.c.b16 %v476, %v475
      %v573 = vpack.c.b16 %v478, %v477
      %v574 = vpack.c.b16 %v480, %v479
      %v575 = vpack.c.b16 %v482, %v481
      %v576 = vpack.c.b16 %v484, %v483
      %v577 = vpack.c.b16 %v486, %v485
      %v578 = vpack.c.b16 %v488, %v487
      %v579 = vpack.c.b16 %v490, %v489
      %v580 = vpack.c.b16 %v492, %v491
      %v581 = vpack.c.b16 %v494, %v493
      %v582 = vpack.c.b16 %v496, %v495
      %v583 = vpack.c.b16 %v498, %v497
      %v584 = vpack.c.b16 %v500, %v499
      %v585 = vpack.c.b16 %v502, %v501
      %v586 = vpack.c.b16 %v504, %v503
      %v587 = vpack.c.b16 %v506, %v505
      %v588 = vpack.c.b16 %v508, %v507
      %v589 = vpack.c.b16 %v510, %v509
      %v590 = vpack.c.b16 %v512, %v511
      %v591 = vpack.c.b16 %v514, %v513
      %v592 = vpack.c.b16 %v516, %v515
      %v593 = vpack.c.b16 %v518, %v517
      %v594 = vpack.c.b16 %v520, %v519
      %v595 = vpack.c.b16 %v522, %v521
      %v596 = vpack.c.b16 %v524, %v523
      %v597 = vpack.c.b16 %v526, %v525
      %v598 = vpack.c.b16 %v528, %v527
      %v599 = vpack.c.b16 %v530, %v529
      %v600 = vpack.c.b16 %v532, %v531
      %v601 = vpack.c.b16 %v534, %v533
      %v602 = vpack.c.b16 %v536, %v535
      %v603 = vpack.c.b16 %v538, %v537
      %v604 = vpack.c.b16 %v540, %v539
      %v614 = vunpack.c.l.b16 %v276
      %v615 = vunpack.c.l.b16 %v277
      %v616 = vunpack.c.l.b16 %v278
      %v617 = vunpack.c.l.b16 %v279
      %v618 = vunpack.c.l.b16 %v280
      %v619 = vunpack.c.l.b16 %v281
      %v620 = vunpack.c.l.b16 %v282
      %v621 = vunpack.c.l.b16 %v283
      %v622 = vunpack.c.l.b16 %v284
      %v623 = vpack.c.b16 %v615, %v614
      %v624 = vpack.c.b16 %v617, %v616
      %v625 = vpack.c.b16 %v619, %v618
      %v626 = vpack.c.b16 %v621, %v620
      %v627 = vpack.c.b16 %v622, %v622
      %vm632 = vcmask 588800
      %v634 = vsel %vm632, %v541, 0
      %v637 = vsel %vm632, %v542, 0
      %v640 = vsel %vm632, %v543, 0
      %v643 = vsel %vm632, %v544, 0
      %v646 = vsel %vm632, %v545, 0
      %v649 = vsel %vm632, %v546, 0
      %v652 = vsel %vm632, %v547, 0
      %v655 = vsel %vm632, %v548, 0
      %v658 = vsel %vm632, %v549, 0
      %v661 = vsel %vm632, %v550, 0
      %v664 = vsel %vm632, %v551, 0
      %v667 = vsel %vm632, %v552, 0
      %v670 = vsel %vm632, %v553, 0
      %v673 = vsel %vm632, %v554, 0
      %v676 = vsel %vm632, %v555, 0
      %v679 = vsel %vm632, %v556, 0
      %v682 = vsel %vm632, %v557, 0
      %v685 = vsel %vm632, %v558, 0
      %v688 = vsel %vm632, %v559, 0
      %v691 = vsel %vm632, %v560, 0
      %v694 = vsel %vm632, %v561, 0
      %v697 = vsel %vm632, %v562, 0
      %v700 = vsel %vm632, %v563, 0
      %v703 = vsel %vm632, %v564, 0
      %v706 = vsel %vm632, %v565, 0
      %v709 = vsel %vm632, %v566, 0
      %v712 = vsel %vm632, %v567, 0
      %v715 = vsel %vm632, %v568, 0
      %v718 = vsel %vm632, %v569, 0
      %v721 = vsel %vm632, %v570, 0
      %v724 = vsel %vm632, %v571, 0
      %v727 = vsel %vm632, %v572, 0
      %v730 = vsel %vm632, %v573, 0
      %v733 = vsel %vm632, %v574, 0
      %v736 = vsel %vm632, %v575, 0
      %v739 = vsel %vm632, %v576, 0
      %v742 = vsel %vm632, %v577, 0
      %v745 = vsel %vm632, %v578, 0
      %v748 = vsel %vm632, %v579, 0
      %v751 = vsel %vm632, %v580, 0
      %v754 = vsel %vm632, %v581, 0
      %v757 = vsel %vm632, %v582, 0
      %v760 = vsel %vm632, %v583, 0
      %v763 = vsel %vm632, %v584, 0
      %v766 = vsel %vm632, %v585, 0
      %v769 = vsel %vm632, %v586, 0
      %v772 = vsel %vm632, %v587, 0
      %v775 = vsel %vm632, %v588, 0
      %v778 = vsel %vm632, %v589, 0
      %v781 = vsel %vm632, %v590, 0
      %v784 = vsel %vm632, %v591, 0
      %v787 = vsel %vm632, %v592, 0
      %v790 = vsel %vm632, %v593, 0
      %v793 = vsel %vm632, %v594, 0
      %v796 = vsel %vm632, %v595, 0
      %v799 = vsel %vm632, %v596, 0
      %v802 = vsel %vm632, %v597, 0
      %v805 = vsel %vm632, %v598, 0
      %v808 = vsel %vm632, %v599, 0
      %v811 = vsel %vm632, %v600, 0
      %v814 = vsel %vm632, %v601, 0
      %v817 = vsel %vm632, %v602, 0
      %v820 = vsel %vm632, %v603, 0
      %v823 = vsel %vm632, %v604, 0
      %vm825 = vcmask 1043456
      %v827 = vsel %vm825, %v627, 0
      %829 = vmatprep.subr.bf16.mxu0 0
      %830 = vmatpush1.bf16.msra.mxu0 0
      %831 = vmatprep.subr.bf16.mxu0 0
      %832 = vmatpush1.bf16.msra.mxu0 0
      %833 = vmatprep.subr.bf16.mxu0 0
      %834 = vmatpush1.bf16.msra.mxu0 0
      %835 = vmatprep.subr.bf16.mxu0 0
      %836 = vmatpush1.bf16.msra.mxu0 %v827
      %837 = vmatprep.subr.bf16.mxu0 0
      %838 = vmatpush1.bf16.msra.mxu0 %v626
      %839 = vmatprep.subr.bf16.mxu0 0
      %840 = vmatpush1.bf16.msra.mxu0 %v625
      %841 = vmatprep.subr.bf16.mxu0 0
      %842 = vmatpush1.bf16.msra.mxu0 %v624
      %843 = vmatprep.subr.bf16.mxu0 0
      %844 = vmatpush1.bf16.msra.mxu0 %v623
      %845 = vmatprep.subr.bf16.mxu0 0
      %846 = vmatpush2.bf16.msra.mxu0 0
      %847 = vmatprep.subr.bf16.mxu0 0
      %848 = vmatpush2.bf16.msra.mxu0 0
      %849 = vmatprep.subr.bf16.mxu0 0
      %850 = vmatpush2.bf16.msra.mxu0 0
      %851 = vmatprep.subr.bf16.mxu0 0
      %852 = vmatpush2.bf16.msra.mxu0 0
      %853 = vmatprep.subr.bf16.mxu0 0
      %854 = vmatpush2.bf16.msra.mxu0 0
      %855 = vmatprep.subr.bf16.mxu0 0
      %856 = vmatpush2.bf16.msra.mxu0 0
      %857 = vmatprep.subr.bf16.mxu0 0
      %858 = vmatpush2.bf16.msra.mxu0 0
      %859 = vmatprep.subr.bf16.mxu0 0
      %860 = vmatpush2.bf16.msra.mxu0 0
      %861 = vmatprep.mubr.bf16.mxu0 0
      %862 = vmatmul.mubr.bf16.gmra.mxu0 %v634
      %v863 = vpop.f32.mrf.mxu0
      %v864 = vadd.f32 0.0, %v863
      %v865 = vpop.f32.mrf.mxu0
      %v866 = vpop.f32.mrf.mxu0
      %v867 = vadd.f32 0.0, %v866
      %v868 = vpop.f32.mrf.mxu0
      %869 = vmatprep.mubr.bf16.mxu0 0
      %870 = vmatmul.mubr.bf16.gmra.mxu0 %v637
      %v871 = vpop.f32.mrf.mxu0
      %v872 = vadd.f32 0.0, %v871
      %v873 = vpop.f32.mrf.mxu0
      %v874 = vpop.f32.mrf.mxu0
      %v875 = vadd.f32 0.0, %v874
      %v876 = vpop.f32.mrf.mxu0
      %877 = vmatprep.mubr.bf16.mxu0 0
      %878 = vmatmul.mubr.bf16.gmra.mxu0 %v640
      %v879 = vpop.f32.mrf.mxu0
      %v880 = vadd.f32 0.0, %v879
      %v881 = vpop.f32.mrf.mxu0
      %v882 = vpop.f32.mrf.mxu0
      %v883 = vadd.f32 0.0, %v882
      %v884 = vpop.f32.mrf.mxu0
      %885 = vmatprep.mubr.bf16.mxu0 0
      %886 = vmatmul.mubr.bf16.gmra.mxu0 %v643
      %v887 = vpop.f32.mrf.mxu0
      %v888 = vadd.f32 0.0, %v887
      %v889 = vpop.f32.mrf.mxu0
      %v890 = vpop.f32.mrf.mxu0
      %v891 = vadd.f32 0.0, %v890
      %v892 = vpop.f32.mrf.mxu0
      %893 = vmatprep.mubr.bf16.mxu0 0
      %894 = vmatmul.mubr.bf16.gmra.mxu0 %v646
      %v895 = vpop.f32.mrf.mxu0
      %v896 = vadd.f32 0.0, %v895
      %v897 = vpop.f32.mrf.mxu0
      %v898 = vpop.f32.mrf.mxu0
      %v899 = vadd.f32 0.0, %v898
      %v900 = vpop.f32.mrf.mxu0
      %901 = vmatprep.mubr.bf16.mxu0 0
      %902 = vmatmul.mubr.bf16.gmra.mxu0 %v649
      %v903 = vpop.f32.mrf.mxu0
      %v904 = vadd.f32 0.0, %v903
      %v905 = vpop.f32.mrf.mxu0
      %v906 = vpop.f32.mrf.mxu0
      %v907 = vadd.f32 0.0, %v906
      %v908 = vpop.f32.mrf.mxu0
      %909 = vmatprep.mubr.bf16.mxu0 0
      %910 = vmatmul.mubr.bf16.gmra.mxu0 %v652
      %v911 = vpop.f32.mrf.mxu0
      %v912 = vadd.f32 0.0, %v911
      %v913 = vpop.f32.mrf.mxu0
      %v914 = vpop.f32.mrf.mxu0
      %v915 = vadd.f32 0.0, %v914
      %v916 = vpop.f32.mrf.mxu0
      %917 = vmatprep.mubr.bf16.mxu0 0
      %918 = vmatmul.mubr.bf16.gmra.mxu0 %v655
      %v919 = vpop.f32.mrf.mxu0
      %v920 = vadd.f32 0.0, %v919
      %v921 = vpop.f32.mrf.mxu0
      %v922 = vpop.f32.mrf.mxu0
      %v923 = vadd.f32 0.0, %v922
      %v924 = vpop.f32.mrf.mxu0
      %925 = vmatprep.mubr.bf16.mxu0 0
      %926 = vmatmul.mubr.bf16.gmra.mxu0 %v658
      %v927 = vpop.f32.mrf.mxu0
      %v928 = vadd.f32 0.0, %v927
      %v929 = vpop.f32.mrf.mxu0
      %v930 = vpop.f32.mrf.mxu0
      %v931 = vadd.f32 0.0, %v930
      %v932 = vpop.f32.mrf.mxu0
      %933 = vmatprep.mubr.bf16.mxu0 0
      %934 = vmatmul.mubr.bf16.gmra.mxu0 %v661
      %v935 = vpop.f32.mrf.mxu0
      %v936 = vadd.f32 0.0, %v935
      %v937 = vpop.f32.mrf.mxu0
      %v938 = vpop.f32.mrf.mxu0
      %v939 = vadd.f32 0.0, %v938
      %v940 = vpop.f32.mrf.mxu0
      %941 = vmatprep.mubr.bf16.mxu0 0
      %942 = vmatmul.mubr.bf16.gmra.mxu0 %v664
      %v943 = vpop.f32.mrf.mxu0
      %v944 = vadd.f32 0.0, %v943
      %v945 = vpop.f32.mrf.mxu0
      %v946 = vpop.f32.mrf.mxu0
      %v947 = vadd.f32 0.0, %v946
      %v948 = vpop.f32.mrf.mxu0
      %949 = vmatprep.mubr.bf16.mxu0 0
      %950 = vmatmul.mubr.bf16.gmra.mxu0 %v667
      %v951 = vpop.f32.mrf.mxu0
      %v952 = vadd.f32 0.0, %v951
      %v953 = vpop.f32.mrf.mxu0
      %v954 = vpop.f32.mrf.mxu0
      %v955 = vadd.f32 0.0, %v954
      %v956 = vpop.f32.mrf.mxu0
      %957 = vmatprep.mubr.bf16.mxu0 0
      %958 = vmatmul.mubr.bf16.gmra.mxu0 %v670
      %v959 = vpop.f32.mrf.mxu0
      %v960 = vadd.f32 0.0, %v959
      %v961 = vpop.f32.mrf.mxu0
      %v962 = vpop.f32.mrf.mxu0
      %v963 = vadd.f32 0.0, %v962
      %v964 = vpop.f32.mrf.mxu0
      %965 = vmatprep.mubr.bf16.mxu0 0
      %966 = vmatmul.mubr.bf16.gmra.mxu0 %v673
      %v967 = vpop.f32.mrf.mxu0
      %v968 = vadd.f32 0.0, %v967
      %v969 = vpop.f32.mrf.mxu0
      %v970 = vpop.f32.mrf.mxu0
      %v971 = vadd.f32 0.0, %v970
      %v972 = vpop.f32.mrf.mxu0
      %973 = vmatprep.mubr.bf16.mxu0 0
      %974 = vmatmul.mubr.bf16.gmra.mxu0 %v676
      %v975 = vpop.f32.mrf.mxu0
      %v976 = vadd.f32 0.0, %v975
      %v977 = vpop.f32.mrf.mxu0
      %v978 = vpop.f32.mrf.mxu0
      %v979 = vadd.f32 0.0, %v978
      %v980 = vpop.f32.mrf.mxu0
      %981 = vmatprep.mubr.bf16.mxu0 0
      %982 = vmatmul.mubr.bf16.gmra.mxu0 %v679
      %v983 = vpop.f32.mrf.mxu0
      %v984 = vadd.f32 0.0, %v983
      %v985 = vpop.f32.mrf.mxu0
      %v986 = vpop.f32.mrf.mxu0
      %v987 = vadd.f32 0.0, %v986
      %v988 = vpop.f32.mrf.mxu0
      %989 = vmatprep.mubr.bf16.mxu0 0
      %990 = vmatmul.mubr.bf16.gmra.mxu0 %v682
      %v991 = vpop.f32.mrf.mxu0
      %v992 = vadd.f32 0.0, %v991
      %v993 = vpop.f32.mrf.mxu0
      %v994 = vpop.f32.mrf.mxu0
      %v995 = vadd.f32 0.0, %v994
      %v996 = vpop.f32.mrf.mxu0
      %997 = vmatprep.mubr.bf16.mxu0 0
      %998 = vmatmul.mubr.bf16.gmra.mxu0 %v685
      %v999 = vpop.f32.mrf.mxu0
      %v1000 = vadd.f32 0.0, %v999
      %v1001 = vpop.f32.mrf.mxu0
      %v1002 = vpop.f32.mrf.mxu0
      %v1003 = vadd.f32 0.0, %v1002
      %v1004 = vpop.f32.mrf.mxu0
      %1005 = vmatprep.mubr.bf16.mxu0 0
      %1006 = vmatmul.mubr.bf16.gmra.mxu0 %v688
      %v1007 = vpop.f32.mrf.mxu0
      %v1008 = vadd.f32 0.0, %v1007
      %v1009 = vpop.f32.mrf.mxu0
      %v1010 = vpop.f32.mrf.mxu0
      %v1011 = vadd.f32 0.0, %v1010
      %v1012 = vpop.f32.mrf.mxu0
      %1013 = vmatprep.mubr.bf16.mxu0 0
      %1014 = vmatmul.mubr.bf16.gmra.mxu0 %v691
      %v1015 = vpop.f32.mrf.mxu0
      %v1016 = vadd.f32 0.0, %v1015
      %v1017 = vpop.f32.mrf.mxu0
      %v1018 = vpop.f32.mrf.mxu0
      %v1019 = vadd.f32 0.0, %v1018
      %v1020 = vpop.f32.mrf.mxu0
      %1021 = vmatprep.mubr.bf16.mxu0 0
      %1022 = vmatmul.mubr.bf16.gmra.mxu0 %v694
      %v1023 = vpop.f32.mrf.mxu0
      %v1024 = vadd.f32 0.0, %v1023
      %v1025 = vpop.f32.mrf.mxu0
      %v1026 = vpop.f32.mrf.mxu0
      %v1027 = vadd.f32 0.0, %v1026
      %v1028 = vpop.f32.mrf.mxu0
      %1029 = vmatprep.mubr.bf16.mxu0 0
      %1030 = vmatmul.mubr.bf16.gmra.mxu0 %v697
      %v1031 = vpop.f32.mrf.mxu0
      %v1032 = vadd.f32 0.0, %v1031
      %v1033 = vpop.f32.mrf.mxu0
      %v1034 = vpop.f32.mrf.mxu0
      %v1035 = vadd.f32 0.0, %v1034
      %v1036 = vpop.f32.mrf.mxu0
      %1037 = vmatprep.mubr.bf16.mxu0 0
      %1038 = vmatmul.mubr.bf16.gmra.mxu0 %v700
      %v1039 = vpop.f32.mrf.mxu0
      %v1040 = vadd.f32 0.0, %v1039
      %v1041 = vpop.f32.mrf.mxu0
      %v1042 = vpop.f32.mrf.mxu0
      %v1043 = vadd.f32 0.0, %v1042
      %v1044 = vpop.f32.mrf.mxu0
      %1045 = vmatprep.mubr.bf16.mxu0 0
      %1046 = vmatmul.mubr.bf16.gmra.mxu0 %v703
      %v1047 = vpop.f32.mrf.mxu0
      %v1048 = vadd.f32 0.0, %v1047
      %v1049 = vpop.f32.mrf.mxu0
      %v1050 = vpop.f32.mrf.mxu0
      %v1051 = vadd.f32 0.0, %v1050
      %v1052 = vpop.f32.mrf.mxu0
      %1053 = vmatprep.mubr.bf16.mxu0 0
      %1054 = vmatmul.mubr.bf16.gmra.mxu0 %v706
      %v1055 = vpop.f32.mrf.mxu0
      %v1056 = vadd.f32 0.0, %v1055
      %v1057 = vpop.f32.mrf.mxu0
      %v1058 = vpop.f32.mrf.mxu0
      %v1059 = vadd.f32 0.0, %v1058
      %v1060 = vpop.f32.mrf.mxu0
      %1061 = vmatprep.mubr.bf16.mxu0 0
      %1062 = vmatmul.mubr.bf16.gmra.mxu0 %v709
      %v1063 = vpop.f32.mrf.mxu0
      %v1064 = vadd.f32 0.0, %v1063
      %v1065 = vpop.f32.mrf.mxu0
      %v1066 = vpop.f32.mrf.mxu0
      %v1067 = vadd.f32 0.0, %v1066
      %v1068 = vpop.f32.mrf.mxu0
      %1069 = vmatprep.mubr.bf16.mxu0 0
      %1070 = vmatmul.mubr.bf16.gmra.mxu0 %v712
      %v1071 = vpop.f32.mrf.mxu0
      %v1072 = vadd.f32 0.0, %v1071
      %v1073 = vpop.f32.mrf.mxu0
      %v1074 = vpop.f32.mrf.mxu0
      %v1075 = vadd.f32 0.0, %v1074
      %v1076 = vpop.f32.mrf.mxu0
      %1077 = vmatprep.mubr.bf16.mxu0 0
      %1078 = vmatmul.mubr.bf16.gmra.mxu0 %v715
      %v1079 = vpop.f32.mrf.mxu0
      %v1080 = vadd.f32 0.0, %v1079
      %v1081 = vpop.f32.mrf.mxu0
      %v1082 = vpop.f32.mrf.mxu0
      %v1083 = vadd.f32 0.0, %v1082
      %v1084 = vpop.f32.mrf.mxu0
      %1085 = vmatprep.mubr.bf16.mxu0 0
      %1086 = vmatmul.mubr.bf16.gmra.mxu0 %v718
      %v1087 = vpop.f32.mrf.mxu0
      %v1088 = vadd.f32 0.0, %v1087
      %v1089 = vpop.f32.mrf.mxu0
      %v1090 = vpop.f32.mrf.mxu0
      %v1091 = vadd.f32 0.0, %v1090
      %v1092 = vpop.f32.mrf.mxu0
      %1093 = vmatprep.mubr.bf16.mxu0 0
      %1094 = vmatmul.mubr.bf16.gmra.mxu0 %v721
      %v1095 = vpop.f32.mrf.mxu0
      %v1096 = vadd.f32 0.0, %v1095
      %v1097 = vpop.f32.mrf.mxu0
      %v1098 = vpop.f32.mrf.mxu0
      %v1099 = vadd.f32 0.0, %v1098
      %v1100 = vpop.f32.mrf.mxu0
      %1101 = vmatprep.mubr.bf16.mxu0 0
      %1102 = vmatmul.mubr.bf16.gmra.mxu0 %v724
      %v1103 = vpop.f32.mrf.mxu0
      %v1104 = vadd.f32 0.0, %v1103
      %v1105 = vpop.f32.mrf.mxu0
      %v1106 = vpop.f32.mrf.mxu0
      %v1107 = vadd.f32 0.0, %v1106
      %v1108 = vpop.f32.mrf.mxu0
      %1109 = vmatprep.mubr.bf16.mxu0 0
      %1110 = vmatmul.mubr.bf16.gmra.mxu0 %v727
      %v1111 = vpop.f32.mrf.mxu0
      %v1112 = vadd.f32 0.0, %v1111
      %v1113 = vpop.f32.mrf.mxu0
      %v1114 = vpop.f32.mrf.mxu0
      %v1115 = vadd.f32 0.0, %v1114
      %v1116 = vpop.f32.mrf.mxu0
      %1117 = vmatprep.mubr.bf16.mxu0 0
      %1118 = vmatmul.mubr.bf16.gmra.mxu0 %v730
      %v1119 = vpop.f32.mrf.mxu0
      %v1120 = vadd.f32 0.0, %v1119
      %v1121 = vpop.f32.mrf.mxu0
      %v1122 = vpop.f32.mrf.mxu0
      %v1123 = vadd.f32 0.0, %v1122
      %v1124 = vpop.f32.mrf.mxu0
      %1125 = vmatprep.mubr.bf16.mxu0 0
      %1126 = vmatmul.mubr.bf16.gmra.mxu0 %v733
      %v1127 = vpop.f32.mrf.mxu0
      %v1128 = vadd.f32 0.0, %v1127
      %v1129 = vpop.f32.mrf.mxu0
      %v1130 = vpop.f32.mrf.mxu0
      %v1131 = vadd.f32 0.0, %v1130
      %v1132 = vpop.f32.mrf.mxu0
      %1133 = vmatprep.mubr.bf16.mxu0 0
      %1134 = vmatmul.mubr.bf16.gmra.mxu0 %v736
      %v1135 = vpop.f32.mrf.mxu0
      %v1136 = vadd.f32 0.0, %v1135
      %v1137 = vpop.f32.mrf.mxu0
      %v1138 = vpop.f32.mrf.mxu0
      %v1139 = vadd.f32 0.0, %v1138
      %v1140 = vpop.f32.mrf.mxu0
      %1141 = vmatprep.mubr.bf16.mxu0 0
      %1142 = vmatmul.mubr.bf16.gmra.mxu0 %v739
      %v1143 = vpop.f32.mrf.mxu0
      %v1144 = vadd.f32 0.0, %v1143
      %v1145 = vpop.f32.mrf.mxu0
      %v1146 = vpop.f32.mrf.mxu0
      %v1147 = vadd.f32 0.0, %v1146
      %v1148 = vpop.f32.mrf.mxu0
      %1149 = vmatprep.mubr.bf16.mxu0 0
      %1150 = vmatmul.mubr.bf16.gmra.mxu0 %v742
      %v1151 = vpop.f32.mrf.mxu0
      %v1152 = vadd.f32 0.0, %v1151
      %v1153 = vpop.f32.mrf.mxu0
      %v1154 = vpop.f32.mrf.mxu0
      %v1155 = vadd.f32 0.0, %v1154
      %v1156 = vpop.f32.mrf.mxu0
      %1157 = vmatprep.mubr.bf16.mxu0 0
      %1158 = vmatmul.mubr.bf16.gmra.mxu0 %v745
      %v1159 = vpop.f32.mrf.mxu0
      %v1160 = vadd.f32 0.0, %v1159
      %v1161 = vpop.f32.mrf.mxu0
      %v1162 = vpop.f32.mrf.mxu0
      %v1163 = vadd.f32 0.0, %v1162
      %v1164 = vpop.f32.mrf.mxu0
      %1165 = vmatprep.mubr.bf16.mxu0 0
      %1166 = vmatmul.mubr.bf16.gmra.mxu0 %v748
      %v1167 = vpop.f32.mrf.mxu0
      %v1168 = vadd.f32 0.0, %v1167
      %v1169 = vpop.f32.mrf.mxu0
      %v1170 = vpop.f32.mrf.mxu0
      %v1171 = vadd.f32 0.0, %v1170
      %v1172 = vpop.f32.mrf.mxu0
      %1173 = vmatprep.mubr.bf16.mxu0 0
      %1174 = vmatmul.mubr.bf16.gmra.mxu0 %v751
      %v1175 = vpop.f32.mrf.mxu0
      %v1176 = vadd.f32 0.0, %v1175
      %v1177 = vpop.f32.mrf.mxu0
      %v1178 = vpop.f32.mrf.mxu0
      %v1179 = vadd.f32 0.0, %v1178
      %v1180 = vpop.f32.mrf.mxu0
      %1181 = vmatprep.mubr.bf16.mxu0 0
      %1182 = vmatmul.mubr.bf16.gmra.mxu0 %v754
      %v1183 = vpop.f32.mrf.mxu0
      %v1184 = vadd.f32 0.0, %v1183
      %v1185 = vpop.f32.mrf.mxu0
      %v1186 = vpop.f32.mrf.mxu0
      %v1187 = vadd.f32 0.0, %v1186
      %v1188 = vpop.f32.mrf.mxu0
      %1189 = vmatprep.mubr.bf16.mxu0 0
      %1190 = vmatmul.mubr.bf16.gmra.mxu0 %v757
      %v1191 = vpop.f32.mrf.mxu0
      %v1192 = vadd.f32 0.0, %v1191
      %v1193 = vpop.f32.mrf.mxu0
      %v1194 = vpop.f32.mrf.mxu0
      %v1195 = vadd.f32 0.0, %v1194
      %v1196 = vpop.f32.mrf.mxu0
      %1197 = vmatprep.mubr.bf16.mxu0 0
      %1198 = vmatmul.mubr.bf16.gmra.mxu0 %v760
      %v1199 = vpop.f32.mrf.mxu0
      %v1200 = vadd.f32 0.0, %v1199
      %v1201 = vpop.f32.mrf.mxu0
      %v1202 = vpop.f32.mrf.mxu0
      %v1203 = vadd.f32 0.0, %v1202
      %v1204 = vpop.f32.mrf.mxu0
      %1205 = vmatprep.mubr.bf16.mxu0 0
      %1206 = vmatmul.mubr.bf16.gmra.mxu0 %v763
      %v1207 = vpop.f32.mrf.mxu0
      %v1208 = vadd.f32 0.0, %v1207
      %v1209 = vpop.f32.mrf.mxu0
      %v1210 = vpop.f32.mrf.mxu0
      %v1211 = vadd.f32 0.0, %v1210
      %v1212 = vpop.f32.mrf.mxu0
      %1213 = vmatprep.mubr.bf16.mxu0 0
      %1214 = vmatmul.mubr.bf16.gmra.mxu0 %v766
      %v1215 = vpop.f32.mrf.mxu0
      %v1216 = vadd.f32 0.0, %v1215
      %v1217 = vpop.f32.mrf.mxu0
      %v1218 = vpop.f32.mrf.mxu0
      %v1219 = vadd.f32 0.0, %v1218
      %v1220 = vpop.f32.mrf.mxu0
      %1221 = vmatprep.mubr.bf16.mxu0 0
      %1222 = vmatmul.mubr.bf16.gmra.mxu0 %v769
      %v1223 = vpop.f32.mrf.mxu0
      %v1224 = vadd.f32 0.0, %v1223
      %v1225 = vpop.f32.mrf.mxu0
      %v1226 = vpop.f32.mrf.mxu0
      %v1227 = vadd.f32 0.0, %v1226
      %v1228 = vpop.f32.mrf.mxu0
      %1229 = vmatprep.mubr.bf16.mxu0 0
      %1230 = vmatmul.mubr.bf16.gmra.mxu0 %v772
      %v1231 = vpop.f32.mrf.mxu0
      %v1232 = vadd.f32 0.0, %v1231
      %v1233 = vpop.f32.mrf.mxu0
      %v1234 = vpop.f32.mrf.mxu0
      %v1235 = vadd.f32 0.0, %v1234
      %v1236 = vpop.f32.mrf.mxu0
      %1237 = vmatprep.mubr.bf16.mxu0 0
      %1238 = vmatmul.mubr.bf16.gmra.mxu0 %v775
      %v1239 = vpop.f32.mrf.mxu0
      %v1240 = vadd.f32 0.0, %v1239
      %v1241 = vpop.f32.mrf.mxu0
      %v1242 = vpop.f32.mrf.mxu0
      %v1243 = vadd.f32 0.0, %v1242
      %v1244 = vpop.f32.mrf.mxu0
      %1245 = vmatprep.mubr.bf16.mxu0 0
      %1246 = vmatmul.mubr.bf16.gmra.mxu0 %v778
      %v1247 = vpop.f32.mrf.mxu0
      %v1248 = vadd.f32 0.0, %v1247
      %v1249 = vpop.f32.mrf.mxu0
      %v1250 = vpop.f32.mrf.mxu0
      %v1251 = vadd.f32 0.0, %v1250
      %v1252 = vpop.f32.mrf.mxu0
      %1253 = vmatprep.mubr.bf16.mxu0 0
      %1254 = vmatmul.mubr.bf16.gmra.mxu0 %v781
      %v1255 = vpop.f32.mrf.mxu0
      %v1256 = vadd.f32 0.0, %v1255
      %v1257 = vpop.f32.mrf.mxu0
      %v1258 = vpop.f32.mrf.mxu0
      %v1259 = vadd.f32 0.0, %v1258
      %v1260 = vpop.f32.mrf.mxu0
      %1261 = vmatprep.mubr.bf16.mxu0 0
      %1262 = vmatmul.mubr.bf16.gmra.mxu0 %v784
      %v1263 = vpop.f32.mrf.mxu0
      %v1264 = vadd.f32 0.0, %v1263
      %v1265 = vpop.f32.mrf.mxu0
      %v1266 = vpop.f32.mrf.mxu0
      %v1267 = vadd.f32 0.0, %v1266
      %v1268 = vpop.f32.mrf.mxu0
      %1269 = vmatprep.mubr.bf16.mxu0 0
      %1270 = vmatmul.mubr.bf16.gmra.mxu0 %v787
      %v1271 = vpop.f32.mrf.mxu0
      %v1272 = vadd.f32 0.0, %v1271
      %v1273 = vpop.f32.mrf.mxu0
      %v1274 = vpop.f32.mrf.mxu0
      %v1275 = vadd.f32 0.0, %v1274
      %v1276 = vpop.f32.mrf.mxu0
      %1277 = vmatprep.mubr.bf16.mxu0 0
      %1278 = vmatmul.mubr.bf16.gmra.mxu0 %v790
      %v1279 = vpop.f32.mrf.mxu0
      %v1280 = vadd.f32 0.0, %v1279
      %v1281 = vpop.f32.mrf.mxu0
      %v1282 = vpop.f32.mrf.mxu0
      %v1283 = vadd.f32 0.0, %v1282
      %v1284 = vpop.f32.mrf.mxu0
      %1285 = vmatprep.mubr.bf16.mxu0 0
      %1286 = vmatmul.mubr.bf16.gmra.mxu0 %v793
      %v1287 = vpop.f32.mrf.mxu0
      %v1288 = vadd.f32 0.0, %v1287
      %v1289 = vpop.f32.mrf.mxu0
      %v1290 = vpop.f32.mrf.mxu0
      %v1291 = vadd.f32 0.0, %v1290
      %v1292 = vpop.f32.mrf.mxu0
      %1293 = vmatprep.mubr.bf16.mxu0 0
      %1294 = vmatmul.mubr.bf16.gmra.mxu0 %v796
      %v1295 = vpop.f32.mrf.mxu0
      %v1296 = vadd.f32 0.0, %v1295
      %v1297 = vpop.f32.mrf.mxu0
      %v1298 = vpop.f32.mrf.mxu0
      %v1299 = vadd.f32 0.0, %v1298
      %v1300 = vpop.f32.mrf.mxu0
      %1301 = vmatprep.mubr.bf16.mxu0 0
      %1302 = vmatmul.mubr.bf16.gmra.mxu0 %v799
      %v1303 = vpop.f32.mrf.mxu0
      %v1304 = vadd.f32 0.0, %v1303
      %v1305 = vpop.f32.mrf.mxu0
      %v1306 = vpop.f32.mrf.mxu0
      %v1307 = vadd.f32 0.0, %v1306
      %v1308 = vpop.f32.mrf.mxu0
      %1309 = vmatprep.mubr.bf16.mxu0 0
      %1310 = vmatmul.mubr.bf16.gmra.mxu0 %v802
      %v1311 = vpop.f32.mrf.mxu0
      %v1312 = vadd.f32 0.0, %v1311
      %v1313 = vpop.f32.mrf.mxu0
      %v1314 = vpop.f32.mrf.mxu0
      %v1315 = vadd.f32 0.0, %v1314
      %v1316 = vpop.f32.mrf.mxu0
      %1317 = vmatprep.mubr.bf16.mxu0 0
      %1318 = vmatmul.mubr.bf16.gmra.mxu0 %v805
      %v1319 = vpop.f32.mrf.mxu0
      %v1320 = vadd.f32 0.0, %v1319
      %v1321 = vpop.f32.mrf.mxu0
      %v1322 = vpop.f32.mrf.mxu0
      %v1323 = vadd.f32 0.0, %v1322
      %v1324 = vpop.f32.mrf.mxu0
      %1325 = vmatprep.mubr.bf16.mxu0 0
      %1326 = vmatmul.mubr.bf16.gmra.mxu0 %v808
      %v1327 = vpop.f32.mrf.mxu0
      %v1328 = vadd.f32 0.0, %v1327
      %v1329 = vpop.f32.mrf.mxu0
      %v1330 = vpop.f32.mrf.mxu0
      %v1331 = vadd.f32 0.0, %v1330
      %v1332 = vpop.f32.mrf.mxu0
      %1333 = vmatprep.mubr.bf16.mxu0 0
      %1334 = vmatmul.mubr.bf16.gmra.mxu0 %v811
      %v1335 = vpop.f32.mrf.mxu0
      %v1336 = vadd.f32 0.0, %v1335
      %v1337 = vpop.f32.mrf.mxu0
      %v1338 = vpop.f32.mrf.mxu0
      %v1339 = vadd.f32 0.0, %v1338
      %v1340 = vpop.f32.mrf.mxu0
      %1341 = vmatprep.mubr.bf16.mxu0 0
      %1342 = vmatmul.mubr.bf16.gmra.mxu0 %v814
      %v1343 = vpop.f32.mrf.mxu0
      %v1344 = vadd.f32 0.0, %v1343
      %v1345 = vpop.f32.mrf.mxu0
      %v1346 = vpop.f32.mrf.mxu0
      %v1347 = vadd.f32 0.0, %v1346
      %v1348 = vpop.f32.mrf.mxu0
      %1349 = vmatprep.mubr.bf16.mxu0 0
      %1350 = vmatmul.mubr.bf16.gmra.mxu0 %v817
      %v1351 = vpop.f32.mrf.mxu0
      %v1352 = vadd.f32 0.0, %v1351
      %v1353 = vpop.f32.mrf.mxu0
      %v1354 = vpop.f32.mrf.mxu0
      %v1355 = vadd.f32 0.0, %v1354
      %v1356 = vpop.f32.mrf.mxu0
      %1357 = vmatprep.mubr.bf16.mxu0 0
      %1358 = vmatmul.mubr.bf16.gmra.mxu0 %v820
      %v1359 = vpop.f32.mrf.mxu0
      %v1360 = vadd.f32 0.0, %v1359
      %v1361 = vpop.f32.mrf.mxu0
      %v1362 = vpop.f32.mrf.mxu0
      %v1363 = vadd.f32 0.0, %v1362
      %v1364 = vpop.f32.mrf.mxu0
      %1365 = vmatprep.mubr.bf16.mxu0 0
      %1366 = vmatmul.mubr.bf16.gmra.mxu0 %v823
      %v1367 = vpop.f32.mrf.mxu0
      %v1368 = vadd.f32 0.0, %v1367
      %v1369 = vpop.f32.mrf.mxu0
      %v1370 = vpop.f32.mrf.mxu0
      %v1371 = vadd.f32 0.0, %v1370
      %v1372 = vpop.f32.mrf.mxu0
      %1373 = vdwg.mxu0
      %v1374 = vtanh.pop %v864
      %v1375 = vtanh.pop %v867
      %v1376 = vtanh.pop %v872
      %v1377 = vtanh.pop %v875
      %v1378 = vtanh.pop %v880
      %v1379 = vtanh.pop %v883
      %v1380 = vtanh.pop %v888
      %v1381 = vtanh.pop %v891
      %v1382 = vtanh.pop %v896
      %v1383 = vtanh.pop %v899
      %v1384 = vtanh.pop %v904
      %v1385 = vtanh.pop %v907
      %v1386 = vtanh.pop %v912
      %v1387 = vtanh.pop %v915
      %v1388 = vtanh.pop %v920
      %v1389 = vtanh.pop %v923
      %v1390 = vtanh.pop %v928
      %v1391 = vtanh.pop %v931
      %v1392 = vtanh.pop %v936
      %v1393 = vtanh.pop %v939
      %v1394 = vtanh.pop %v944
      %v1395 = vtanh.pop %v947
      %v1396 = vtanh.pop %v952
      %v1397 = vtanh.pop %v955
      %v1398 = vtanh.pop %v960
      %v1399 = vtanh.pop %v963
      %v1400 = vtanh.pop %v968
      %v1401 = vtanh.pop %v971
      %v1402 = vtanh.pop %v976
      %v1403 = vtanh.pop %v979
      %v1404 = vtanh.pop %v984
      %v1405 = vtanh.pop %v987
      %v1406 = vtanh.pop %v992
      %v1407 = vtanh.pop %v995
      %v1408 = vtanh.pop %v1000
      %v1409 = vtanh.pop %v1003
      %v1410 = vtanh.pop %v1008
      %v1411 = vtanh.pop %v1011
      %v1412 = vtanh.pop %v1016
      %v1413 = vtanh.pop %v1019
      %v1414 = vtanh.pop %v1024
      %v1415 = vtanh.pop %v1027
      %v1416 = vtanh.pop %v1032
      %v1417 = vtanh.pop %v1035
      %v1418 = vtanh.pop %v1040
      %v1419 = vtanh.pop %v1043
      %v1420 = vtanh.pop %v1048
      %v1421 = vtanh.pop %v1051
      %v1422 = vtanh.pop %v1056
      %v1423 = vtanh.pop %v1059
      %v1424 = vtanh.pop %v1064
      %v1425 = vtanh.pop %v1067
      %v1426 = vtanh.pop %v1072
      %v1427 = vtanh.pop %v1075
      %v1428 = vtanh.pop %v1080
      %v1429 = vtanh.pop %v1083
      %v1430 = vtanh.pop %v1088
      %v1431 = vtanh.pop %v1091
      %v1432 = vtanh.pop %v1096
      %v1433 = vtanh.pop %v1099
      %v1434 = vtanh.pop %v1104
      %v1435 = vtanh.pop %v1107
      %v1436 = vtanh.pop %v1112
      %v1437 = vtanh.pop %v1115
      %v1438 = vtanh.pop %v1120
      %v1439 = vtanh.pop %v1123
      %v1440 = vtanh.pop %v1128
      %v1441 = vtanh.pop %v1131
      %v1442 = vtanh.pop %v1136
      %v1443 = vtanh.pop %v1139
      %v1444 = vtanh.pop %v1144
      %v1445 = vtanh.pop %v1147
      %v1446 = vtanh.pop %v1152
      %v1447 = vtanh.pop %v1155
      %v1448 = vtanh.pop %v1160
      %v1449 = vtanh.pop %v1163
      %v1450 = vtanh.pop %v1168
      %v1451 = vtanh.pop %v1171
      %v1452 = vtanh.pop %v1176
      %v1453 = vtanh.pop %v1179
      %v1454 = vtanh.pop %v1184
      %v1455 = vtanh.pop %v1187
      %v1456 = vtanh.pop %v1192
      %v1457 = vtanh.pop %v1195
      %v1458 = vtanh.pop %v1200
      %v1459 = vtanh.pop %v1203
      %v1460 = vtanh.pop %v1208
      %v1461 = vtanh.pop %v1211
      %v1462 = vtanh.pop %v1216
      %v1463 = vtanh.pop %v1219
      %v1464 = vtanh.pop %v1224
      %v1465 = vtanh.pop %v1227
      %v1466 = vtanh.pop %v1232
      %v1467 = vtanh.pop %v1235
      %v1468 = vtanh.pop %v1240
      %v1469 = vtanh.pop %v1243
      %v1470 = vtanh.pop %v1248
      %v1471 = vtanh.pop %v1251
      %v1472 = vtanh.pop %v1256
      %v1473 = vtanh.pop %v1259
      %v1474 = vtanh.pop %v1264
      %v1475 = vtanh.pop %v1267
      %v1476 = vtanh.pop %v1272
      %v1477 = vtanh.pop %v1275
      %v1478 = vtanh.pop %v1280
      %v1479 = vtanh.pop %v1283
      %v1480 = vtanh.pop %v1288
      %v1481 = vtanh.pop %v1291
      %v1482 = vtanh.pop %v1296
      %v1483 = vtanh.pop %v1299
      %v1484 = vtanh.pop %v1304
      %v1485 = vtanh.pop %v1307
      %v1486 = vtanh.pop %v1312
      %v1487 = vtanh.pop %v1315
      %v1488 = vtanh.pop %v1320
      %v1489 = vtanh.pop %v1323
      %v1490 = vtanh.pop %v1328
      %v1491 = vtanh.pop %v1331
      %v1492 = vtanh.pop %v1336
      %v1493 = vtanh.pop %v1339
      %v1494 = vtanh.pop %v1344
      %v1495 = vtanh.pop %v1347
      %v1496 = vtanh.pop %v1352
      %v1497 = vtanh.pop %v1355
      %v1498 = vtanh.pop %v1360
      %v1499 = vtanh.pop %v1363
      %v1500 = vtanh.pop %v1368
      %v1501 = vtanh.pop %v1371
      %vm1502 = vcmask 97280
      %1503 = vst.msk [vmem:[%s145] sm:$0xff] %vm1502, %v1374
      %1504 = vst.msk [vmem:[%s145 + $0x8] sm:$0xff] %vm1502, %v1375
      %1505 = vst.msk [vmem:[%s145 + $0x10] sm:$0xff] %vm1502, %v1376
      %1506 = vst.msk [vmem:[%s145 + $0x18] sm:$0xff] %vm1502, %v1377
      %1507 = vst.msk [vmem:[%s145 + $0x20] sm:$0xff] %vm1502, %v1378
      %1508 = vst.msk [vmem:[%s145 + $0x28] sm:$0xff] %vm1502, %v1379
      %1509 = vst.msk [vmem:[%s145 + $0x30] sm:$0xff] %vm1502, %v1380
      %1510 = vst.msk [vmem:[%s145 + $0x38] sm:$0xff] %vm1502, %v1381
      %1511 = vst.msk [vmem:[%s145 + $0x40] sm:$0xff] %vm1502, %v1382
      %1512 = vst.msk [vmem:[%s145 + $0x48] sm:$0xff] %vm1502, %v1383
      %1513 = vst.msk [vmem:[%s145 + $0x50] sm:$0xff] %vm1502, %v1384
      %1514 = vst.msk [vmem:[%s145 + $0x58] sm:$0xff] %vm1502, %v1385
      %1515 = vst.msk [vmem:[%s145 + $0x60] sm:$0xff] %vm1502, %v1386
      %1516 = vst.msk [vmem:[%s145 + $0x68] sm:$0xff] %vm1502, %v1387
      %1517 = vst.msk [vmem:[%s145 + $0x70] sm:$0xff] %vm1502, %v1388
      %1518 = vst.msk [vmem:[%s145 + $0x78] sm:$0xff] %vm1502, %v1389
      %1519 = vst.msk [vmem:[%s145 + $0x80] sm:$0xff] %vm1502, %v1390
      %1520 = vst.msk [vmem:[%s145 + $0x88] sm:$0xff] %vm1502, %v1391
      %1521 = vst.msk [vmem:[%s145 + $0x90] sm:$0xff] %vm1502, %v1392
      %1522 = vst.msk [vmem:[%s145 + $0x98] sm:$0xff] %vm1502, %v1393
      %1523 = vst.msk [vmem:[%s145 + $0xa0] sm:$0xff] %vm1502, %v1394
      %1524 = vst.msk [vmem:[%s145 + $0xa8] sm:$0xff] %vm1502, %v1395
      %1525 = vst.msk [vmem:[%s145 + $0xb0] sm:$0xff] %vm1502, %v1396
      %1526 = vst.msk [vmem:[%s145 + $0xb8] sm:$0xff] %vm1502, %v1397
      %1527 = vst.msk [vmem:[%s145 + $0xc0] sm:$0xff] %vm1502, %v1398
      %1528 = vst.msk [vmem:[%s145 + $0xc8] sm:$0xff] %vm1502, %v1399
      %1529 = vst.msk [vmem:[%s145 + $0xd0] sm:$0xff] %vm1502, %v1400
      %1530 = vst.msk [vmem:[%s145 + $0xd8] sm:$0xff] %vm1502, %v1401
      %1531 = vst.msk [vmem:[%s145 + $0xe0] sm:$0xff] %vm1502, %v1402
      %1532 = vst.msk [vmem:[%s145 + $0xe8] sm:$0xff] %vm1502, %v1403
      %1533 = vst.msk [vmem:[%s145 + $0xf0] sm:$0xff] %vm1502, %v1404
      %1534 = vst.msk [vmem:[%s145 + $0xf8] sm:$0xff] %vm1502, %v1405
      %1535 = vst.msk [vmem:[%s145 + $0x100] sm:$0xff] %vm1502, %v1406
      %1536 = vst.msk [vmem:[%s145 + $0x108] sm:$0xff] %vm1502, %v1407
      %1537 = vst.msk [vmem:[%s145 + $0x110] sm:$0xff] %vm1502, %v1408
      %1538 = vst.msk [vmem:[%s145 + $0x118] sm:$0xff] %vm1502, %v1409
      %1539 = vst.msk [vmem:[%s145 + $0x120] sm:$0xff] %vm1502, %v1410
      %1540 = vst.msk [vmem:[%s145 + $0x128] sm:$0xff] %vm1502, %v1411
      %1541 = vst.msk [vmem:[%s145 + $0x130] sm:$0xff] %vm1502, %v1412
      %1542 = vst.msk [vmem:[%s145 + $0x138] sm:$0xff] %vm1502, %v1413
      %1543 = vst.msk [vmem:[%s145 + $0x140] sm:$0xff] %vm1502, %v1414
      %1544 = vst.msk [vmem:[%s145 + $0x148] sm:$0xff] %vm1502, %v1415
      %1545 = vst.msk [vmem:[%s145 + $0x150] sm:$0xff] %vm1502, %v1416
      %1546 = vst.msk [vmem:[%s145 + $0x158] sm:$0xff] %vm1502, %v1417
      %1547 = vst.msk [vmem:[%s145 + $0x160] sm:$0xff] %vm1502, %v1418
      %1548 = vst.msk [vmem:[%s145 + $0x168] sm:$0xff] %vm1502, %v1419
      %1549 = vst.msk [vmem:[%s145 + $0x170] sm:$0xff] %vm1502, %v1420
      %1550 = vst.msk [vmem:[%s145 + $0x178] sm:$0xff] %vm1502, %v1421
      %1551 = vst.msk [vmem:[%s145 + $0x180] sm:$0xff] %vm1502, %v1422
      %1552 = vst.msk [vmem:[%s145 + $0x188] sm:$0xff] %vm1502, %v1423
      %1553 = vst.msk [vmem:[%s145 + $0x190] sm:$0xff] %vm1502, %v1424
      %1554 = vst.msk [vmem:[%s145 + $0x198] sm:$0xff] %vm1502, %v1425
      %1555 = vst.msk [vmem:[%s145 + $0x1a0] sm:$0xff] %vm1502, %v1426
      %1556 = vst.msk [vmem:[%s145 + $0x1a8] sm:$0xff] %vm1502, %v1427
      %1557 = vst.msk [vmem:[%s145 + $0x1b0] sm:$0xff] %vm1502, %v1428
      %1558 = vst.msk [vmem:[%s145 + $0x1b8] sm:$0xff] %vm1502, %v1429
      %1559 = vst.msk [vmem:[%s145 + $0x1c0] sm:$0xff] %vm1502, %v1430
      %1560 = vst.msk [vmem:[%s145 + $0x1c8] sm:$0xff] %vm1502, %v1431
      %1561 = vst.msk [vmem:[%s145 + $0x1d0] sm:$0xff] %vm1502, %v1432
      %1562 = vst.msk [vmem:[%s145 + $0x1d8] sm:$0xff] %vm1502, %v1433
      %1563 = vst.msk [vmem:[%s145 + $0x1e0] sm:$0xff] %vm1502, %v1434
      %1564 = vst.msk [vmem:[%s145 + $0x1e8] sm:$0xff] %vm1502, %v1435
      %1565 = vst.msk [vmem:[%s145 + $0x1f0] sm:$0xff] %vm1502, %v1436
      %1566 = vst.msk [vmem:[%s145 + $0x1f8] sm:$0xff] %vm1502, %v1437
      %1567 = vst.msk [vmem:[%s145 + $0x200] sm:$0xff] %vm1502, %v1438
      %1568 = vst.msk [vmem:[%s145 + $0x208] sm:$0xff] %vm1502, %v1439
      %1569 = vst.msk [vmem:[%s145 + $0x210] sm:$0xff] %vm1502, %v1440
      %1570 = vst.msk [vmem:[%s145 + $0x218] sm:$0xff] %vm1502, %v1441
      %1571 = vst.msk [vmem:[%s145 + $0x220] sm:$0xff] %vm1502, %v1442
      %1572 = vst.msk [vmem:[%s145 + $0x228] sm:$0xff] %vm1502, %v1443
      %1573 = vst.msk [vmem:[%s145 + $0x230] sm:$0xff] %vm1502, %v1444
      %1574 = vst.msk [vmem:[%s145 + $0x238] sm:$0xff] %vm1502, %v1445
      %1575 = vst.msk [vmem:[%s145 + $0x240] sm:$0xff] %vm1502, %v1446
      %1576 = vst.msk [vmem:[%s145 + $0x248] sm:$0xff] %vm1502, %v1447
      %1577 = vst.msk [vmem:[%s145 + $0x250] sm:$0xff] %vm1502, %v1448
      %1578 = vst.msk [vmem:[%s145 + $0x258] sm:$0xff] %vm1502, %v1449
      %1579 = vst.msk [vmem:[%s145 + $0x260] sm:$0xff] %vm1502, %v1450
      %1580 = vst.msk [vmem:[%s145 + $0x268] sm:$0xff] %vm1502, %v1451
      %1581 = vst.msk [vmem:[%s145 + $0x270] sm:$0xff] %vm1502, %v1452
      %1582 = vst.msk [vmem:[%s145 + $0x278] sm:$0xff] %vm1502, %v1453
      %1583 = vst.msk [vmem:[%s145 + $0x280] sm:$0xff] %vm1502, %v1454
      %1584 = vst.msk [vmem:[%s145 + $0x288] sm:$0xff] %vm1502, %v1455
      %1585 = vst.msk [vmem:[%s145 + $0x290] sm:$0xff] %vm1502, %v1456
      %1586 = vst.msk [vmem:[%s145 + $0x298] sm:$0xff] %vm1502, %v1457
      %1587 = vst.msk [vmem:[%s145 + $0x2a0] sm:$0xff] %vm1502, %v1458
      %1588 = vst.msk [vmem:[%s145 + $0x2a8] sm:$0xff] %vm1502, %v1459
      %1589 = vst.msk [vmem:[%s145 + $0x2b0] sm:$0xff] %vm1502, %v1460
      %1590 = vst.msk [vmem:[%s145 + $0x2b8] sm:$0xff] %vm1502, %v1461
      %1591 = vst.msk [vmem:[%s145 + $0x2c0] sm:$0xff] %vm1502, %v1462
      %1592 = vst.msk [vmem:[%s145 + $0x2c8] sm:$0xff] %vm1502, %v1463
      %1593 = vst.msk [vmem:[%s145 + $0x2d0] sm:$0xff] %vm1502, %v1464
      %1594 = vst.msk [vmem:[%s145 + $0x2d8] sm:$0xff] %vm1502, %v1465
      %1595 = vst.msk [vmem:[%s145 + $0x2e0] sm:$0xff] %vm1502, %v1466
      %1596 = vst.msk [vmem:[%s145 + $0x2e8] sm:$0xff] %vm1502, %v1467
      %1597 = vst.msk [vmem:[%s145 + $0x2f0] sm:$0xff] %vm1502, %v1468
      %1598 = vst.msk [vmem:[%s145 + $0x2f8] sm:$0xff] %vm1502, %v1469
      %1599 = vst.msk [vmem:[%s145 + $0x300] sm:$0xff] %vm1502, %v1470
      %1600 = vst.msk [vmem:[%s145 + $0x308] sm:$0xff] %vm1502, %v1471
      %1601 = vst.msk [vmem:[%s145 + $0x310] sm:$0xff] %vm1502, %v1472
      %1602 = vst.msk [vmem:[%s145 + $0x318] sm:$0xff] %vm1502, %v1473
      %1603 = vst.msk [vmem:[%s145 + $0x320] sm:$0xff] %vm1502, %v1474
      %1604 = vst.msk [vmem:[%s145 + $0x328] sm:$0xff] %vm1502, %v1475
      %1605 = vst.msk [vmem:[%s145 + $0x330] sm:$0xff] %vm1502, %v1476
      %1606 = vst.msk [vmem:[%s145 + $0x338] sm:$0xff] %vm1502, %v1477
      %1607 = vst.msk [vmem:[%s145 + $0x340] sm:$0xff] %vm1502, %v1478
      %1608 = vst.msk [vmem:[%s145 + $0x348] sm:$0xff] %vm1502, %v1479
      %1609 = vst.msk [vmem:[%s145 + $0x350] sm:$0xff] %vm1502, %v1480
      %1610 = vst.msk [vmem:[%s145 + $0x358] sm:$0xff] %vm1502, %v1481
      %1611 = vst.msk [vmem:[%s145 + $0x360] sm:$0xff] %vm1502, %v1482
      %1612 = vst.msk [vmem:[%s145 + $0x368] sm:$0xff] %vm1502, %v1483
      %1613 = vst.msk [vmem:[%s145 + $0x370] sm:$0xff] %vm1502, %v1484
      %1614 = vst.msk [vmem:[%s145 + $0x378] sm:$0xff] %vm1502, %v1485
      %1615 = vst.msk [vmem:[%s145 + $0x380] sm:$0xff] %vm1502, %v1486
      %1616 = vst.msk [vmem:[%s145 + $0x388] sm:$0xff] %vm1502, %v1487
      %1617 = vst.msk [vmem:[%s145 + $0x390] sm:$0xff] %vm1502, %v1488
      %1618 = vst.msk [vmem:[%s145 + $0x398] sm:$0xff] %vm1502, %v1489
      %1619 = vst.msk [vmem:[%s145 + $0x3a0] sm:$0xff] %vm1502, %v1490
      %1620 = vst.msk [vmem:[%s145 + $0x3a8] sm:$0xff] %vm1502, %v1491
      %1621 = vst.msk [vmem:[%s145 + $0x3b0] sm:$0xff] %vm1502, %v1492
      %1622 = vst.msk [vmem:[%s145 + $0x3b8] sm:$0xff] %vm1502, %v1493
      %1623 = vst.msk [vmem:[%s145 + $0x3c0] sm:$0xff] %vm1502, %v1494
      %1624 = vst.msk [vmem:[%s145 + $0x3c8] sm:$0xff] %vm1502, %v1495
      %1625 = vst.msk [vmem:[%s145 + $0x3d0] sm:$0xff] %vm1502, %v1496
      %1626 = vst.msk [vmem:[%s145 + $0x3d8] sm:$0xff] %vm1502, %v1497
      %1627 = vst.msk [vmem:[%s145 + $0x3e0] sm:$0xff] %vm1502, %v1498
      %1628 = vst.msk [vmem:[%s145 + $0x3e8] sm:$0xff] %vm1502, %v1499
      %1629 = vst.msk [vmem:[%s145 + $0x3f0] sm:$0xff] %vm1502, %v1500
      %1630 = vst.msk [vmem:[%s145 + $0x3f8] sm:$0xff] %vm1502, %v1501
      %s1631 = smul.u32 128, %s13
      %p1632 = scmp.lt.s32.totalorder %s1631, 255
      %s1633 = scalar_select %p1632, %s1631, 255
      %s1634 = smul.addr %s1633, 8
      %s1635 = scalar_lea.vmem %s2, %s1634
      // Predicated region
      $region29: #{generator_forward.17} parent=27 // pred_check
        %p1636 = pneg %p78
      $region30: #{generator_forward.17} parent=27 // pred_check_branch
        %1638 = sbr.rel (%p1636) target = $region32
      $region31: #{generator_forward.17} parent=27 // pred_region
        %s1639 = smul.u32 128, %s13
      $region32: #{generator_forward.17} parent=27 // pred_fallthru
        _
    $region28: #{generator_forward.17} parent=5 // pred_fallthru
      _
    %p1640 = scmp.le.s32.totalorder 2, %s8
    // Predicated region
    $region33: #{generator_forward.17} parent=5 // pred_check
      %p1641 = pneg %p1640
    $region34: #{generator_forward.17} parent=5 // pred_check_branch
      %1643 = sbr.rel (%p1641) target = $region36
    $region35: #{generator_forward.17} parent=5 // pred_region
      %s1644 = ssub.s32 %s8, 2
      // Predicated region
      $region37: #{generator_forward.17} parent=35 // pred_check
        %p1645 = pneg %p84
      $region38: #{generator_forward.17} parent=35 // pred_check_branch
        %1647 = sbr.rel (%p1645) target = $region40
      $region39: #{generator_forward.17} parent=35 // pred_region
        %s1648 = smul.u32 128, %s14
        %p1649 = scmp.lt.s32.totalorder %s1648, 255
        %s1650 = scalar_select %p1649, %s1648, 255
        %s1651 = smul.addr %s1650, 8
        %s1652 = scalar_lea.vmem %s2, %s1651
      $region40: #{generator_forward.17} parent=35 // pred_fallthru
        _
    $region36: #{generator_forward.17} parent=5 // pred_fallthru
      _
  $region6: #{generator_forward.17} parent=0 // loop_footer
    %s12 = sadd.s32 1, %s8
  $region7: #{generator_forward.17} parent=0 // loop_footer_branch
    %7 = sbr.rel target = $region3
  $region8: #{generator_forward.17} parent=0 // loop_exit
    _

</llo_original>
